<compile_context>
chip_gen: v7x
topology: tpu7x:2x2x1
jax: 0.10.0
libtpu: 0.0.40
codegen_flags: <defaults>
</compile_context>

<pallas_src>
import jax
import jax.numpy as jnp
from jax.experimental import pallas as pl
from jax.experimental.pallas import tpu as pltpu

LANE = 128   # lane width: all feature dims padded to a multiple of this
TB = 256     # batch tile (MXU M dimension)


def _round_up(x, m):
    return ((x + m - 1) // m) * m


def softhebb_fwd_kernel(x_ref, w1_ref, w2_ref, w3_ref, w4_ref, o_ref):
    """Fused 4-layer MLP: three tanh(linear) layers + final linear (logits).

    Operands are bf16; every dot accumulates in f32 on the MXU and tanh is
    evaluated in f32 before casting back to bf16 for the next matmul.
    """
    h = x_ref[...]                                              # bf16 (TB, Din)
    h = jnp.tanh(jnp.dot(h, w1_ref[...],
                         preferred_element_type=jnp.float32)).astype(jnp.bfloat16)
    h = jnp.tanh(jnp.dot(h, w2_ref[...],
                         preferred_element_type=jnp.float32)).astype(jnp.bfloat16)
    h = jnp.tanh(jnp.dot(h, w3_ref[...],
                         preferred_element_type=jnp.float32)).astype(jnp.bfloat16)
    o_ref[...] = jnp.dot(h, w4_ref[...],
                         preferred_element_type=jnp.float32).astype(o_ref.dtype)


def linear_softhebb_forward(x_nchw, w1t, w2t, w3t, w4t, *, tb=TB):
    """x_nchw: (B, C, H, W).  wKt: (in_features, out_features), float."""
    B = x_nchw.shape[0]
    x = x_nchw.reshape(B, -1)                      # out.view(B, -1)
    Din, H1 = w1t.shape
    H2, H3, Cout = w2t.shape[1], w3t.shape[1], w4t.shape[1]

    # Lane-dense padded sizes (multiples of 128); batch padded to the tile.
    Dp, H1p, H2p, H3p, Cp = (_round_up(d, LANE) for d in (Din, H1, H2, H3, Cout))
    Bp = _round_up(B, tb)

    def pad2(a, rows, cols):
        a = a.astype(jnp.bfloat16)
        return jnp.pad(a, ((0, rows - a.shape[0]), (0, cols - a.shape[1])))

    xb = pad2(x, Bp, Dp)
    w1 = pad2(w1t, Dp, H1p)
    w2 = pad2(w2t, H1p, H2p)
    w3 = pad2(w3t, H2p, H3p)
    w4 = pad2(w4t, H3p, Cp)

    # VMEM budget: resident bf16 weights (x2 in case single-buffering is
    # unavailable) + double-buffered activation tiles + f32 intermediates.
    weight_bytes = 2 * (Dp * H1p + H1p * H2p + H2p * H3p + H3p * Cp)
    act_bytes = 2 * tb * (2 * Dp + 4 * Cp) + 4 * tb * (H1p + H2p + H3p)
    vmem_limit = int(max(32 << 20,
                         min(2 * weight_bytes + act_bytes + (8 << 20), 100 << 20)))

    wshapes = [(Dp, H1p), (H1p, H2p), (H2p, H3p), (H3p, Cp)]

    def build(single_buffer_weights):
        if single_buffer_weights:
            # Weight blocks never change across the grid -> one buffer suffices
            # (halves resident-weight VMEM; matters at hidden ~ 2000 on v7x).
            wspecs = [pl.BlockSpec(s, lambda i: (0, 0),
                                   pipeline_mode=pl.Buffered(1))
                      for s in wshapes]
        else:
            wspecs = [pl.BlockSpec(s, lambda i: (0, 0)) for s in wshapes]
        return pl.pallas_call(
            softhebb_fwd_kernel,
            out_shape=jax.ShapeDtypeStruct((Bp, Cp), jnp.float32),
            grid_spec=pltpu.PrefetchScalarGridSpec(
                num_scalar_prefetch=0,
                grid=(Bp // tb,),
                in_specs=[pl.BlockSpec((tb, Dp), lambda i: (i, 0))] + wspecs,
                out_specs=pl.BlockSpec((tb, Cp), lambda i: (i, 0)),
            ),
            compiler_params=pltpu.CompilerParams(
                dimension_semantics=("parallel",),
                vmem_limit_bytes=vmem_limit),
        )

    try:
        out = build(True)(xb, w1, w2, w3, w4)
    except Exception:
        # Fallback for Pallas builds without BlockSpec.pipeline_mode support:
        # default double-buffered resident weights (still correct).
        out = build(False)(xb, w1, w2, w3, w4)

    return out[:B, :Cout]


def init_params(key, in_features, hidden, num_classes):
    """Deterministic init: N(0, 1/sqrt(fan_in)); stored as (in, out) == W.T."""
    k1, k2, k3, k4 = jax.random.split(key, 4)

    def w(k, fin, fout):
        return (jax.random.normal(k, (fin, fout), jnp.float32)
                * (1.0 / jnp.sqrt(jnp.float32(fin))))

    return (w(k1, in_features, hidden),
            w(k2, hidden, hidden),
            w(k3, hidden, hidden),
            w(k4, hidden, num_classes))


def reference_forward(x_nchw, w1t, w2t, w3t, w4t):
    x = x_nchw.reshape(x_nchw.shape[0], -1).astype(jnp.float32)
    h = jnp.tanh(x @ w1t)
    h = jnp.tanh(h @ w2t)
    h = jnp.tanh(h @ w3t)
    return h @ w4t


if __name__ == "__main__":
    # Small shapes consistent with the module:
    #   in_channels=1, input_size=16 -> in_features = 1*16*16 = 256
    #   hidden = 256 (scaled-down stand-in for 2000), num_classes = 10
    B, C, S = 2, 1, 16
    in_features = C * S * S
    hidden = 256
    num_classes = 10

    key = jax.random.PRNGKey(0)
    kx, kp = jax.random.split(key)
    x = jax.random.normal(kx, (B, C, S, S), jnp.float32)
    w1t, w2t, w3t, w4t = init_params(kp, in_features, hidden, num_classes)

    out = linear_softhebb_forward(x, w1t, w2t, w3t, w4t)
    out = jax.block_until_ready(out)

    ref = reference_forward(x, w1t, w2t, w3t, w4t)
    assert out.shape == (B, num_classes)
    # bf16 matmul operands with f32 accumulation: allow ~1e-2 level deviation.
    err = float(jnp.max(jnp.abs(out - ref)))
    assert jnp.allclose(out, ref, atol=7.5e-2, rtol=7.5e-2), err

    print("KERNEL_OK")
</pallas_src>

<mosaic_0001>
module attributes {stable_mosaic.version = 11 : i64} {
  func.func @softhebb_fwd_kernel(%arg0: i32, %arg1: memref<256x256xbf16, #tpu.memory_space<vmem>>, %arg2: memref<256x256xbf16, #tpu.memory_space<vmem>>, %arg3: memref<256x256xbf16, #tpu.memory_space<vmem>>, %arg4: memref<256x256xbf16, #tpu.memory_space<vmem>>, %arg5: memref<256x128xbf16, #tpu.memory_space<vmem>>, %arg6: memref<256x128xf32, #tpu.memory_space<vmem>>) attributes {dimension_semantics = [#tpu.dimension_semantics<parallel>], iteration_bounds = array<i64: 1>, scalar_prefetch = 0 : i64, scratch_operands = 0 : i64, tpu.core_type = #tpu.core_type<tc>, window_params = [{transform_indices = @transform_0, window_bounds = array<i64: 256, 256>}, {pipeline_mode = #tpu.pipeline_mode<synchronous>, transform_indices = @transform_1, window_bounds = array<i64: 256, 256>}, {pipeline_mode = #tpu.pipeline_mode<synchronous>, transform_indices = @transform_2, window_bounds = array<i64: 256, 256>}, {pipeline_mode = #tpu.pipeline_mode<synchronous>, transform_indices = @transform_3, window_bounds = array<i64: 256, 256>}, {pipeline_mode = #tpu.pipeline_mode<synchronous>, transform_indices = @transform_4, window_bounds = array<i64: 256, 128>}, {transform_indices = @transform_5, window_bounds = array<i64: 256, 128>}]} {
    %c0 = arith.constant 0 : index
    %c0_0 = arith.constant 0 : index
    %0 = vector.load %arg1[%c0, %c0_0] : memref<256x256xbf16, #tpu.memory_space<vmem>>, vector<256x256xbf16>
    %c0_1 = arith.constant 0 : index
    %c0_2 = arith.constant 0 : index
    %1 = vector.load %arg2[%c0_1, %c0_2] : memref<256x256xbf16, #tpu.memory_space<vmem>>, vector<256x256xbf16>
    %cst = arith.constant dense<0.000000e+00> : vector<256x256xf32>
    %2 = tpu.matmul %0, %1, %cst {dimension_numbers = #tpu.dot_dimension_numbers<[1], [0], [0], [1], [0, 0, 1, 1], [], []>} : vector<256x256xbf16>, vector<256x256xbf16>, vector<256x256xf32> -> vector<256x256xf32>
    %3 = math.tanh %2 : vector<256x256xf32>
    %4 = arith.truncf %3 : vector<256x256xf32> to vector<256x256xbf16>
    %c0_3 = arith.constant 0 : index
    %c0_4 = arith.constant 0 : index
    %5 = vector.load %arg3[%c0_3, %c0_4] : memref<256x256xbf16, #tpu.memory_space<vmem>>, vector<256x256xbf16>
    %cst_5 = arith.constant dense<0.000000e+00> : vector<256x256xf32>
    %6 = tpu.matmul %4, %5, %cst_5 {dimension_numbers = #tpu.dot_dimension_numbers<[1], [0], [0], [1], [0, 0, 1, 1], [], []>} : vector<256x256xbf16>, vector<256x256xbf16>, vector<256x256xf32> -> vector<256x256xf32>
    %7 = math.tanh %6 : vector<256x256xf32>
    %8 = arith.truncf %7 : vector<256x256xf32> to vector<256x256xbf16>
    %c0_6 = arith.constant 0 : index
    %c0_7 = arith.constant 0 : index
    %9 = vector.load %arg4[%c0_6, %c0_7] : memref<256x256xbf16, #tpu.memory_space<vmem>>, vector<256x256xbf16>
    %cst_8 = arith.constant dense<0.000000e+00> : vector<256x256xf32>
    %10 = tpu.matmul %8, %9, %cst_8 {dimension_numbers = #tpu.dot_dimension_numbers<[1], [0], [0], [1], [0, 0, 1, 1], [], []>} : vector<256x256xbf16>, vector<256x256xbf16>, vector<256x256xf32> -> vector<256x256xf32>
    %11 = math.tanh %10 : vector<256x256xf32>
    %12 = arith.truncf %11 : vector<256x256xf32> to vector<256x256xbf16>
    %c0_9 = arith.constant 0 : index
    %c0_10 = arith.constant 0 : index
    %13 = vector.load %arg5[%c0_9, %c0_10] : memref<256x128xbf16, #tpu.memory_space<vmem>>, vector<256x128xbf16>
    %cst_11 = arith.constant dense<0.000000e+00> : vector<256x128xf32>
    %14 = tpu.matmul %12, %13, %cst_11 {dimension_numbers = #tpu.dot_dimension_numbers<[1], [0], [0], [1], [0, 0, 1, 1], [], []>} : vector<256x256xbf16>, vector<256x128xbf16>, vector<256x128xf32> -> vector<256x128xf32>
    %c0_12 = arith.constant 0 : index
    %c0_13 = arith.constant 0 : index
    %15 = vector.load %arg6[%c0_12, %c0_13] : memref<256x128xf32, #tpu.memory_space<vmem>>, vector<256x128xf32>
    tpu.vector_store %arg6[%c0_12, %c0_13], %14 {strides = array<i32>} : memref<256x128xf32, #tpu.memory_space<vmem>>, vector<256x128xf32>,
    return
  }
  func.func @transform_0(%arg0: i32) -> (i32, i32) {
    %c0_i32 = arith.constant 0 : i32
    %c0_i32_0 = arith.constant 0 : i32
    return %arg0, %c0_i32 : i32, i32
  }
  func.func @transform_1(%arg0: i32) -> (i32, i32) {
    %c0_i32 = arith.constant 0 : i32
    %c0_i32_0 = arith.constant 0 : i32
    %c0_i32_1 = arith.constant 0 : i32
    return %c0_i32, %c0_i32_0 : i32, i32
  }
  func.func @transform_2(%arg0: i32) -> (i32, i32) {
    %c0_i32 = arith.constant 0 : i32
    %c0_i32_0 = arith.constant 0 : i32
    %c0_i32_1 = arith.constant 0 : i32
    return %c0_i32, %c0_i32_0 : i32, i32
  }
  func.func @transform_3(%arg0: i32) -> (i32, i32) {
    %c0_i32 = arith.constant 0 : i32
    %c0_i32_0 = arith.constant 0 : i32
    %c0_i32_1 = arith.constant 0 : i32
    return %c0_i32, %c0_i32_0 : i32, i32
  }
  func.func @transform_4(%arg0: i32) -> (i32, i32) {
    %c0_i32 = arith.constant 0 : i32
    %c0_i32_0 = arith.constant 0 : i32
    %c0_i32_1 = arith.constant 0 : i32
    return %c0_i32, %c0_i32_0 : i32, i32
  }
  func.func @transform_5(%arg0: i32) -> (i32, i32) {
    %c0_i32 = arith.constant 0 : i32
    %c0_i32_0 = arith.constant 0 : i32
    return %arg0, %c0_i32 : i32, i32
  }
}

module attributes {stable_mosaic.version = 11 : i64} {
  func.func @softhebb_fwd_kernel(%arg0: i32, %arg1: memref<256x256xbf16, #tpu.memory_space<vmem>>, %arg2: memref<256x256xbf16, #tpu.memory_space<vmem>>, %arg3: memref<256x256xbf16, #tpu.memory_space<vmem>>, %arg4: memref<256x256xbf16, #tpu.memory_space<vmem>>, %arg5: memref<256x128xbf16, #tpu.memory_space<vmem>>, %arg6: memref<256x128xf32, #tpu.memory_space<vmem>>) attributes {dimension_semantics = [#tpu.dimension_semantics<parallel>], iteration_bounds = array<i64: 1>, scalar_prefetch = 0 : i64, scratch_operands = 0 : i64, tpu.core_type = #tpu.core_type<tc>, window_params = [{transform_indices = @transform_0, window_bounds = array<i64: 256, 256>}, {pipeline_mode = #tpu.pipeline_mode<synchronous>, transform_indices = @transform_1, window_bounds = array<i64: 256, 256>}, {pipeline_mode = #tpu.pipeline_mode<synchronous>, transform_indices = @transform_2, window_bounds = array<i64: 256, 256>}, {pipeline_mode = #tpu.pipeline_mode<synchronous>, transform_indices = @transform_3, window_bounds = array<i64: 256, 256>}, {pipeline_mode = #tpu.pipeline_mode<synchronous>, transform_indices = @transform_4, window_bounds = array<i64: 256, 128>}, {transform_indices = @transform_5, window_bounds = array<i64: 256, 128>}]} {
    %c0 = arith.constant 0 : index
    %c0_0 = arith.constant 0 : index
    %0 = vector.load %arg1[%c0, %c0_0] : memref<256x256xbf16, #tpu.memory_space<vmem>>, vector<256x256xbf16>
    %c0_1 = arith.constant 0 : index
    %c0_2 = arith.constant 0 : index
    %1 = vector.load %arg2[%c0_1, %c0_2] : memref<256x256xbf16, #tpu.memory_space<vmem>>, vector<256x256xbf16>
    %cst = arith.constant dense<0.000000e+00> : vector<256x256xf32>
    %2 = tpu.matmul %0, %1, %cst {dimension_numbers = #tpu.dot_dimension_numbers<[1], [0], [0], [1], [0, 0, 1, 1], [], []>} : vector<256x256xbf16>, vector<256x256xbf16>, vector<256x256xf32> -> vector<256x256xf32>
    %3 = math.tanh %2 : vector<256x256xf32>
    %4 = arith.truncf %3 : vector<256x256xf32> to vector<256x256xbf16>
    %c0_3 = arith.constant 0 : index
    %c0_4 = arith.constant 0 : index
    %5 = vector.load %arg3[%c0_3, %c0_4] : memref<256x256xbf16, #tpu.memory_space<vmem>>, vector<256x256xbf16>
    %cst_5 = arith.constant dense<0.000000e+00> : vector<256x256xf32>
    %6 = tpu.matmul %4, %5, %cst_5 {dimension_numbers = #tpu.dot_dimension_numbers<[1], [0], [0], [1], [0, 0, 1, 1], [], []>} : vector<256x256xbf16>, vector<256x256xbf16>, vector<256x256xf32> -> vector<256x256xf32>
    %7 = math.tanh %6 : vector<256x256xf32>
    %8 = arith.truncf %7 : vector<256x256xf32> to vector<256x256xbf16>
    %c0_6 = arith.constant 0 : index
    %c0_7 = arith.constant 0 : index
    %9 = vector.load %arg4[%c0_6, %c0_7] : memref<256x256xbf16, #tpu.memory_space<vmem>>, vector<256x256xbf16>
    %cst_8 = arith.constant dense<0.000000e+00> : vector<256x256xf32>
    %10 = tpu.matmul %8, %9, %cst_8 {dimension_numbers = #tpu.dot_dimension_numbers<[1], [0], [0], [1], [0, 0, 1, 1], [], []>} : vector<256x256xbf16>, vector<256x256xbf16>, vector<256x256xf32> -> vector<256x256xf32>
    %11 = math.tanh %10 : vector<256x256xf32>
    %12 = arith.truncf %11 : vector<256x256xf32> to vector<256x256xbf16>
    %c0_9 = arith.constant 0 : index
    %c0_10 = arith.constant 0 : index
    %13 = vector.load %arg5[%c0_9, %c0_10] : memref<256x128xbf16, #tpu.memory_space<vmem>>, vector<256x128xbf16>
    %cst_11 = arith.constant dense<0.000000e+00> : vector<256x128xf32>
    %14 = tpu.matmul %12, %13, %cst_11 {dimension_numbers = #tpu.dot_dimension_numbers<[1], [0], [0], [1], [0, 0, 1, 1], [], []>} : vector<256x256xbf16>, vector<256x128xbf16>, vector<256x128xf32> -> vector<256x128xf32>
    %c0_12 = arith.constant 0 : index
    %c0_13 = arith.constant 0 : index
    %15 = vector.load %arg6[%c0_12, %c0_13] : memref<256x128xf32, #tpu.memory_space<vmem>>, vector<256x128xf32>
    tpu.vector_store %arg6[%c0_12, %c0_13], %14 {strides = array<i32>} : memref<256x128xf32, #tpu.memory_space<vmem>>, vector<256x128xf32>,
    return
  }
  func.func @transform_0(%arg0: i32) -> (i32, i32) {
    %c0_i32 = arith.constant 0 : i32
    %c0_i32_0 = arith.constant 0 : i32
    return %arg0, %c0_i32 : i32, i32
  }
  func.func @transform_1(%arg0: i32) -> (i32, i32) {
    %c0_i32 = arith.constant 0 : i32
    %c0_i32_0 = arith.constant 0 : i32
    %c0_i32_1 = arith.constant 0 : i32
    return %c0_i32, %c0_i32_0 : i32, i32
  }
  func.func @transform_2(%arg0: i32) -> (i32, i32) {
    %c0_i32 = arith.constant 0 : i32
    %c0_i32_0 = arith.constant 0 : i32
    %c0_i32_1 = arith.constant 0 : i32
    return %c0_i32, %c0_i32_0 : i32, i32
  }
  func.func @transform_3(%arg0: i32) -> (i32, i32) {
    %c0_i32 = arith.constant 0 : i32
    %c0_i32_0 = arith.constant 0 : i32
    %c0_i32_1 = arith.constant 0 : i32
    return %c0_i32, %c0_i32_0 : i32, i32
  }
  func.func @transform_4(%arg0: i32) -> (i32, i32) {
    %c0_i32 = arith.constant 0 : i32
    %c0_i32_0 = arith.constant 0 : i32
    %c0_i32_1 = arith.constant 0 : i32
    return %c0_i32, %c0_i32_0 : i32, i32
  }
  func.func @transform_5(%arg0: i32) -> (i32, i32) {
    %c0_i32 = arith.constant 0 : i32
    %c0_i32_0 = arith.constant 0 : i32
    return %arg0, %c0_i32 : i32, i32
  }
}

</mosaic_0001>

<llo_original>
// kernel: tpu_custom_call.1
$region0: #{tpu_custom_call.1}
  #allocation0 [shape = 'u32[]', space=smem, size = 0x4, offset = 0x4, fixed_abs, tag = 'smem constant byte address 0x4 - core index']
  #allocation1 [shape = 'u32[144,128]{1,0:T(1,128)}', space=vmem, size = 0x12000, scoped, tag = 'internal scratch']
  %s0 = inlined_call_operand.hbm [shape: bf16[256,256], index: 0, kind: input, shape index: {}]
  %s1 = inlined_call_operand.hbm [shape: bf16[256,256], index: 1, kind: input, shape index: {}]
  %s2 = inlined_call_operand.hbm [shape: bf16[256,256], index: 2, kind: input, shape index: {}]
  %s3 = inlined_call_operand.hbm [shape: bf16[256,256], index: 3, kind: input, shape index: {}]
  %s4 = inlined_call_operand.hbm [shape: bf16[256,128], index: 4, kind: input, shape index: {}]
  %s5 = inlined_call_operand.hbm [shape: f32[256,128], index: 5, kind: output, shape index: {}]
  %s6 = sld [smem:[#allocation0]]
  $region50: #{tpu_custom_call.1} parent=0
    _
  %s8 = ssub.s32 1, %s6
  %s9 = scalar_select 0, %s8, %s6
  $region1: #{tpu_custom_call.1} parent=0
    #allocation2 [shape = 'u8[131072]{0}', space=vmem, size = 0x20000, scoped, tag = 'input window, operand 0, single buffered']
    #allocation3 [shape = 's32[1]{0}', space=sflag, size = 0x4, scoped, tag = 'scoped memory for tpu_custom_call.1']
    #allocation4 [shape = 's32[1]{0}', space=sflag, size = 0x4, scoped, tag = 'scoped memory for tpu_custom_call.1']
    #allocation5 [shape = 'u8[131072]{0}', space=vmem, size = 0x20000, scoped, tag = 'input window, operand 1, single buffered']
    #allocation6 [shape = 's32[1]{0}', space=sflag, size = 0x4, scoped, tag = 'scoped memory for tpu_custom_call.1']
    #allocation7 [shape = 'u8[131072]{0}', space=vmem, size = 0x20000, scoped, tag = 'input window, operand 2, single buffered']
    #allocation8 [shape = 'u8[131072]{0}', space=vmem, size = 0x20000, scoped, tag = 'input window, operand 3, single buffered']
    #allocation9 [shape = 's32[1]{0}', space=sflag, size = 0x4, scoped, tag = 'scoped memory for tpu_custom_call.1']
    #allocation10 [shape = 'u8[65536]{0}', space=vmem, size = 0x10000, scoped, tag = 'input window, operand 4, single buffered']
    #allocation11 [shape = 'u8[131072]{0}', space=vmem, size = 0x20000, scoped, tag = 'output window, operand 0, single buffered']
    %10 = vsyncpa [#allocation3], 0
    %11 = vsyncpa [#allocation6], 0
    %12 = vsyncpa [#allocation9], 0
    %13 = vsyncpa [#allocation4], 0
    // Predicated region
    $region2: #{tpu_custom_call.1} parent=1 // pred_check
      _
    $region3: #{tpu_custom_call.1} parent=1 // pred_check_branch
      %15 = sbr.rel (0) target = $region5
    $region4: #{tpu_custom_call.1} parent=1 // pred_region
      %s17 = ssub.s32 4096, 4096
      %18 = vsyncadd [#allocation3], %s17
      %s19 = sshll.u32 [#allocation2], 4
      %s20 = int_to_ptr.vmem [resolvable:$true] %s19
      %25 = dma.hbm_to_vmem [thread:$0]  %s0, 4096, %s20, [#allocation3], 128, 128, 8
    $region5: #{tpu_custom_call.1} parent=1 // pred_fallthru
      _
    // Predicated region
    $region6: #{tpu_custom_call.1} parent=1 // pred_check
      _
    $region7: #{tpu_custom_call.1} parent=1 // pred_check_branch
      %27 = sbr.rel (0) target = $region9
    $region8: #{tpu_custom_call.1} parent=1 // pred_region
      %s29 = ssub.s32 4096, 4096
      %30 = vsyncadd [#allocation6], %s29
      %s31 = sshll.u32 [#allocation5], 4
      %s32 = int_to_ptr.vmem [resolvable:$true] %s31
      %37 = dma.hbm_to_vmem [thread:$0]  %s1, 4096, %s32, [#allocation6], 128, 128, 8
    $region9: #{tpu_custom_call.1} parent=1 // pred_fallthru
      _
    // Predicated region
    $region10: #{tpu_custom_call.1} parent=1 // pred_check
      _
    $region11: #{tpu_custom_call.1} parent=1 // pred_check_branch
      %39 = sbr.rel (0) target = $region13
    $region12: #{tpu_custom_call.1} parent=1 // pred_region
      %s41 = ssub.s32 4096, 4096
      %42 = vsyncadd [#allocation6], %s41
      %s43 = sshll.u32 [#allocation7], 4
      %s44 = int_to_ptr.vmem [resolvable:$true] %s43
      %49 = dma.hbm_to_vmem [thread:$0]  %s2, 4096, %s44, [#allocation6], 128, 128, 8
    $region13: #{tpu_custom_call.1} parent=1 // pred_fallthru
      _
    // Predicated region
    $region14: #{tpu_custom_call.1} parent=1 // pred_check
      _
    $region15: #{tpu_custom_call.1} parent=1 // pred_check_branch
      %51 = sbr.rel (0) target = $region17
    $region16: #{tpu_custom_call.1} parent=1 // pred_region
      %s53 = ssub.s32 4096, 4096
      %54 = vsyncadd [#allocation9], %s53
      %s55 = sshll.u32 [#allocation8], 4
      %s56 = int_to_ptr.vmem [resolvable:$true] %s55
      %61 = dma.hbm_to_vmem [thread:$0]  %s3, 4096, %s56, [#allocation9], 128, 128, 8
    $region17: #{tpu_custom_call.1} parent=1 // pred_fallthru
      _
    // Predicated region
    $region18: #{tpu_custom_call.1} parent=1 // pred_check
      _
    $region19: #{tpu_custom_call.1} parent=1 // pred_check_branch
      %63 = sbr.rel (0) target = $region21
    $region20: #{tpu_custom_call.1} parent=1 // pred_region
      %s65 = ssub.s32 2048, 2048
      %66 = vsyncadd [#allocation9], %s65
      %s67 = sshll.u32 [#allocation10], 4
      %s68 = int_to_ptr.vmem [resolvable:$true] %s67
      %73 = dma.hbm_to_vmem [thread:$0]  %s4, 2048, %s68, [#allocation9], 64, 64, 4
    $region21: #{tpu_custom_call.1} parent=1 // pred_fallthru
      _
    // Predicated region
    $region22: #{tpu_custom_call.1} parent=1 // pred_check
      _
    $region23: #{tpu_custom_call.1} parent=1 // pred_check_branch
      %75 = sbr.rel (0) target = $region25
    $region24: #{tpu_custom_call.1} parent=1 // pred_region
      %76 = dma.done [#allocation3], 4096
    $region25: #{tpu_custom_call.1} parent=1 // pred_fallthru
      _
    // Predicated region
    $region26: #{tpu_custom_call.1} parent=1 // pred_check
      _
    $region27: #{tpu_custom_call.1} parent=1 // pred_check_branch
      %78 = sbr.rel (0) target = $region29
    $region28: #{tpu_custom_call.1} parent=1 // pred_region
      %79 = dma.done [#allocation6], 4096
    $region29: #{tpu_custom_call.1} parent=1 // pred_fallthru
      _
    // Predicated region
    $region30: #{tpu_custom_call.1} parent=1 // pred_check
      _
    $region31: #{tpu_custom_call.1} parent=1 // pred_check_branch
      %81 = sbr.rel (0) target = $region33
    $region32: #{tpu_custom_call.1} parent=1 // pred_region
      %82 = dma.done [#allocation6], 4096
    $region33: #{tpu_custom_call.1} parent=1 // pred_fallthru
      _
    // Predicated region
    $region34: #{tpu_custom_call.1} parent=1 // pred_check
      _
    $region35: #{tpu_custom_call.1} parent=1 // pred_check_branch
      %84 = sbr.rel (0) target = $region37
    $region36: #{tpu_custom_call.1} parent=1 // pred_region
      %85 = dma.done [#allocation9], 4096
    $region37: #{tpu_custom_call.1} parent=1 // pred_fallthru
      _
    // Predicated region
    $region38: #{tpu_custom_call.1} parent=1 // pred_check
      _
    $region39: #{tpu_custom_call.1} parent=1 // pred_check_branch
      %87 = sbr.rel (0) target = $region41
    $region40: #{tpu_custom_call.1} parent=1 // pred_region
      %88 = dma.done [#allocation9], 2048
    $region41: #{tpu_custom_call.1} parent=1 // pred_fallthru
      _
    %v90 = vld [vmem:[#allocation2] sm:$0xff]
    %v91 = vld [vmem:[#allocation2 + $0x8] sm:$0xff]
    %v92 = vld [vmem:[#allocation2 + $0x10] sm:$0xff]
    %v93 = vld [vmem:[#allocation2 + $0x18] sm:$0xff]
    %v94 = vld [vmem:[#allocation2 + $0x20] sm:$0xff]
    %v95 = vld [vmem:[#allocation2 + $0x28] sm:$0xff]
    %v96 = vld [vmem:[#allocation2 + $0x30] sm:$0xff]
    %v97 = vld [vmem:[#allocation2 + $0x38] sm:$0xff]
    %v98 = vld [vmem:[#allocation2 + $0x40] sm:$0xff]
    %v99 = vld [vmem:[#allocation2 + $0x48] sm:$0xff]
    %v100 = vld [vmem:[#allocation2 + $0x50] sm:$0xff]
    %v101 = vld [vmem:[#allocation2 + $0x58] sm:$0xff]
    %v102 = vld [vmem:[#allocation2 + $0x60] sm:$0xff]
    %v103 = vld [vmem:[#allocation2 + $0x68] sm:$0xff]
    %v104 = vld [vmem:[#allocation2 + $0x70] sm:$0xff]
    %v105 = vld [vmem:[#allocation2 + $0x78] sm:$0xff]
    %v106 = vld [vmem:[#allocation2 + $0x80] sm:$0xff]
    %v107 = vld [vmem:[#allocation2 + $0x88] sm:$0xff]
    %v108 = vld [vmem:[#allocation2 + $0x90] sm:$0xff]
    %v109 = vld [vmem:[#allocation2 + $0x98] sm:$0xff]
    %v110 = vld [vmem:[#allocation2 + $0xa0] sm:$0xff]
    %v111 = vld [vmem:[#allocation2 + $0xa8] sm:$0xff]
    %v112 = vld [vmem:[#allocation2 + $0xb0] sm:$0xff]
    %v113 = vld [vmem:[#allocation2 + $0xb8] sm:$0xff]
    %v114 = vld [vmem:[#allocation2 + $0xc0] sm:$0xff]
    %v115 = vld [vmem:[#allocation2 + $0xc8] sm:$0xff]
    %v116 = vld [vmem:[#allocation2 + $0xd0] sm:$0xff]
    %v117 = vld [vmem:[#allocation2 + $0xd8] sm:$0xff]
    %v118 = vld [vmem:[#allocation2 + $0xe0] sm:$0xff]
    %v119 = vld [vmem:[#allocation2 + $0xe8] sm:$0xff]
    %v120 = vld [vmem:[#allocation2 + $0xf0] sm:$0xff]
    %v121 = vld [vmem:[#allocation2 + $0xf8] sm:$0xff]
    %v122 = vld [vmem:[#allocation5] sm:$0xff]
    %v123 = vld [vmem:[#allocation5 + $0x8] sm:$0xff]
    %v124 = vld [vmem:[#allocation5 + $0x10] sm:$0xff]
    %v125 = vld [vmem:[#allocation5 + $0x18] sm:$0xff]
    %v126 = vld [vmem:[#allocation5 + $0x20] sm:$0xff]
    %v127 = vld [vmem:[#allocation5 + $0x28] sm:$0xff]
    %v128 = vld [vmem:[#allocation5 + $0x30] sm:$0xff]
    %v129 = vld [vmem:[#allocation5 + $0x38] sm:$0xff]
    %v130 = vld [vmem:[#allocation5 + $0x40] sm:$0xff]
    %v131 = vld [vmem:[#allocation5 + $0x48] sm:$0xff]
    %v132 = vld [vmem:[#allocation5 + $0x50] sm:$0xff]
    %v133 = vld [vmem:[#allocation5 + $0x58] sm:$0xff]
    %v134 = vld [vmem:[#allocation5 + $0x60] sm:$0xff]
    %v135 = vld [vmem:[#allocation5 + $0x68] sm:$0xff]
    %v136 = vld [vmem:[#allocation5 + $0x70] sm:$0xff]
    %v137 = vld [vmem:[#allocation5 + $0x78] sm:$0xff]
    %v138 = vld [vmem:[#allocation5 + $0x80] sm:$0xff]
    %v139 = vld [vmem:[#allocation5 + $0x88] sm:$0xff]
    %v140 = vld [vmem:[#allocation5 + $0x90] sm:$0xff]
    %v141 = vld [vmem:[#allocation5 + $0x98] sm:$0xff]
    %v142 = vld [vmem:[#allocation5 + $0xa0] sm:$0xff]
    %v143 = vld [vmem:[#allocation5 + $0xa8] sm:$0xff]
    %v144 = vld [vmem:[#allocation5 + $0xb0] sm:$0xff]
    %v145 = vld [vmem:[#allocation5 + $0xb8] sm:$0xff]
    %v146 = vld [vmem:[#allocation5 + $0xc0] sm:$0xff]
    %v147 = vld [vmem:[#allocation5 + $0xc8] sm:$0xff]
    %v148 = vld [vmem:[#allocation5 + $0xd0] sm:$0xff]
    %v149 = vld [vmem:[#allocation5 + $0xd8] sm:$0xff]
    %v150 = vld [vmem:[#allocation5 + $0xe0] sm:$0xff]
    %v151 = vld [vmem:[#allocation5 + $0xe8] sm:$0xff]
    %v152 = vld [vmem:[#allocation5 + $0xf0] sm:$0xff]
    %v153 = vld [vmem:[#allocation5 + $0xf8] sm:$0xff]
    %v186 = vunpack.c.l.b16 %v90
    %v187 = vunpack.c.h.b16 %v90
    %v188 = vunpack.c.l.b16 %v91
    %v189 = vunpack.c.h.b16 %v91
    %v190 = vunpack.c.l.b16 %v92
    %v191 = vunpack.c.h.b16 %v92
    %v192 = vunpack.c.l.b16 %v93
    %v193 = vunpack.c.h.b16 %v93
    %v194 = vunpack.c.l.b16 %v94
    %v195 = vunpack.c.h.b16 %v94
    %v196 = vunpack.c.l.b16 %v95
    %v197 = vunpack.c.h.b16 %v95
    %v198 = vunpack.c.l.b16 %v96
    %v199 = vunpack.c.h.b16 %v96
    %v200 = vunpack.c.l.b16 %v97
    %v201 = vunpack.c.h.b16 %v97
    %v202 = vunpack.c.l.b16 %v98
    %v203 = vunpack.c.h.b16 %v98
    %v204 = vunpack.c.l.b16 %v99
    %v205 = vunpack.c.h.b16 %v99
    %v206 = vunpack.c.l.b16 %v100
    %v207 = vunpack.c.h.b16 %v100
    %v208 = vunpack.c.l.b16 %v101
    %v209 = vunpack.c.h.b16 %v101
    %v210 = vunpack.c.l.b16 %v102
    %v211 = vunpack.c.h.b16 %v102
    %v212 = vunpack.c.l.b16 %v103
    %v213 = vunpack.c.h.b16 %v103
    %v214 = vunpack.c.l.b16 %v104
    %v215 = vunpack.c.h.b16 %v104
    %v216 = vunpack.c.l.b16 %v105
    %v217 = vunpack.c.h.b16 %v105
    %v218 = vunpack.c.l.b16 %v106
    %v219 = vunpack.c.h.b16 %v106
    %v220 = vunpack.c.l.b16 %v107
    %v221 = vunpack.c.h.b16 %v107
    %v222 = vunpack.c.l.b16 %v108
    %v223 = vunpack.c.h.b16 %v108
    %v224 = vunpack.c.l.b16 %v109
    %v225 = vunpack.c.h.b16 %v109
    %v226 = vunpack.c.l.b16 %v110
    %v227 = vunpack.c.h.b16 %v110
    %v228 = vunpack.c.l.b16 %v111
    %v229 = vunpack.c.h.b16 %v111
    %v230 = vunpack.c.l.b16 %v112
    %v231 = vunpack.c.h.b16 %v112
    %v232 = vunpack.c.l.b16 %v113
    %v233 = vunpack.c.h.b16 %v113
    %v234 = vunpack.c.l.b16 %v114
    %v235 = vunpack.c.h.b16 %v114
    %v236 = vunpack.c.l.b16 %v115
    %v237 = vunpack.c.h.b16 %v115
    %v238 = vunpack.c.l.b16 %v116
    %v239 = vunpack.c.h.b16 %v116
    %v240 = vunpack.c.l.b16 %v117
    %v241 = vunpack.c.h.b16 %v117
    %v242 = vunpack.c.l.b16 %v118
    %v243 = vunpack.c.h.b16 %v118
    %v244 = vunpack.c.l.b16 %v119
    %v245 = vunpack.c.h.b16 %v119
    %v246 = vunpack.c.l.b16 %v120
    %v247 = vunpack.c.h.b16 %v120
    %v248 = vunpack.c.l.b16 %v121
    %v249 = vunpack.c.h.b16 %v121
    %v250 = vpack.c.b16 %v188, %v186
    %v251 = vpack.c.b16 %v189, %v187
    %v252 = vpack.c.b16 %v192, %v190
    %v253 = vpack.c.b16 %v193, %v191
    %v254 = vpack.c.b16 %v196, %v194
    %v255 = vpack.c.b16 %v197, %v195
    %v256 = vpack.c.b16 %v200, %v198
    %v257 = vpack.c.b16 %v201, %v199
    %v258 = vpack.c.b16 %v204, %v202
    %v259 = vpack.c.b16 %v205, %v203
    %v260 = vpack.c.b16 %v208, %v206
    %v261 = vpack.c.b16 %v209, %v207
    %v262 = vpack.c.b16 %v212, %v210
    %v263 = vpack.c.b16 %v213, %v211
    %v264 = vpack.c.b16 %v216, %v214
    %v265 = vpack.c.b16 %v217, %v215
    %v266 = vpack.c.b16 %v220, %v218
    %v267 = vpack.c.b16 %v221, %v219
    %v268 = vpack.c.b16 %v224, %v222
    %v269 = vpack.c.b16 %v225, %v223
    %v270 = vpack.c.b16 %v228, %v226
    %v271 = vpack.c.b16 %v229, %v227
    %v272 = vpack.c.b16 %v232, %v230
    %v273 = vpack.c.b16 %v233, %v231
    %v274 = vpack.c.b16 %v236, %v234
    %v275 = vpack.c.b16 %v237, %v235
    %v276 = vpack.c.b16 %v240, %v238
    %v277 = vpack.c.b16 %v241, %v239
    %v278 = vpack.c.b16 %v244, %v242
    %v279 = vpack.c.b16 %v245, %v243
    %v280 = vpack.c.b16 %v248, %v246
    %v281 = vpack.c.b16 %v249, %v247
    %v346 = vunpack.c.l.b16 %v122
    %v347 = vunpack.c.h.b16 %v122
    %v348 = vunpack.c.l.b16 %v123
    %v349 = vunpack.c.h.b16 %v123
    %v350 = vunpack.c.l.b16 %v124
    %v351 = vunpack.c.h.b16 %v124
    %v352 = vunpack.c.l.b16 %v125
    %v353 = vunpack.c.h.b16 %v125
    %v354 = vunpack.c.l.b16 %v126
    %v355 = vunpack.c.h.b16 %v126
    %v356 = vunpack.c.l.b16 %v127
    %v357 = vunpack.c.h.b16 %v127
    %v358 = vunpack.c.l.b16 %v128
    %v359 = vunpack.c.h.b16 %v128
    %v360 = vunpack.c.l.b16 %v129
    %v361 = vunpack.c.h.b16 %v129
    %v362 = vunpack.c.l.b16 %v130
    %v363 = vunpack.c.h.b16 %v130
    %v364 = vunpack.c.l.b16 %v131
    %v365 = vunpack.c.h.b16 %v131
    %v366 = vunpack.c.l.b16 %v132
    %v367 = vunpack.c.h.b16 %v132
    %v368 = vunpack.c.l.b16 %v133
    %v369 = vunpack.c.h.b16 %v133
    %v370 = vunpack.c.l.b16 %v134
    %v371 = vunpack.c.h.b16 %v134
    %v372 = vunpack.c.l.b16 %v135
    %v373 = vunpack.c.h.b16 %v135
    %v374 = vunpack.c.l.b16 %v136
    %v375 = vunpack.c.h.b16 %v136
    %v376 = vunpack.c.l.b16 %v137
    %v377 = vunpack.c.h.b16 %v137
    %v378 = vunpack.c.l.b16 %v138
    %v379 = vunpack.c.h.b16 %v138
    %v380 = vunpack.c.l.b16 %v139
    %v381 = vunpack.c.h.b16 %v139
    %v382 = vunpack.c.l.b16 %v140
    %v383 = vunpack.c.h.b16 %v140
    %v384 = vunpack.c.l.b16 %v141
    %v385 = vunpack.c.h.b16 %v141
    %v386 = vunpack.c.l.b16 %v142
    %v387 = vunpack.c.h.b16 %v142
    %v388 = vunpack.c.l.b16 %v143
    %v389 = vunpack.c.h.b16 %v143
    %v390 = vunpack.c.l.b16 %v144
    %v391 = vunpack.c.h.b16 %v144
    %v392 = vunpack.c.l.b16 %v145
    %v393 = vunpack.c.h.b16 %v145
    %v394 = vunpack.c.l.b16 %v146
    %v395 = vunpack.c.h.b16 %v146
    %v396 = vunpack.c.l.b16 %v147
    %v397 = vunpack.c.h.b16 %v147
    %v398 = vunpack.c.l.b16 %v148
    %v399 = vunpack.c.h.b16 %v148
    %v400 = vunpack.c.l.b16 %v149
    %v401 = vunpack.c.h.b16 %v149
    %v402 = vunpack.c.l.b16 %v150
    %v403 = vunpack.c.h.b16 %v150
    %v404 = vunpack.c.l.b16 %v151
    %v405 = vunpack.c.h.b16 %v151
    %v406 = vunpack.c.l.b16 %v152
    %v407 = vunpack.c.h.b16 %v152
    %v408 = vunpack.c.l.b16 %v153
    %v409 = vunpack.c.h.b16 %v153
    %v410 = vpack.c.b16 %v348, %v346
    %v411 = vpack.c.b16 %v349, %v347
    %v412 = vpack.c.b16 %v352, %v350
    %v413 = vpack.c.b16 %v353, %v351
    %v414 = vpack.c.b16 %v356, %v354
    %v415 = vpack.c.b16 %v357, %v355
    %v416 = vpack.c.b16 %v360, %v358
    %v417 = vpack.c.b16 %v361, %v359
    %v418 = vpack.c.b16 %v364, %v362
    %v419 = vpack.c.b16 %v365, %v363
    %v420 = vpack.c.b16 %v368, %v366
    %v421 = vpack.c.b16 %v369, %v367
    %v422 = vpack.c.b16 %v372, %v370
    %v423 = vpack.c.b16 %v373, %v371
    %v424 = vpack.c.b16 %v376, %v374
    %v425 = vpack.c.b16 %v377, %v375
    %v426 = vpack.c.b16 %v380, %v378
    %v427 = vpack.c.b16 %v381, %v379
    %v428 = vpack.c.b16 %v384, %v382
    %v429 = vpack.c.b16 %v385, %v383
    %v430 = vpack.c.b16 %v388, %v386
    %v431 = vpack.c.b16 %v389, %v387
    %v432 = vpack.c.b16 %v392, %v390
    %v433 = vpack.c.b16 %v393, %v391
    %v434 = vpack.c.b16 %v396, %v394
    %v435 = vpack.c.b16 %v397, %v395
    %v436 = vpack.c.b16 %v400, %v398
    %v437 = vpack.c.b16 %v401, %v399
    %v438 = vpack.c.b16 %v404, %v402
    %v439 = vpack.c.b16 %v405, %v403
    %v440 = vpack.c.b16 %v408, %v406
    %v441 = vpack.c.b16 %v409, %v407
    %474 = vmatprep.subr.bf16.mxu0 %v411
    %475 = vmatpush1.bf16.msra.mxu0 %v410
    %476 = vmatprep.subr.bf16.mxu0 %v413
    %477 = vmatpush1.bf16.msra.mxu0 %v412
    %478 = vmatprep.subr.bf16.mxu0 %v415
    %479 = vmatpush1.bf16.msra.mxu0 %v414
    %480 = vmatprep.subr.bf16.mxu0 %v417
    %481 = vmatpush1.bf16.msra.mxu0 %v416
    %482 = vmatprep.subr.bf16.mxu0 %v419
    %483 = vmatpush1.bf16.msra.mxu0 %v418
    %484 = vmatprep.subr.bf16.mxu0 %v421
    %485 = vmatpush1.bf16.msra.mxu0 %v420
    %486 = vmatprep.subr.bf16.mxu0 %v423
    %487 = vmatpush1.bf16.msra.mxu0 %v422
    %488 = vmatprep.subr.bf16.mxu0 %v425
    %489 = vmatpush1.bf16.msra.mxu0 %v424
    %490 = vmatprep.subr.bf16.mxu0 %v427
    %491 = vmatpush1.bf16.msra.mxu0 %v426
    %492 = vmatprep.subr.bf16.mxu0 %v429
    %493 = vmatpush1.bf16.msra.mxu0 %v428
    %494 = vmatprep.subr.bf16.mxu0 %v431
    %495 = vmatpush1.bf16.msra.mxu0 %v430
    %496 = vmatprep.subr.bf16.mxu0 %v433
    %497 = vmatpush1.bf16.msra.mxu0 %v432
    %498 = vmatprep.subr.bf16.mxu0 %v435
    %499 = vmatpush1.bf16.msra.mxu0 %v434
    %500 = vmatprep.subr.bf16.mxu0 %v437
    %501 = vmatpush1.bf16.msra.mxu0 %v436
    %502 = vmatprep.subr.bf16.mxu0 %v439
    %503 = vmatpush1.bf16.msra.mxu0 %v438
    %504 = vmatprep.subr.bf16.mxu0 %v441
    %505 = vmatpush1.bf16.msra.mxu0 %v440
    %506 = vmatprep.mubr.bf16.mxu0 %v251
    %507 = vmatmul.mubr.bf16.gmra.mrb[0].mxu0 %v250
    %v508 = vpop.f32.mrb[0].mxu0
    %v509 = vadd.f32 0.0, %v508
    %v510 = vpop.f32.mrb[0].mxu0
    %v511 = vadd.f32 0.0, %v510
    %v512 = vpop.f32.mrb[0].mxu0
    %v513 = vadd.f32 0.0, %v512
    %v514 = vpop.f32.mrb[0].mxu0
    %v515 = vadd.f32 0.0, %v514
    %516 = vmatprep.mubr.bf16.mxu0 %v253
    %517 = vmatmul.mubr.bf16.gmra.mrb[0].mxu0 %v252
    %v518 = vpop.f32.mrb[0].mxu0
    %v519 = vadd.f32 0.0, %v518
    %v520 = vpop.f32.mrb[0].mxu0
    %v521 = vadd.f32 0.0, %v520
    %v522 = vpop.f32.mrb[0].mxu0
    %v523 = vadd.f32 0.0, %v522
    %v524 = vpop.f32.mrb[0].mxu0
    %v525 = vadd.f32 0.0, %v524
    %526 = vmatprep.mubr.bf16.mxu0 %v255
    %527 = vmatmul.mubr.bf16.gmra.mrb[0].mxu0 %v254
    %v528 = vpop.f32.mrb[0].mxu0
    %v529 = vadd.f32 0.0, %v528
    %v530 = vpop.f32.mrb[0].mxu0
    %v531 = vadd.f32 0.0, %v530
    %v532 = vpop.f32.mrb[0].mxu0
    %v533 = vadd.f32 0.0, %v532
    %v534 = vpop.f32.mrb[0].mxu0
    %v535 = vadd.f32 0.0, %v534
    %536 = vmatprep.mubr.bf16.mxu0 %v257
    %537 = vmatmul.mubr.bf16.gmra.mrb[0].mxu0 %v256
    %v538 = vpop.f32.mrb[0].mxu0
    %v539 = vadd.f32 0.0, %v538
    %v540 = vpop.f32.mrb[0].mxu0
    %v541 = vadd.f32 0.0, %v540
    %v542 = vpop.f32.mrb[0].mxu0
    %v543 = vadd.f32 0.0, %v542
    %v544 = vpop.f32.mrb[0].mxu0
    %v545 = vadd.f32 0.0, %v544
    %546 = vmatprep.mubr.bf16.mxu0 %v259
    %547 = vmatmul.mubr.bf16.gmra.mrb[0].mxu0 %v258
    %v548 = vpop.f32.mrb[0].mxu0
    %v549 = vadd.f32 0.0, %v548
    %v550 = vpop.f32.mrb[0].mxu0
    %v551 = vadd.f32 0.0, %v550
    %v552 = vpop.f32.mrb[0].mxu0
    %v553 = vadd.f32 0.0, %v552
    %v554 = vpop.f32.mrb[0].mxu0
    %v555 = vadd.f32 0.0, %v554
    %556 = vmatprep.mubr.bf16.mxu0 %v261
    %557 = vmatmul.mubr.bf16.gmra.mrb[0].mxu0 %v260
    %v558 = vpop.f32.mrb[0].mxu0
    %v559 = vadd.f32 0.0, %v558
    %v560 = vpop.f32.mrb[0].mxu0
    %v561 = vadd.f32 0.0, %v560
    %v562 = vpop.f32.mrb[0].mxu0
    %v563 = vadd.f32 0.0, %v562
    %v564 = vpop.f32.mrb[0].mxu0
    %v565 = vadd.f32 0.0, %v564
    %566 = vmatprep.mubr.bf16.mxu0 %v263
    %567 = vmatmul.mubr.bf16.gmra.mrb[0].mxu0 %v262
    %v568 = vpop.f32.mrb[0].mxu0
    %v569 = vadd.f32 0.0, %v568
    %v570 = vpop.f32.mrb[0].mxu0
    %v571 = vadd.f32 0.0, %v570
    %v572 = vpop.f32.mrb[0].mxu0
    %v573 = vadd.f32 0.0, %v572
    %v574 = vpop.f32.mrb[0].mxu0
    %v575 = vadd.f32 0.0, %v574
    %576 = vmatprep.mubr.bf16.mxu0 %v265
    %577 = vmatmul.mubr.bf16.gmra.mrb[0].mxu0 %v264
    %v578 = vpop.f32.mrb[0].mxu0
    %v579 = vadd.f32 0.0, %v578
    %v580 = vpop.f32.mrb[0].mxu0
    %v581 = vadd.f32 0.0, %v580
    %v582 = vpop.f32.mrb[0].mxu0
    %v583 = vadd.f32 0.0, %v582
    %v584 = vpop.f32.mrb[0].mxu0
    %v585 = vadd.f32 0.0, %v584
    %586 = vmatprep.mubr.bf16.mxu0 %v267
    %587 = vmatmul.mubr.bf16.gmra.mrb[0].mxu0 %v266
    %v588 = vpop.f32.mrb[0].mxu0
    %v589 = vadd.f32 0.0, %v588
    %v590 = vpop.f32.mrb[0].mxu0
    %v591 = vadd.f32 0.0, %v590
    %v592 = vpop.f32.mrb[0].mxu0
    %v593 = vadd.f32 0.0, %v592
    %v594 = vpop.f32.mrb[0].mxu0
    %v595 = vadd.f32 0.0, %v594
    %596 = vmatprep.mubr.bf16.mxu0 %v269
    %597 = vmatmul.mubr.bf16.gmra.mrb[0].mxu0 %v268
    %v598 = vpop.f32.mrb[0].mxu0
    %v599 = vadd.f32 0.0, %v598
    %v600 = vpop.f32.mrb[0].mxu0
    %v601 = vadd.f32 0.0, %v600
    %v602 = vpop.f32.mrb[0].mxu0
    %v603 = vadd.f32 0.0, %v602
    %v604 = vpop.f32.mrb[0].mxu0
    %v605 = vadd.f32 0.0, %v604
    %606 = vmatprep.mubr.bf16.mxu0 %v271
    %607 = vmatmul.mubr.bf16.gmra.mrb[0].mxu0 %v270
    %v608 = vpop.f32.mrb[0].mxu0
    %v609 = vadd.f32 0.0, %v608
    %v610 = vpop.f32.mrb[0].mxu0
    %v611 = vadd.f32 0.0, %v610
    %v612 = vpop.f32.mrb[0].mxu0
    %v613 = vadd.f32 0.0, %v612
    %v614 = vpop.f32.mrb[0].mxu0
    %v615 = vadd.f32 0.0, %v614
    %616 = vmatprep.mubr.bf16.mxu0 %v273
    %617 = vmatmul.mubr.bf16.gmra.mrb[0].mxu0 %v272
    %v618 = vpop.f32.mrb[0].mxu0
    %v619 = vadd.f32 0.0, %v618
    %v620 = vpop.f32.mrb[0].mxu0
    %v621 = vadd.f32 0.0, %v620
    %v622 = vpop.f32.mrb[0].mxu0
    %v623 = vadd.f32 0.0, %v622
    %v624 = vpop.f32.mrb[0].mxu0
    %v625 = vadd.f32 0.0, %v624
    %626 = vmatprep.mubr.bf16.mxu0 %v275
    %627 = vmatmul.mubr.bf16.gmra.mrb[0].mxu0 %v274
    %v628 = vpop.f32.mrb[0].mxu0
    %v629 = vadd.f32 0.0, %v628
    %v630 = vpop.f32.mrb[0].mxu0
    %v631 = vadd.f32 0.0, %v630
    %v632 = vpop.f32.mrb[0].mxu0
    %v633 = vadd.f32 0.0, %v632
    %v634 = vpop.f32.mrb[0].mxu0
    %v635 = vadd.f32 0.0, %v634
    %636 = vmatprep.mubr.bf16.mxu0 %v277
    %637 = vmatmul.mubr.bf16.gmra.mrb[0].mxu0 %v276
    %v638 = vpop.f32.mrb[0].mxu0
    %v639 = vadd.f32 0.0, %v638
    %v640 = vpop.f32.mrb[0].mxu0
    %v641 = vadd.f32 0.0, %v640
    %v642 = vpop.f32.mrb[0].mxu0
    %v643 = vadd.f32 0.0, %v642
    %v644 = vpop.f32.mrb[0].mxu0
    %v645 = vadd.f32 0.0, %v644
    %646 = vmatprep.mubr.bf16.mxu0 %v279
    %647 = vmatmul.mubr.bf16.gmra.mrb[0].mxu0 %v278
    %v648 = vpop.f32.mrb[0].mxu0
    %v649 = vadd.f32 0.0, %v648
    %v650 = vpop.f32.mrb[0].mxu0
    %v651 = vadd.f32 0.0, %v650
    %v652 = vpop.f32.mrb[0].mxu0
    %v653 = vadd.f32 0.0, %v652
    %v654 = vpop.f32.mrb[0].mxu0
    %v655 = vadd.f32 0.0, %v654
    %656 = vmatprep.mubr.bf16.mxu0 %v281
    %657 = vmatmul.mubr.bf16.gmra.mrb[0].mxu0 %v280
    %v658 = vpop.f32.mrb[0].mxu0
    %v659 = vadd.f32 0.0, %v658
    %v660 = vpop.f32.mrb[0].mxu0
    %v661 = vadd.f32 0.0, %v660
    %v662 = vpop.f32.mrb[0].mxu0
    %v663 = vadd.f32 0.0, %v662
    %v664 = vpop.f32.mrb[0].mxu0
    %v665 = vadd.f32 0.0, %v664
    %666 = vdwg.mxu0
    %v667 = vtanh.pop %v509
    %v668 = vtanh.pop %v511
    %v669 = vtanh.pop %v513
    %v670 = vtanh.pop %v515
    %v671 = vtanh.pop %v519
    %v672 = vtanh.pop %v521
    %v673 = vtanh.pop %v523
    %v674 = vtanh.pop %v525
    %v675 = vtanh.pop %v529
    %v676 = vtanh.pop %v531
    %v677 = vtanh.pop %v533
    %v678 = vtanh.pop %v535
    %v679 = vtanh.pop %v539
    %v680 = vtanh.pop %v541
    %v681 = vtanh.pop %v543
    %v682 = vtanh.pop %v545
    %v683 = vtanh.pop %v549
    %v684 = vtanh.pop %v551
    %v685 = vtanh.pop %v553
    %v686 = vtanh.pop %v555
    %v687 = vtanh.pop %v559
    %v688 = vtanh.pop %v561
    %v689 = vtanh.pop %v563
    %v690 = vtanh.pop %v565
    %v691 = vtanh.pop %v569
    %v692 = vtanh.pop %v571
    %v693 = vtanh.pop %v573
    %v694 = vtanh.pop %v575
    %v695 = vtanh.pop %v579
    %v696 = vtanh.pop %v581
    %v697 = vtanh.pop %v583
    %v698 = vtanh.pop %v585
    %v699 = vtanh.pop %v589
    %v700 = vtanh.pop %v591
    %v701 = vtanh.pop %v593
    %v702 = vtanh.pop %v595
    %v703 = vtanh.pop %v599
    %v704 = vtanh.pop %v601
    %v705 = vtanh.pop %v603
    %v706 = vtanh.pop %v605
    %v707 = vtanh.pop %v609
    %v708 = vtanh.pop %v611
    %v709 = vtanh.pop %v613
    %v710 = vtanh.pop %v615
    %v711 = vtanh.pop %v619
    %v712 = vtanh.pop %v621
    %v713 = vtanh.pop %v623
    %v714 = vtanh.pop %v625
    %v715 = vtanh.pop %v629
    %v716 = vtanh.pop %v631
    %v717 = vtanh.pop %v633
    %v718 = vtanh.pop %v635
    %v719 = vtanh.pop %v639
    %v720 = vtanh.pop %v641
    %v721 = vtanh.pop %v643
    %v722 = vtanh.pop %v645
    %v723 = vtanh.pop %v649
    %v724 = vtanh.pop %v651
    %v725 = vtanh.pop %v653
    %v726 = vtanh.pop %v655
    %v727 = vtanh.pop %v659
    %v728 = vtanh.pop %v661
    %v729 = vtanh.pop %v663
    %v730 = vtanh.pop %v665
    %v731 = vpack.c.bf16 %v669, %v667
    %v732 = vpack.c.bf16 %v670, %v668
    %v733 = vpack.c.bf16 %v673, %v671
    %v734 = vpack.c.bf16 %v674, %v672
    %v735 = vpack.c.bf16 %v677, %v675
    %v736 = vpack.c.bf16 %v678, %v676
    %v737 = vpack.c.bf16 %v681, %v679
    %v738 = vpack.c.bf16 %v682, %v680
    %v739 = vpack.c.bf16 %v685, %v683
    %v740 = vpack.c.bf16 %v686, %v684
    %v741 = vpack.c.bf16 %v689, %v687
    %v742 = vpack.c.bf16 %v690, %v688
    %v743 = vpack.c.bf16 %v693, %v691
    %v744 = vpack.c.bf16 %v694, %v692
    %v745 = vpack.c.bf16 %v697, %v695
    %v746 = vpack.c.bf16 %v698, %v696
    %v747 = vpack.c.bf16 %v701, %v699
    %v748 = vpack.c.bf16 %v702, %v700
    %v749 = vpack.c.bf16 %v705, %v703
    %v750 = vpack.c.bf16 %v706, %v704
    %v751 = vpack.c.bf16 %v709, %v707
    %v752 = vpack.c.bf16 %v710, %v708
    %v753 = vpack.c.bf16 %v713, %v711
    %v754 = vpack.c.bf16 %v714, %v712
    %v755 = vpack.c.bf16 %v717, %v715
    %v756 = vpack.c.bf16 %v718, %v716
    %v757 = vpack.c.bf16 %v721, %v719
    %v758 = vpack.c.bf16 %v722, %v720
    %v759 = vpack.c.bf16 %v725, %v723
    %v760 = vpack.c.bf16 %v726, %v724
    %v761 = vpack.c.bf16 %v729, %v727
    %v762 = vpack.c.bf16 %v730, %v728
    %v763 = vld [vmem:[#allocation7] sm:$0xff]
    %v764 = vld [vmem:[#allocation7 + $0x8] sm:$0xff]
    %v765 = vld [vmem:[#allocation7 + $0x10] sm:$0xff]
    %v766 = vld [vmem:[#allocation7 + $0x18] sm:$0xff]
    %v767 = vld [vmem:[#allocation7 + $0x20] sm:$0xff]
    %v768 = vld [vmem:[#allocation7 + $0x28] sm:$0xff]
    %v769 = vld [vmem:[#allocation7 + $0x30] sm:$0xff]
    %v770 = vld [vmem:[#allocation7 + $0x38] sm:$0xff]
    %v771 = vld [vmem:[#allocation7 + $0x40] sm:$0xff]
    %v772 = vld [vmem:[#allocation7 + $0x48] sm:$0xff]
    %v773 = vld [vmem:[#allocation7 + $0x50] sm:$0xff]
    %v774 = vld [vmem:[#allocation7 + $0x58] sm:$0xff]
    %v775 = vld [vmem:[#allocation7 + $0x60] sm:$0xff]
    %v776 = vld [vmem:[#allocation7 + $0x68] sm:$0xff]
    %v777 = vld [vmem:[#allocation7 + $0x70] sm:$0xff]
    %v778 = vld [vmem:[#allocation7 + $0x78] sm:$0xff]
    %v779 = vld [vmem:[#allocation7 + $0x80] sm:$0xff]
    %v780 = vld [vmem:[#allocation7 + $0x88] sm:$0xff]
    %v781 = vld [vmem:[#allocation7 + $0x90] sm:$0xff]
    %v782 = vld [vmem:[#allocation7 + $0x98] sm:$0xff]
    %v783 = vld [vmem:[#allocation7 + $0xa0] sm:$0xff]
    %v784 = vld [vmem:[#allocation7 + $0xa8] sm:$0xff]
    %v785 = vld [vmem:[#allocation7 + $0xb0] sm:$0xff]
    %v786 = vld [vmem:[#allocation7 + $0xb8] sm:$0xff]
    %v787 = vld [vmem:[#allocation7 + $0xc0] sm:$0xff]
    %v788 = vld [vmem:[#allocation7 + $0xc8] sm:$0xff]
    %v789 = vld [vmem:[#allocation7 + $0xd0] sm:$0xff]
    %v790 = vld [vmem:[#allocation7 + $0xd8] sm:$0xff]
    %v791 = vld [vmem:[#allocation7 + $0xe0] sm:$0xff]
    %v792 = vld [vmem:[#allocation7 + $0xe8] sm:$0xff]
    %v793 = vld [vmem:[#allocation7 + $0xf0] sm:$0xff]
    %v794 = vld [vmem:[#allocation7 + $0xf8] sm:$0xff]
    %v827 = vunpack.c.l.b16 %v763
    %v828 = vunpack.c.h.b16 %v763
    %v829 = vunpack.c.l.b16 %v764
    %v830 = vunpack.c.h.b16 %v764
    %v831 = vunpack.c.l.b16 %v765
    %v832 = vunpack.c.h.b16 %v765
    %v833 = vunpack.c.l.b16 %v766
    %v834 = vunpack.c.h.b16 %v766
    %v835 = vunpack.c.l.b16 %v767
    %v836 = vunpack.c.h.b16 %v767
    %v837 = vunpack.c.l.b16 %v768
    %v838 = vunpack.c.h.b16 %v768
    %v839 = vunpack.c.l.b16 %v769
    %v840 = vunpack.c.h.b16 %v769
    %v841 = vunpack.c.l.b16 %v770
    %v842 = vunpack.c.h.b16 %v770
    %v843 = vunpack.c.l.b16 %v771
    %v844 = vunpack.c.h.b16 %v771
    %v845 = vunpack.c.l.b16 %v772
    %v846 = vunpack.c.h.b16 %v772
    %v847 = vunpack.c.l.b16 %v773
    %v848 = vunpack.c.h.b16 %v773
    %v849 = vunpack.c.l.b16 %v774
    %v850 = vunpack.c.h.b16 %v774
    %v851 = vunpack.c.l.b16 %v775
    %v852 = vunpack.c.h.b16 %v775
    %v853 = vunpack.c.l.b16 %v776
    %v854 = vunpack.c.h.b16 %v776
    %v855 = vunpack.c.l.b16 %v777
    %v856 = vunpack.c.h.b16 %v777
    %v857 = vunpack.c.l.b16 %v778
    %v858 = vunpack.c.h.b16 %v778
    %v859 = vunpack.c.l.b16 %v779
    %v860 = vunpack.c.h.b16 %v779
    %v861 = vunpack.c.l.b16 %v780
    %v862 = vunpack.c.h.b16 %v780
    %v863 = vunpack.c.l.b16 %v781
    %v864 = vunpack.c.h.b16 %v781
    %v865 = vunpack.c.l.b16 %v782
    %v866 = vunpack.c.h.b16 %v782
    %v867 = vunpack.c.l.b16 %v783
    %v868 = vunpack.c.h.b16 %v783
    %v869 = vunpack.c.l.b16 %v784
    %v870 = vunpack.c.h.b16 %v784
    %v871 = vunpack.c.l.b16 %v785
    %v872 = vunpack.c.h.b16 %v785
    %v873 = vunpack.c.l.b16 %v786
    %v874 = vunpack.c.h.b16 %v786
    %v875 = vunpack.c.l.b16 %v787
    %v876 = vunpack.c.h.b16 %v787
    %v877 = vunpack.c.l.b16 %v788
    %v878 = vunpack.c.h.b16 %v788
    %v879 = vunpack.c.l.b16 %v789
    %v880 = vunpack.c.h.b16 %v789
    %v881 = vunpack.c.l.b16 %v790
    %v882 = vunpack.c.h.b16 %v790
    %v883 = vunpack.c.l.b16 %v791
    %v884 = vunpack.c.h.b16 %v791
    %v885 = vunpack.c.l.b16 %v792
    %v886 = vunpack.c.h.b16 %v792
    %v887 = vunpack.c.l.b16 %v793
    %v888 = vunpack.c.h.b16 %v793
    %v889 = vunpack.c.l.b16 %v794
    %v890 = vunpack.c.h.b16 %v794
    %v891 = vpack.c.b16 %v829, %v827
    %v892 = vpack.c.b16 %v830, %v828
    %v893 = vpack.c.b16 %v833, %v831
    %v894 = vpack.c.b16 %v834, %v832
    %v895 = vpack.c.b16 %v837, %v835
    %v896 = vpack.c.b16 %v838, %v836
    %v897 = vpack.c.b16 %v841, %v839
    %v898 = vpack.c.b16 %v842, %v840
    %v899 = vpack.c.b16 %v845, %v843
    %v900 = vpack.c.b16 %v846, %v844
    %v901 = vpack.c.b16 %v849, %v847
    %v902 = vpack.c.b16 %v850, %v848
    %v903 = vpack.c.b16 %v853, %v851
    %v904 = vpack.c.b16 %v854, %v852
    %v905 = vpack.c.b16 %v857, %v855
    %v906 = vpack.c.b16 %v858, %v856
    %v907 = vpack.c.b16 %v861, %v859
    %v908 = vpack.c.b16 %v862, %v860
    %v909 = vpack.c.b16 %v865, %v863
    %v910 = vpack.c.b16 %v866, %v864
    %v911 = vpack.c.b16 %v869, %v867
    %v912 = vpack.c.b16 %v870, %v868
    %v913 = vpack.c.b16 %v873, %v871
    %v914 = vpack.c.b16 %v874, %v872
    %v915 = vpack.c.b16 %v877, %v875
    %v916 = vpack.c.b16 %v878, %v876
    %v917 = vpack.c.b16 %v881, %v879
    %v918 = vpack.c.b16 %v882, %v880
    %v919 = vpack.c.b16 %v885, %v883
    %v920 = vpack.c.b16 %v886, %v884
    %v921 = vpack.c.b16 %v889, %v887
    %v922 = vpack.c.b16 %v890, %v888
    %955 = vmatprep.subr.bf16.mxu0 %v892
    %956 = vmatpush1.bf16.msra.mxu0 %v891
    %957 = vmatprep.subr.bf16.mxu0 %v894
    %958 = vmatpush1.bf16.msra.mxu0 %v893
    %959 = vmatprep.subr.bf16.mxu0 %v896
    %960 = vmatpush1.bf16.msra.mxu0 %v895
    %961 = vmatprep.subr.bf16.mxu0 %v898
    %962 = vmatpush1.bf16.msra.mxu0 %v897
    %963 = vmatprep.subr.bf16.mxu0 %v900
    %964 = vmatpush1.bf16.msra.mxu0 %v899
    %965 = vmatprep.subr.bf16.mxu0 %v902
    %966 = vmatpush1.bf16.msra.mxu0 %v901
    %967 = vmatprep.subr.bf16.mxu0 %v904
    %968 = vmatpush1.bf16.msra.mxu0 %v903
    %969 = vmatprep.subr.bf16.mxu0 %v906
    %970 = vmatpush1.bf16.msra.mxu0 %v905
    %971 = vmatprep.subr.bf16.mxu0 %v908
    %972 = vmatpush1.bf16.msra.mxu0 %v907
    %973 = vmatprep.subr.bf16.mxu0 %v910
    %974 = vmatpush1.bf16.msra.mxu0 %v909
    %975 = vmatprep.subr.bf16.mxu0 %v912
    %976 = vmatpush1.bf16.msra.mxu0 %v911
    %977 = vmatprep.subr.bf16.mxu0 %v914
    %978 = vmatpush1.bf16.msra.mxu0 %v913
    %979 = vmatprep.subr.bf16.mxu0 %v916
    %980 = vmatpush1.bf16.msra.mxu0 %v915
    %981 = vmatprep.subr.bf16.mxu0 %v918
    %982 = vmatpush1.bf16.msra.mxu0 %v917
    %983 = vmatprep.subr.bf16.mxu0 %v920
    %984 = vmatpush1.bf16.msra.mxu0 %v919
    %985 = vmatprep.subr.bf16.mxu0 %v922
    %986 = vmatpush1.bf16.msra.mxu0 %v921
    %987 = vmatprep.mubr.bf16.mxu0 %v732
    %988 = vmatmul.mubr.bf16.gmra.mrb[0].mxu0 %v731
    %v989 = vpop.f32.mrb[0].mxu0
    %v990 = vadd.f32 0.0, %v989
    %v991 = vpop.f32.mrb[0].mxu0
    %v992 = vadd.f32 0.0, %v991
    %v993 = vpop.f32.mrb[0].mxu0
    %v994 = vadd.f32 0.0, %v993
    %v995 = vpop.f32.mrb[0].mxu0
    %v996 = vadd.f32 0.0, %v995
    %997 = vmatprep.mubr.bf16.mxu0 %v734
    %998 = vmatmul.mubr.bf16.gmra.mrb[0].mxu0 %v733
    %v999 = vpop.f32.mrb[0].mxu0
    %v1000 = vadd.f32 0.0, %v999
    %v1001 = vpop.f32.mrb[0].mxu0
    %v1002 = vadd.f32 0.0, %v1001
    %v1003 = vpop.f32.mrb[0].mxu0
    %v1004 = vadd.f32 0.0, %v1003
    %v1005 = vpop.f32.mrb[0].mxu0
    %v1006 = vadd.f32 0.0, %v1005
    %1007 = vmatprep.mubr.bf16.mxu0 %v736
    %1008 = vmatmul.mubr.bf16.gmra.mrb[0].mxu0 %v735
    %v1009 = vpop.f32.mrb[0].mxu0
    %v1010 = vadd.f32 0.0, %v1009
    %v1011 = vpop.f32.mrb[0].mxu0
    %v1012 = vadd.f32 0.0, %v1011
    %v1013 = vpop.f32.mrb[0].mxu0
    %v1014 = vadd.f32 0.0, %v1013
    %v1015 = vpop.f32.mrb[0].mxu0
    %v1016 = vadd.f32 0.0, %v1015
    %1017 = vmatprep.mubr.bf16.mxu0 %v738
    %1018 = vmatmul.mubr.bf16.gmra.mrb[0].mxu0 %v737
    %v1019 = vpop.f32.mrb[0].mxu0
    %v1020 = vadd.f32 0.0, %v1019
    %v1021 = vpop.f32.mrb[0].mxu0
    %v1022 = vadd.f32 0.0, %v1021
    %v1023 = vpop.f32.mrb[0].mxu0
    %v1024 = vadd.f32 0.0, %v1023
    %v1025 = vpop.f32.mrb[0].mxu0
    %v1026 = vadd.f32 0.0, %v1025
    %1027 = vmatprep.mubr.bf16.mxu0 %v740
    %1028 = vmatmul.mubr.bf16.gmra.mrb[0].mxu0 %v739
    %v1029 = vpop.f32.mrb[0].mxu0
    %v1030 = vadd.f32 0.0, %v1029
    %v1031 = vpop.f32.mrb[0].mxu0
    %v1032 = vadd.f32 0.0, %v1031
    %v1033 = vpop.f32.mrb[0].mxu0
    %v1034 = vadd.f32 0.0, %v1033
    %v1035 = vpop.f32.mrb[0].mxu0
    %v1036 = vadd.f32 0.0, %v1035
    %1037 = vmatprep.mubr.bf16.mxu0 %v742
    %1038 = vmatmul.mubr.bf16.gmra.mrb[0].mxu0 %v741
    %v1039 = vpop.f32.mrb[0].mxu0
    %v1040 = vadd.f32 0.0, %v1039
    %v1041 = vpop.f32.mrb[0].mxu0
    %v1042 = vadd.f32 0.0, %v1041
    %v1043 = vpop.f32.mrb[0].mxu0
    %v1044 = vadd.f32 0.0, %v1043
    %v1045 = vpop.f32.mrb[0].mxu0
    %v1046 = vadd.f32 0.0, %v1045
    %1047 = vmatprep.mubr.bf16.mxu0 %v744
    %1048 = vmatmul.mubr.bf16.gmra.mrb[0].mxu0 %v743
    %v1049 = vpop.f32.mrb[0].mxu0
    %v1050 = vadd.f32 0.0, %v1049
    %v1051 = vpop.f32.mrb[0].mxu0
    %v1052 = vadd.f32 0.0, %v1051
    %v1053 = vpop.f32.mrb[0].mxu0
    %v1054 = vadd.f32 0.0, %v1053
    %v1055 = vpop.f32.mrb[0].mxu0
    %v1056 = vadd.f32 0.0, %v1055
    %1057 = vmatprep.mubr.bf16.mxu0 %v746
    %1058 = vmatmul.mubr.bf16.gmra.mrb[0].mxu0 %v745
    %v1059 = vpop.f32.mrb[0].mxu0
    %v1060 = vadd.f32 0.0, %v1059
    %v1061 = vpop.f32.mrb[0].mxu0
    %v1062 = vadd.f32 0.0, %v1061
    %v1063 = vpop.f32.mrb[0].mxu0
    %v1064 = vadd.f32 0.0, %v1063
    %v1065 = vpop.f32.mrb[0].mxu0
    %v1066 = vadd.f32 0.0, %v1065
    %1067 = vmatprep.mubr.bf16.mxu0 %v748
    %1068 = vmatmul.mubr.bf16.gmra.mrb[0].mxu0 %v747
    %v1069 = vpop.f32.mrb[0].mxu0
    %v1070 = vadd.f32 0.0, %v1069
    %v1071 = vpop.f32.mrb[0].mxu0
    %v1072 = vadd.f32 0.0, %v1071
    %v1073 = vpop.f32.mrb[0].mxu0
    %v1074 = vadd.f32 0.0, %v1073
    %v1075 = vpop.f32.mrb[0].mxu0
    %v1076 = vadd.f32 0.0, %v1075
    %1077 = vmatprep.mubr.bf16.mxu0 %v750
    %1078 = vmatmul.mubr.bf16.gmra.mrb[0].mxu0 %v749
    %v1079 = vpop.f32.mrb[0].mxu0
    %v1080 = vadd.f32 0.0, %v1079
    %v1081 = vpop.f32.mrb[0].mxu0
    %v1082 = vadd.f32 0.0, %v1081
    %v1083 = vpop.f32.mrb[0].mxu0
    %v1084 = vadd.f32 0.0, %v1083
    %v1085 = vpop.f32.mrb[0].mxu0
    %v1086 = vadd.f32 0.0, %v1085
    %1087 = vmatprep.mubr.bf16.mxu0 %v752
    %1088 = vmatmul.mubr.bf16.gmra.mrb[0].mxu0 %v751
    %v1089 = vpop.f32.mrb[0].mxu0
    %v1090 = vadd.f32 0.0, %v1089
    %v1091 = vpop.f32.mrb[0].mxu0
    %v1092 = vadd.f32 0.0, %v1091
    %v1093 = vpop.f32.mrb[0].mxu0
    %v1094 = vadd.f32 0.0, %v1093
    %v1095 = vpop.f32.mrb[0].mxu0
    %v1096 = vadd.f32 0.0, %v1095
    %1097 = vmatprep.mubr.bf16.mxu0 %v754
    %1098 = vmatmul.mubr.bf16.gmra.mrb[0].mxu0 %v753
    %v1099 = vpop.f32.mrb[0].mxu0
    %v1100 = vadd.f32 0.0, %v1099
    %v1101 = vpop.f32.mrb[0].mxu0
    %v1102 = vadd.f32 0.0, %v1101
    %v1103 = vpop.f32.mrb[0].mxu0
    %v1104 = vadd.f32 0.0, %v1103
    %v1105 = vpop.f32.mrb[0].mxu0
    %v1106 = vadd.f32 0.0, %v1105
    %1107 = vmatprep.mubr.bf16.mxu0 %v756
    %1108 = vmatmul.mubr.bf16.gmra.mrb[0].mxu0 %v755
    %v1109 = vpop.f32.mrb[0].mxu0
    %v1110 = vadd.f32 0.0, %v1109
    %v1111 = vpop.f32.mrb[0].mxu0
    %v1112 = vadd.f32 0.0, %v1111
    %v1113 = vpop.f32.mrb[0].mxu0
    %v1114 = vadd.f32 0.0, %v1113
    %v1115 = vpop.f32.mrb[0].mxu0
    %v1116 = vadd.f32 0.0, %v1115
    %1117 = vmatprep.mubr.bf16.mxu0 %v758
    %1118 = vmatmul.mubr.bf16.gmra.mrb[0].mxu0 %v757
    %v1119 = vpop.f32.mrb[0].mxu0
    %v1120 = vadd.f32 0.0, %v1119
    %v1121 = vpop.f32.mrb[0].mxu0
    %v1122 = vadd.f32 0.0, %v1121
    %v1123 = vpop.f32.mrb[0].mxu0
    %v1124 = vadd.f32 0.0, %v1123
    %v1125 = vpop.f32.mrb[0].mxu0
    %v1126 = vadd.f32 0.0, %v1125
    %1127 = vmatprep.mubr.bf16.mxu0 %v760
    %1128 = vmatmul.mubr.bf16.gmra.mrb[0].mxu0 %v759
    %v1129 = vpop.f32.mrb[0].mxu0
    %v1130 = vadd.f32 0.0, %v1129
    %v1131 = vpop.f32.mrb[0].mxu0
    %v1132 = vadd.f32 0.0, %v1131
    %v1133 = vpop.f32.mrb[0].mxu0
    %v1134 = vadd.f32 0.0, %v1133
    %v1135 = vpop.f32.mrb[0].mxu0
    %v1136 = vadd.f32 0.0, %v1135
    %1137 = vmatprep.mubr.bf16.mxu0 %v762
    %1138 = vmatmul.mubr.bf16.gmra.mrb[0].mxu0 %v761
    %v1139 = vpop.f32.mrb[0].mxu0
    %v1140 = vadd.f32 0.0, %v1139
    %v1141 = vpop.f32.mrb[0].mxu0
    %v1142 = vadd.f32 0.0, %v1141
    %v1143 = vpop.f32.mrb[0].mxu0
    %v1144 = vadd.f32 0.0, %v1143
    %v1145 = vpop.f32.mrb[0].mxu0
    %v1146 = vadd.f32 0.0, %v1145
    %1147 = vdwg.mxu0
    %v1148 = vtanh.pop %v990
    %v1149 = vtanh.pop %v992
    %v1150 = vtanh.pop %v994
    %v1151 = vtanh.pop %v996
    %v1152 = vtanh.pop %v1000
    %v1153 = vtanh.pop %v1002
    %v1154 = vtanh.pop %v1004
    %v1155 = vtanh.pop %v1006
    %v1156 = vtanh.pop %v1010
    %v1157 = vtanh.pop %v1012
    %v1158 = vtanh.pop %v1014
    %v1159 = vtanh.pop %v1016
    %v1160 = vtanh.pop %v1020
    %v1161 = vtanh.pop %v1022
    %v1162 = vtanh.pop %v1024
    %v1163 = vtanh.pop %v1026
    %v1164 = vtanh.pop %v1030
    %v1165 = vtanh.pop %v1032
    %v1166 = vtanh.pop %v1034
    %v1167 = vtanh.pop %v1036
    %v1168 = vtanh.pop %v1040
    %v1169 = vtanh.pop %v1042
    %v1170 = vtanh.pop %v1044
    %v1171 = vtanh.pop %v1046
    %v1172 = vtanh.pop %v1050
    %v1173 = vtanh.pop %v1052
    %v1174 = vtanh.pop %v1054
    %v1175 = vtanh.pop %v1056
    %v1176 = vtanh.pop %v1060
    %v1177 = vtanh.pop %v1062
    %v1178 = vtanh.pop %v1064
    %v1179 = vtanh.pop %v1066
    %v1180 = vtanh.pop %v1070
    %v1181 = vtanh.pop %v1072
    %v1182 = vtanh.pop %v1074
    %v1183 = vtanh.pop %v1076
    %v1184 = vtanh.pop %v1080
    %v1185 = vtanh.pop %v1082
    %v1186 = vtanh.pop %v1084
    %v1187 = vtanh.pop %v1086
    %v1188 = vtanh.pop %v1090
    %v1189 = vtanh.pop %v1092
    %v1190 = vtanh.pop %v1094
    %v1191 = vtanh.pop %v1096
    %v1192 = vtanh.pop %v1100
    %v1193 = vtanh.pop %v1102
    %v1194 = vtanh.pop %v1104
    %v1195 = vtanh.pop %v1106
    %v1196 = vtanh.pop %v1110
    %v1197 = vtanh.pop %v1112
    %v1198 = vtanh.pop %v1114
    %v1199 = vtanh.pop %v1116
    %v1200 = vtanh.pop %v1120
    %v1201 = vtanh.pop %v1122
    %v1202 = vtanh.pop %v1124
    %v1203 = vtanh.pop %v1126
    %v1204 = vtanh.pop %v1130
    %v1205 = vtanh.pop %v1132
    %v1206 = vtanh.pop %v1134
    %v1207 = vtanh.pop %v1136
    %v1208 = vtanh.pop %v1140
    %v1209 = vtanh.pop %v1142
    %v1210 = vtanh.pop %v1144
    %v1211 = vtanh.pop %v1146
    %v1212 = vpack.c.bf16 %v1150, %v1148
    %v1213 = vpack.c.bf16 %v1151, %v1149
    %v1214 = vpack.c.bf16 %v1154, %v1152
    %v1215 = vpack.c.bf16 %v1155, %v1153
    %v1216 = vpack.c.bf16 %v1158, %v1156
    %v1217 = vpack.c.bf16 %v1159, %v1157
    %v1218 = vpack.c.bf16 %v1162, %v1160
    %v1219 = vpack.c.bf16 %v1163, %v1161
    %v1220 = vpack.c.bf16 %v1166, %v1164
    %v1221 = vpack.c.bf16 %v1167, %v1165
    %v1222 = vpack.c.bf16 %v1170, %v1168
    %v1223 = vpack.c.bf16 %v1171, %v1169
    %v1224 = vpack.c.bf16 %v1174, %v1172
    %v1225 = vpack.c.bf16 %v1175, %v1173
    %v1226 = vpack.c.bf16 %v1178, %v1176
    %v1227 = vpack.c.bf16 %v1179, %v1177
    %v1228 = vpack.c.bf16 %v1182, %v1180
    %v1229 = vpack.c.bf16 %v1183, %v1181
    %v1230 = vpack.c.bf16 %v1186, %v1184
    %v1231 = vpack.c.bf16 %v1187, %v1185
    %v1232 = vpack.c.bf16 %v1190, %v1188
    %v1233 = vpack.c.bf16 %v1191, %v1189
    %v1234 = vpack.c.bf16 %v1194, %v1192
    %v1235 = vpack.c.bf16 %v1195, %v1193
    %v1236 = vpack.c.bf16 %v1198, %v1196
    %v1237 = vpack.c.bf16 %v1199, %v1197
    %v1238 = vpack.c.bf16 %v1202, %v1200
    %v1239 = vpack.c.bf16 %v1203, %v1201
    %v1240 = vpack.c.bf16 %v1206, %v1204
    %v1241 = vpack.c.bf16 %v1207, %v1205
    %v1242 = vpack.c.bf16 %v1210, %v1208
    %v1243 = vpack.c.bf16 %v1211, %v1209
    %v1244 = vld [vmem:[#allocation8] sm:$0xff]
    %v1245 = vld [vmem:[#allocation8 + $0x8] sm:$0xff]
    %v1246 = vld [vmem:[#allocation8 + $0x10] sm:$0xff]
    %v1247 = vld [vmem:[#allocation8 + $0x18] sm:$0xff]
    %v1248 = vld [vmem:[#allocation8 + $0x20] sm:$0xff]
    %v1249 = vld [vmem:[#allocation8 + $0x28] sm:$0xff]
    %v1250 = vld [vmem:[#allocation8 + $0x30] sm:$0xff]
    %v1251 = vld [vmem:[#allocation8 + $0x38] sm:$0xff]
    %v1252 = vld [vmem:[#allocation8 + $0x40] sm:$0xff]
    %v1253 = vld [vmem:[#allocation8 + $0x48] sm:$0xff]
    %v1254 = vld [vmem:[#allocation8 + $0x50] sm:$0xff]
    %v1255 = vld [vmem:[#allocation8 + $0x58] sm:$0xff]
    %v1256 = vld [vmem:[#allocation8 + $0x60] sm:$0xff]
    %v1257 = vld [vmem:[#allocation8 + $0x68] sm:$0xff]
    %v1258 = vld [vmem:[#allocation8 + $0x70] sm:$0xff]
    %v1259 = vld [vmem:[#allocation8 + $0x78] sm:$0xff]
    %v1260 = vld [vmem:[#allocation8 + $0x80] sm:$0xff]
    %v1261 = vld [vmem:[#allocation8 + $0x88] sm:$0xff]
    %v1262 = vld [vmem:[#allocation8 + $0x90] sm:$0xff]
    %v1263 = vld [vmem:[#allocation8 + $0x98] sm:$0xff]
    %v1264 = vld [vmem:[#allocation8 + $0xa0] sm:$0xff]
    %v1265 = vld [vmem:[#allocation8 + $0xa8] sm:$0xff]
    %v1266 = vld [vmem:[#allocation8 + $0xb0] sm:$0xff]
    %v1267 = vld [vmem:[#allocation8 + $0xb8] sm:$0xff]
    %v1268 = vld [vmem:[#allocation8 + $0xc0] sm:$0xff]
    %v1269 = vld [vmem:[#allocation8 + $0xc8] sm:$0xff]
    %v1270 = vld [vmem:[#allocation8 + $0xd0] sm:$0xff]
    %v1271 = vld [vmem:[#allocation8 + $0xd8] sm:$0xff]
    %v1272 = vld [vmem:[#allocation8 + $0xe0] sm:$0xff]
    %v1273 = vld [vmem:[#allocation8 + $0xe8] sm:$0xff]
    %v1274 = vld [vmem:[#allocation8 + $0xf0] sm:$0xff]
    %v1275 = vld [vmem:[#allocation8 + $0xf8] sm:$0xff]
    %v1308 = vunpack.c.l.b16 %v1244
    %v1309 = vunpack.c.h.b16 %v1244
    %v1310 = vunpack.c.l.b16 %v1245
    %v1311 = vunpack.c.h.b16 %v1245
    %v1312 = vunpack.c.l.b16 %v1246
    %v1313 = vunpack.c.h.b16 %v1246
    %v1314 = vunpack.c.l.b16 %v1247
    %v1315 = vunpack.c.h.b16 %v1247
    %v1316 = vunpack.c.l.b16 %v1248
    %v1317 = vunpack.c.h.b16 %v1248
    %v1318 = vunpack.c.l.b16 %v1249
    %v1319 = vunpack.c.h.b16 %v1249
    %v1320 = vunpack.c.l.b16 %v1250
    %v1321 = vunpack.c.h.b16 %v1250
    %v1322 = vunpack.c.l.b16 %v1251
    %v1323 = vunpack.c.h.b16 %v1251
    %v1324 = vunpack.c.l.b16 %v1252
    %v1325 = vunpack.c.h.b16 %v1252
    %v1326 = vunpack.c.l.b16 %v1253
    %v1327 = vunpack.c.h.b16 %v1253
    %v1328 = vunpack.c.l.b16 %v1254
    %v1329 = vunpack.c.h.b16 %v1254
    %v1330 = vunpack.c.l.b16 %v1255
    %v1331 = vunpack.c.h.b16 %v1255
    %v1332 = vunpack.c.l.b16 %v1256
    %v1333 = vunpack.c.h.b16 %v1256
    %v1334 = vunpack.c.l.b16 %v1257
    %v1335 = vunpack.c.h.b16 %v1257
    %v1336 = vunpack.c.l.b16 %v1258
    %v1337 = vunpack.c.h.b16 %v1258
    %v1338 = vunpack.c.l.b16 %v1259
    %v1339 = vunpack.c.h.b16 %v1259
    %v1340 = vunpack.c.l.b16 %v1260
    %v1341 = vunpack.c.h.b16 %v1260
    %v1342 = vunpack.c.l.b16 %v1261
    %v1343 = vunpack.c.h.b16 %v1261
    %v1344 = vunpack.c.l.b16 %v1262
    %v1345 = vunpack.c.h.b16 %v1262
    %v1346 = vunpack.c.l.b16 %v1263
    %v1347 = vunpack.c.h.b16 %v1263
    %v1348 = vunpack.c.l.b16 %v1264
    %v1349 = vunpack.c.h.b16 %v1264
    %v1350 = vunpack.c.l.b16 %v1265
    %v1351 = vunpack.c.h.b16 %v1265
    %v1352 = vunpack.c.l.b16 %v1266
    %v1353 = vunpack.c.h.b16 %v1266
    %v1354 = vunpack.c.l.b16 %v1267
    %v1355 = vunpack.c.h.b16 %v1267
    %v1356 = vunpack.c.l.b16 %v1268
    %v1357 = vunpack.c.h.b16 %v1268
    %v1358 = vunpack.c.l.b16 %v1269
    %v1359 = vunpack.c.h.b16 %v1269
    %v1360 = vunpack.c.l.b16 %v1270
    %v1361 = vunpack.c.h.b16 %v1270
    %v1362 = vunpack.c.l.b16 %v1271
    %v1363 = vunpack.c.h.b16 %v1271
    %v1364 = vunpack.c.l.b16 %v1272
    %v1365 = vunpack.c.h.b16 %v1272
    %v1366 = vunpack.c.l.b16 %v1273
    %v1367 = vunpack.c.h.b16 %v1273
    %v1368 = vunpack.c.l.b16 %v1274
    %v1369 = vunpack.c.h.b16 %v1274
    %v1370 = vunpack.c.l.b16 %v1275
    %v1371 = vunpack.c.h.b16 %v1275
    %v1372 = vpack.c.b16 %v1310, %v1308
    %v1373 = vpack.c.b16 %v1311, %v1309
    %v1374 = vpack.c.b16 %v1314, %v1312
    %v1375 = vpack.c.b16 %v1315, %v1313
    %v1376 = vpack.c.b16 %v1318, %v1316
    %v1377 = vpack.c.b16 %v1319, %v1317
    %v1378 = vpack.c.b16 %v1322, %v1320
    %v1379 = vpack.c.b16 %v1323, %v1321
    %v1380 = vpack.c.b16 %v1326, %v1324
    %v1381 = vpack.c.b16 %v1327, %v1325
    %v1382 = vpack.c.b16 %v1330, %v1328
    %v1383 = vpack.c.b16 %v1331, %v1329
    %v1384 = vpack.c.b16 %v1334, %v1332
    %v1385 = vpack.c.b16 %v1335, %v1333
    %v1386 = vpack.c.b16 %v1338, %v1336
    %v1387 = vpack.c.b16 %v1339, %v1337
    %v1388 = vpack.c.b16 %v1342, %v1340
    %v1389 = vpack.c.b16 %v1343, %v1341
    %v1390 = vpack.c.b16 %v1346, %v1344
    %v1391 = vpack.c.b16 %v1347, %v1345
    %v1392 = vpack.c.b16 %v1350, %v1348
    %v1393 = vpack.c.b16 %v1351, %v1349
    %v1394 = vpack.c.b16 %v1354, %v1352
    %v1395 = vpack.c.b16 %v1355, %v1353
    %v1396 = vpack.c.b16 %v1358, %v1356
    %v1397 = vpack.c.b16 %v1359, %v1357
    %v1398 = vpack.c.b16 %v1362, %v1360
    %v1399 = vpack.c.b16 %v1363, %v1361
    %v1400 = vpack.c.b16 %v1366, %v1364
    %v1401 = vpack.c.b16 %v1367, %v1365
    %v1402 = vpack.c.b16 %v1370, %v1368
    %v1403 = vpack.c.b16 %v1371, %v1369
    %1436 = vmatprep.subr.bf16.mxu0 %v1373
    %1437 = vmatpush1.bf16.msra.mxu0 %v1372
    %1438 = vmatprep.subr.bf16.mxu0 %v1375
    %1439 = vmatpush1.bf16.msra.mxu0 %v1374
    %1440 = vmatprep.subr.bf16.mxu0 %v1377
    %1441 = vmatpush1.bf16.msra.mxu0 %v1376
    %1442 = vmatprep.subr.bf16.mxu0 %v1379
    %1443 = vmatpush1.bf16.msra.mxu0 %v1378
    %1444 = vmatprep.subr.bf16.mxu0 %v1381
    %1445 = vmatpush1.bf16.msra.mxu0 %v1380
    %1446 = vmatprep.subr.bf16.mxu0 %v1383
    %1447 = vmatpush1.bf16.msra.mxu0 %v1382
    %1448 = vmatprep.subr.bf16.mxu0 %v1385
    %1449 = vmatpush1.bf16.msra.mxu0 %v1384
    %1450 = vmatprep.subr.bf16.mxu0 %v1387
    %1451 = vmatpush1.bf16.msra.mxu0 %v1386
    %1452 = vmatprep.subr.bf16.mxu0 %v1389
    %1453 = vmatpush1.bf16.msra.mxu0 %v1388
    %1454 = vmatprep.subr.bf16.mxu0 %v1391
    %1455 = vmatpush1.bf16.msra.mxu0 %v1390
    %1456 = vmatprep.subr.bf16.mxu0 %v1393
    %1457 = vmatpush1.bf16.msra.mxu0 %v1392
    %1458 = vmatprep.subr.bf16.mxu0 %v1395
    %1459 = vmatpush1.bf16.msra.mxu0 %v1394
    %1460 = vmatprep.subr.bf16.mxu0 %v1397
    %1461 = vmatpush1.bf16.msra.mxu0 %v1396
    %1462 = vmatprep.subr.bf16.mxu0 %v1399
    %1463 = vmatpush1.bf16.msra.mxu0 %v1398
    %1464 = vmatprep.subr.bf16.mxu0 %v1401
    %1465 = vmatpush1.bf16.msra.mxu0 %v1400
    %1466 = vmatprep.subr.bf16.mxu0 %v1403
    %1467 = vmatpush1.bf16.msra.mxu0 %v1402
    %1468 = vmatprep.mubr.bf16.mxu0 %v1213
    %1469 = vmatmul.mubr.bf16.gmra.mrb[0].mxu0 %v1212
    %v1470 = vpop.f32.mrb[0].mxu0
    %v1471 = vadd.f32 0.0, %v1470
    %v1472 = vpop.f32.mrb[0].mxu0
    %v1473 = vadd.f32 0.0, %v1472
    %v1474 = vpop.f32.mrb[0].mxu0
    %v1475 = vadd.f32 0.0, %v1474
    %v1476 = vpop.f32.mrb[0].mxu0
    %v1477 = vadd.f32 0.0, %v1476
    %1478 = vmatprep.mubr.bf16.mxu0 %v1215
    %1479 = vmatmul.mubr.bf16.gmra.mrb[0].mxu0 %v1214
    %v1480 = vpop.f32.mrb[0].mxu0
    %v1481 = vadd.f32 0.0, %v1480
    %v1482 = vpop.f32.mrb[0].mxu0
    %v1483 = vadd.f32 0.0, %v1482
    %v1484 = vpop.f32.mrb[0].mxu0
    %v1485 = vadd.f32 0.0, %v1484
    %v1486 = vpop.f32.mrb[0].mxu0
    %v1487 = vadd.f32 0.0, %v1486
    %1488 = vmatprep.mubr.bf16.mxu0 %v1217
    %1489 = vmatmul.mubr.bf16.gmra.mrb[0].mxu0 %v1216
    %v1490 = vpop.f32.mrb[0].mxu0
    %v1491 = vadd.f32 0.0, %v1490
    %v1492 = vpop.f32.mrb[0].mxu0
    %v1493 = vadd.f32 0.0, %v1492
    %v1494 = vpop.f32.mrb[0].mxu0
    %v1495 = vadd.f32 0.0, %v1494
    %v1496 = vpop.f32.mrb[0].mxu0
    %v1497 = vadd.f32 0.0, %v1496
    %1498 = vmatprep.mubr.bf16.mxu0 %v1219
    %1499 = vmatmul.mubr.bf16.gmra.mrb[0].mxu0 %v1218
    %v1500 = vpop.f32.mrb[0].mxu0
    %v1501 = vadd.f32 0.0, %v1500
    %v1502 = vpop.f32.mrb[0].mxu0
    %v1503 = vadd.f32 0.0, %v1502
    %v1504 = vpop.f32.mrb[0].mxu0
    %v1505 = vadd.f32 0.0, %v1504
    %v1506 = vpop.f32.mrb[0].mxu0
    %v1507 = vadd.f32 0.0, %v1506
    %1508 = vmatprep.mubr.bf16.mxu0 %v1221
    %1509 = vmatmul.mubr.bf16.gmra.mrb[0].mxu0 %v1220
    %v1510 = vpop.f32.mrb[0].mxu0
    %v1511 = vadd.f32 0.0, %v1510
    %v1512 = vpop.f32.mrb[0].mxu0
    %v1513 = vadd.f32 0.0, %v1512
    %v1514 = vpop.f32.mrb[0].mxu0
    %v1515 = vadd.f32 0.0, %v1514
    %v1516 = vpop.f32.mrb[0].mxu0
    %v1517 = vadd.f32 0.0, %v1516
    %1518 = vmatprep.mubr.bf16.mxu0 %v1223
    %1519 = vmatmul.mubr.bf16.gmra.mrb[0].mxu0 %v1222
    %v1520 = vpop.f32.mrb[0].mxu0
    %v1521 = vadd.f32 0.0, %v1520
    %v1522 = vpop.f32.mrb[0].mxu0
    %v1523 = vadd.f32 0.0, %v1522
    %v1524 = vpop.f32.mrb[0].mxu0
    %v1525 = vadd.f32 0.0, %v1524
    %v1526 = vpop.f32.mrb[0].mxu0
    %v1527 = vadd.f32 0.0, %v1526
    %1528 = vmatprep.mubr.bf16.mxu0 %v1225
    %1529 = vmatmul.mubr.bf16.gmra.mrb[0].mxu0 %v1224
    %v1530 = vpop.f32.mrb[0].mxu0
    %v1531 = vadd.f32 0.0, %v1530
    %v1532 = vpop.f32.mrb[0].mxu0
    %v1533 = vadd.f32 0.0, %v1532
    %v1534 = vpop.f32.mrb[0].mxu0
    %v1535 = vadd.f32 0.0, %v1534
    %v1536 = vpop.f32.mrb[0].mxu0
    %v1537 = vadd.f32 0.0, %v1536
    %1538 = vmatprep.mubr.bf16.mxu0 %v1227
    %1539 = vmatmul.mubr.bf16.gmra.mrb[0].mxu0 %v1226
    %v1540 = vpop.f32.mrb[0].mxu0
    %v1541 = vadd.f32 0.0, %v1540
    %v1542 = vpop.f32.mrb[0].mxu0
    %v1543 = vadd.f32 0.0, %v1542
    %v1544 = vpop.f32.mrb[0].mxu0
    %v1545 = vadd.f32 0.0, %v1544
    %v1546 = vpop.f32.mrb[0].mxu0
    %v1547 = vadd.f32 0.0, %v1546
    %1548 = vmatprep.mubr.bf16.mxu0 %v1229
    %1549 = vmatmul.mubr.bf16.gmra.mrb[0].mxu0 %v1228
    %v1550 = vpop.f32.mrb[0].mxu0
    %v1551 = vadd.f32 0.0, %v1550
    %v1552 = vpop.f32.mrb[0].mxu0
    %v1553 = vadd.f32 0.0, %v1552
    %v1554 = vpop.f32.mrb[0].mxu0
    %v1555 = vadd.f32 0.0, %v1554
    %v1556 = vpop.f32.mrb[0].mxu0
    %v1557 = vadd.f32 0.0, %v1556
    %1558 = vmatprep.mubr.bf16.mxu0 %v1231
    %1559 = vmatmul.mubr.bf16.gmra.mrb[0].mxu0 %v1230
    %v1560 = vpop.f32.mrb[0].mxu0
    %v1561 = vadd.f32 0.0, %v1560
    %v1562 = vpop.f32.mrb[0].mxu0
    %v1563 = vadd.f32 0.0, %v1562
    %v1564 = vpop.f32.mrb[0].mxu0
    %v1565 = vadd.f32 0.0, %v1564
    %v1566 = vpop.f32.mrb[0].mxu0
    %v1567 = vadd.f32 0.0, %v1566
    %1568 = vmatprep.mubr.bf16.mxu0 %v1233
    %1569 = vmatmul.mubr.bf16.gmra.mrb[0].mxu0 %v1232
    %v1570 = vpop.f32.mrb[0].mxu0
    %v1571 = vadd.f32 0.0, %v1570
    %v1572 = vpop.f32.mrb[0].mxu0
    %v1573 = vadd.f32 0.0, %v1572
    %v1574 = vpop.f32.mrb[0].mxu0
    %v1575 = vadd.f32 0.0, %v1574
    %v1576 = vpop.f32.mrb[0].mxu0
    %v1577 = vadd.f32 0.0, %v1576
    %1578 = vmatprep.mubr.bf16.mxu0 %v1235
    %1579 = vmatmul.mubr.bf16.gmra.mrb[0].mxu0 %v1234
    %v1580 = vpop.f32.mrb[0].mxu0
    %v1581 = vadd.f32 0.0, %v1580
    %v1582 = vpop.f32.mrb[0].mxu0
    %v1583 = vadd.f32 0.0, %v1582
    %v1584 = vpop.f32.mrb[0].mxu0
    %v1585 = vadd.f32 0.0, %v1584
    %v1586 = vpop.f32.mrb[0].mxu0
    %v1587 = vadd.f32 0.0, %v1586
    %1588 = vmatprep.mubr.bf16.mxu0 %v1237
    %1589 = vmatmul.mubr.bf16.gmra.mrb[0].mxu0 %v1236
    %v1590 = vpop.f32.mrb[0].mxu0
    %v1591 = vadd.f32 0.0, %v1590
    %v1592 = vpop.f32.mrb[0].mxu0
    %v1593 = vadd.f32 0.0, %v1592
    %v1594 = vpop.f32.mrb[0].mxu0
    %v1595 = vadd.f32 0.0, %v1594
    %v1596 = vpop.f32.mrb[0].mxu0
    %v1597 = vadd.f32 0.0, %v1596
    %1598 = vmatprep.mubr.bf16.mxu0 %v1239
    %1599 = vmatmul.mubr.bf16.gmra.mrb[0].mxu0 %v1238
    %v1600 = vpop.f32.mrb[0].mxu0
    %v1601 = vadd.f32 0.0, %v1600
    %v1602 = vpop.f32.mrb[0].mxu0
    %v1603 = vadd.f32 0.0, %v1602
    %v1604 = vpop.f32.mrb[0].mxu0
    %v1605 = vadd.f32 0.0, %v1604
    %v1606 = vpop.f32.mrb[0].mxu0
    %v1607 = vadd.f32 0.0, %v1606
    %1608 = vmatprep.mubr.bf16.mxu0 %v1241
    %1609 = vmatmul.mubr.bf16.gmra.mrb[0].mxu0 %v1240
    %v1610 = vpop.f32.mrb[0].mxu0
    %v1611 = vadd.f32 0.0, %v1610
    %v1612 = vpop.f32.mrb[0].mxu0
    %v1613 = vadd.f32 0.0, %v1612
    %v1614 = vpop.f32.mrb[0].mxu0
    %v1615 = vadd.f32 0.0, %v1614
    %v1616 = vpop.f32.mrb[0].mxu0
    %v1617 = vadd.f32 0.0, %v1616
    %1618 = vmatprep.mubr.bf16.mxu0 %v1243
    %1619 = vmatmul.mubr.bf16.gmra.mrb[0].mxu0 %v1242
    %v1620 = vpop.f32.mrb[0].mxu0
    %v1621 = vadd.f32 0.0, %v1620
    %v1622 = vpop.f32.mrb[0].mxu0
    %v1623 = vadd.f32 0.0, %v1622
    %v1624 = vpop.f32.mrb[0].mxu0
    %v1625 = vadd.f32 0.0, %v1624
    %v1626 = vpop.f32.mrb[0].mxu0
    %v1627 = vadd.f32 0.0, %v1626
    %1628 = vdwg.mxu0
    %v1629 = vtanh.pop %v1471
    %v1630 = vtanh.pop %v1473
    %v1631 = vtanh.pop %v1475
    %v1632 = vtanh.pop %v1477
    %v1633 = vtanh.pop %v1481
    %v1634 = vtanh.pop %v1483
    %v1635 = vtanh.pop %v1485
    %v1636 = vtanh.pop %v1487
    %v1637 = vtanh.pop %v1491
    %v1638 = vtanh.pop %v1493
    %v1639 = vtanh.pop %v1495
    %v1640 = vtanh.pop %v1497
    %v1641 = vtanh.pop %v1501
    %v1642 = vtanh.pop %v1503
    %v1643 = vtanh.pop %v1505
    %v1644 = vtanh.pop %v1507
    %v1645 = vtanh.pop %v1511
    %v1646 = vtanh.pop %v1513
    %v1647 = vtanh.pop %v1515
    %v1648 = vtanh.pop %v1517
    %v1649 = vtanh.pop %v1521
    %v1650 = vtanh.pop %v1523
    %v1651 = vtanh.pop %v1525
    %v1652 = vtanh.pop %v1527
    %v1653 = vtanh.pop %v1531
    %v1654 = vtanh.pop %v1533
    %v1655 = vtanh.pop %v1535
    %v1656 = vtanh.pop %v1537
    %v1657 = vtanh.pop %v1541
    %v1658 = vtanh.pop %v1543
    %v1659 = vtanh.pop %v1545
    %v1660 = vtanh.pop %v1547
    %v1661 = vtanh.pop %v1551
    %v1662 = vtanh.pop %v1553
    %v1663 = vtanh.pop %v1555
    %v1664 = vtanh.pop %v1557
    %v1665 = vtanh.pop %v1561
    %v1666 = vtanh.pop %v1563
    %v1667 = vtanh.pop %v1565
    %v1668 = vtanh.pop %v1567
    %v1669 = vtanh.pop %v1571
    %v1670 = vtanh.pop %v1573
    %v1671 = vtanh.pop %v1575
    %v1672 = vtanh.pop %v1577
    %v1673 = vtanh.pop %v1581
    %v1674 = vtanh.pop %v1583
    %v1675 = vtanh.pop %v1585
    %v1676 = vtanh.pop %v1587
    %v1677 = vtanh.pop %v1591
    %v1678 = vtanh.pop %v1593
    %v1679 = vtanh.pop %v1595
    %v1680 = vtanh.pop %v1597
    %v1681 = vtanh.pop %v1601
    %v1682 = vtanh.pop %v1603
    %v1683 = vtanh.pop %v1605
    %v1684 = vtanh.pop %v1607
    %v1685 = vtanh.pop %v1611
    %v1686 = vtanh.pop %v1613
    %v1687 = vtanh.pop %v1615
    %v1688 = vtanh.pop %v1617
    %v1689 = vtanh.pop %v1621
    %v1690 = vtanh.pop %v1623
    %v1691 = vtanh.pop %v1625
    %v1692 = vtanh.pop %v1627
    %v1693 = vpack.c.bf16 %v1631, %v1629
    %v1694 = vpack.c.bf16 %v1632, %v1630
    %v1695 = vpack.c.bf16 %v1635, %v1633
    %v1696 = vpack.c.bf16 %v1636, %v1634
    %v1697 = vpack.c.bf16 %v1639, %v1637
    %v1698 = vpack.c.bf16 %v1640, %v1638
    %v1699 = vpack.c.bf16 %v1643, %v1641
    %v1700 = vpack.c.bf16 %v1644, %v1642
    %v1701 = vpack.c.bf16 %v1647, %v1645
    %v1702 = vpack.c.bf16 %v1648, %v1646
    %v1703 = vpack.c.bf16 %v1651, %v1649
    %v1704 = vpack.c.bf16 %v1652, %v1650
    %v1705 = vpack.c.bf16 %v1655, %v1653
    %v1706 = vpack.c.bf16 %v1656, %v1654
    %v1707 = vpack.c.bf16 %v1659, %v1657
    %v1708 = vpack.c.bf16 %v1660, %v1658
    %v1709 = vpack.c.bf16 %v1663, %v1661
    %v1710 = vpack.c.bf16 %v1664, %v1662
    %v1711 = vpack.c.bf16 %v1667, %v1665
    %v1712 = vpack.c.bf16 %v1668, %v1666
    %v1713 = vpack.c.bf16 %v1671, %v1669
    %v1714 = vpack.c.bf16 %v1672, %v1670
    %v1715 = vpack.c.bf16 %v1675, %v1673
    %v1716 = vpack.c.bf16 %v1676, %v1674
    %v1717 = vpack.c.bf16 %v1679, %v1677
    %v1718 = vpack.c.bf16 %v1680, %v1678
    %v1719 = vpack.c.bf16 %v1683, %v1681
    %v1720 = vpack.c.bf16 %v1684, %v1682
    %v1721 = vpack.c.bf16 %v1687, %v1685
    %v1722 = vpack.c.bf16 %v1688, %v1686
    %v1723 = vpack.c.bf16 %v1691, %v1689
    %v1724 = vpack.c.bf16 %v1692, %v1690
    %v1725 = vld [vmem:[#allocation10] sm:$0xf]
    %v1726 = vld [vmem:[#allocation10 + $0x4] sm:$0xf]
    %v1727 = vld [vmem:[#allocation10 + $0x8] sm:$0xf]
    %v1728 = vld [vmem:[#allocation10 + $0xc] sm:$0xf]
    %v1729 = vld [vmem:[#allocation10 + $0x10] sm:$0xf]
    %v1730 = vld [vmem:[#allocation10 + $0x14] sm:$0xf]
    %v1731 = vld [vmem:[#allocation10 + $0x18] sm:$0xf]
    %v1732 = vld [vmem:[#allocation10 + $0x1c] sm:$0xf]
    %v1733 = vld [vmem:[#allocation10 + $0x20] sm:$0xf]
    %v1734 = vld [vmem:[#allocation10 + $0x24] sm:$0xf]
    %v1735 = vld [vmem:[#allocation10 + $0x28] sm:$0xf]
    %v1736 = vld [vmem:[#allocation10 + $0x2c] sm:$0xf]
    %v1737 = vld [vmem:[#allocation10 + $0x30] sm:$0xf]
    %v1738 = vld [vmem:[#allocation10 + $0x34] sm:$0xf]
    %v1739 = vld [vmem:[#allocation10 + $0x38] sm:$0xf]
    %v1740 = vld [vmem:[#allocation10 + $0x3c] sm:$0xf]
    %v1741 = vld [vmem:[#allocation10 + $0x40] sm:$0xf]
    %v1742 = vld [vmem:[#allocation10 + $0x44] sm:$0xf]
    %v1743 = vld [vmem:[#allocation10 + $0x48] sm:$0xf]
    %v1744 = vld [vmem:[#allocation10 + $0x4c] sm:$0xf]
    %v1745 = vld [vmem:[#allocation10 + $0x50] sm:$0xf]
    %v1746 = vld [vmem:[#allocation10 + $0x54] sm:$0xf]
    %v1747 = vld [vmem:[#allocation10 + $0x58] sm:$0xf]
    %v1748 = vld [vmem:[#allocation10 + $0x5c] sm:$0xf]
    %v1749 = vld [vmem:[#allocation10 + $0x60] sm:$0xf]
    %v1750 = vld [vmem:[#allocation10 + $0x64] sm:$0xf]
    %v1751 = vld [vmem:[#allocation10 + $0x68] sm:$0xf]
    %v1752 = vld [vmem:[#allocation10 + $0x6c] sm:$0xf]
    %v1753 = vld [vmem:[#allocation10 + $0x70] sm:$0xf]
    %v1754 = vld [vmem:[#allocation10 + $0x74] sm:$0xf]
    %v1755 = vld [vmem:[#allocation10 + $0x78] sm:$0xf]
    %v1756 = vld [vmem:[#allocation10 + $0x7c] sm:$0xf]
    %v1789 = vunpack.c.l.b16 %v1725
    %v1790 = vunpack.c.l.b16 %v1726
    %v1791 = vunpack.c.l.b16 %v1727
    %v1792 = vunpack.c.l.b16 %v1728
    %v1793 = vunpack.c.l.b16 %v1729
    %v1794 = vunpack.c.l.b16 %v1730
    %v1795 = vunpack.c.l.b16 %v1731
    %v1796 = vunpack.c.l.b16 %v1732
    %v1797 = vunpack.c.l.b16 %v1733
    %v1798 = vunpack.c.l.b16 %v1734
    %v1799 = vunpack.c.l.b16 %v1735
    %v1800 = vunpack.c.l.b16 %v1736
    %v1801 = vunpack.c.l.b16 %v1737
    %v1802 = vunpack.c.l.b16 %v1738
    %v1803 = vunpack.c.l.b16 %v1739
    %v1804 = vunpack.c.l.b16 %v1740
    %v1805 = vunpack.c.l.b16 %v1741
    %v1806 = vunpack.c.l.b16 %v1742
    %v1807 = vunpack.c.l.b16 %v1743
    %v1808 = vunpack.c.l.b16 %v1744
    %v1809 = vunpack.c.l.b16 %v1745
    %v1810 = vunpack.c.l.b16 %v1746
    %v1811 = vunpack.c.l.b16 %v1747
    %v1812 = vunpack.c.l.b16 %v1748
    %v1813 = vunpack.c.l.b16 %v1749
    %v1814 = vunpack.c.l.b16 %v1750
    %v1815 = vunpack.c.l.b16 %v1751
    %v1816 = vunpack.c.l.b16 %v1752
    %v1817 = vunpack.c.l.b16 %v1753
    %v1818 = vunpack.c.l.b16 %v1754
    %v1819 = vunpack.c.l.b16 %v1755
    %v1820 = vunpack.c.l.b16 %v1756
    %v1821 = vpack.c.b16 %v1790, %v1789
    %v1822 = vpack.c.b16 %v1792, %v1791
    %v1823 = vpack.c.b16 %v1794, %v1793
    %v1824 = vpack.c.b16 %v1796, %v1795
    %v1825 = vpack.c.b16 %v1798, %v1797
    %v1826 = vpack.c.b16 %v1800, %v1799
    %v1827 = vpack.c.b16 %v1802, %v1801
    %v1828 = vpack.c.b16 %v1804, %v1803
    %v1829 = vpack.c.b16 %v1806, %v1805
    %v1830 = vpack.c.b16 %v1808, %v1807
    %v1831 = vpack.c.b16 %v1810, %v1809
    %v1832 = vpack.c.b16 %v1812, %v1811
    %v1833 = vpack.c.b16 %v1814, %v1813
    %v1834 = vpack.c.b16 %v1816, %v1815
    %v1835 = vpack.c.b16 %v1818, %v1817
    %v1836 = vpack.c.b16 %v1820, %v1819
    %1853 = vmatprep.subr.bf16.mxu0 0
    %1854 = vmatpush1.bf16.msra.mxu0 %v1821
    %1855 = vmatprep.subr.bf16.mxu0 0
    %1856 = vmatpush1.bf16.msra.mxu0 %v1822
    %1857 = vmatprep.subr.bf16.mxu0 0
    %1858 = vmatpush1.bf16.msra.mxu0 %v1823
    %1859 = vmatprep.subr.bf16.mxu0 0
    %1860 = vmatpush1.bf16.msra.mxu0 %v1824
    %1861 = vmatprep.subr.bf16.mxu0 0
    %1862 = vmatpush1.bf16.msra.mxu0 %v1825
    %1863 = vmatprep.subr.bf16.mxu0 0
    %1864 = vmatpush1.bf16.msra.mxu0 %v1826
    %1865 = vmatprep.subr.bf16.mxu0 0
    %1866 = vmatpush1.bf16.msra.mxu0 %v1827
    %1867 = vmatprep.subr.bf16.mxu0 0
    %1868 = vmatpush1.bf16.msra.mxu0 %v1828
    %1869 = vmatprep.subr.bf16.mxu0 0
    %1870 = vmatpush1.bf16.msra.mxu0 %v1829
    %1871 = vmatprep.subr.bf16.mxu0 0
    %1872 = vmatpush1.bf16.msra.mxu0 %v1830
    %1873 = vmatprep.subr.bf16.mxu0 0
    %1874 = vmatpush1.bf16.msra.mxu0 %v1831
    %1875 = vmatprep.subr.bf16.mxu0 0
    %1876 = vmatpush1.bf16.msra.mxu0 %v1832
    %1877 = vmatprep.subr.bf16.mxu0 0
    %1878 = vmatpush1.bf16.msra.mxu0 %v1833
    %1879 = vmatprep.subr.bf16.mxu0 0
    %1880 = vmatpush1.bf16.msra.mxu0 %v1834
    %1881 = vmatprep.subr.bf16.mxu0 0
    %1882 = vmatpush1.bf16.msra.mxu0 %v1835
    %1883 = vmatprep.subr.bf16.mxu0 0
    %1884 = vmatpush1.bf16.msra.mxu0 %v1836
    %1885 = vmatprep.mubr.bf16.mxu0 %v1694
    %1886 = vmatmul.mubr.bf16.gmra.mrb[0].mxu0 %v1693
    %v1887 = vpop.f32.mrb[0].mxu0
    %v1888 = vadd.f32 0.0, %v1887
    %v1889 = vpop.f32.mrb[0].mxu0
    %v1890 = vpop.f32.mrb[0].mxu0
    %v1891 = vadd.f32 0.0, %v1890
    %v1892 = vpop.f32.mrb[0].mxu0
    %1893 = vmatprep.mubr.bf16.mxu0 %v1696
    %1894 = vmatmul.mubr.bf16.gmra.mrb[0].mxu0 %v1695
    %v1895 = vpop.f32.mrb[0].mxu0
    %v1896 = vadd.f32 0.0, %v1895
    %v1897 = vpop.f32.mrb[0].mxu0
    %v1898 = vpop.f32.mrb[0].mxu0
    %v1899 = vadd.f32 0.0, %v1898
    %v1900 = vpop.f32.mrb[0].mxu0
    %1901 = vmatprep.mubr.bf16.mxu0 %v1698
    %1902 = vmatmul.mubr.bf16.gmra.mrb[0].mxu0 %v1697
    %v1903 = vpop.f32.mrb[0].mxu0
    %v1904 = vadd.f32 0.0, %v1903
    %v1905 = vpop.f32.mrb[0].mxu0
    %v1906 = vpop.f32.mrb[0].mxu0
    %v1907 = vadd.f32 0.0, %v1906
    %v1908 = vpop.f32.mrb[0].mxu0
    %1909 = vmatprep.mubr.bf16.mxu0 %v1700
    %1910 = vmatmul.mubr.bf16.gmra.mrb[0].mxu0 %v1699
    %v1911 = vpop.f32.mrb[0].mxu0
    %v1912 = vadd.f32 0.0, %v1911
    %v1913 = vpop.f32.mrb[0].mxu0
    %v1914 = vpop.f32.mrb[0].mxu0
    %v1915 = vadd.f32 0.0, %v1914
    %v1916 = vpop.f32.mrb[0].mxu0
    %1917 = vmatprep.mubr.bf16.mxu0 %v1702
    %1918 = vmatmul.mubr.bf16.gmra.mrb[0].mxu0 %v1701
    %v1919 = vpop.f32.mrb[0].mxu0
    %v1920 = vadd.f32 0.0, %v1919
    %v1921 = vpop.f32.mrb[0].mxu0
    %v1922 = vpop.f32.mrb[0].mxu0
    %v1923 = vadd.f32 0.0, %v1922
    %v1924 = vpop.f32.mrb[0].mxu0
    %1925 = vmatprep.mubr.bf16.mxu0 %v1704
    %1926 = vmatmul.mubr.bf16.gmra.mrb[0].mxu0 %v1703
    %v1927 = vpop.f32.mrb[0].mxu0
    %v1928 = vadd.f32 0.0, %v1927
    %v1929 = vpop.f32.mrb[0].mxu0
    %v1930 = vpop.f32.mrb[0].mxu0
    %v1931 = vadd.f32 0.0, %v1930
    %v1932 = vpop.f32.mrb[0].mxu0
    %1933 = vmatprep.mubr.bf16.mxu0 %v1706
    %1934 = vmatmul.mubr.bf16.gmra.mrb[0].mxu0 %v1705
    %v1935 = vpop.f32.mrb[0].mxu0
    %v1936 = vadd.f32 0.0, %v1935
    %v1937 = vpop.f32.mrb[0].mxu0
    %v1938 = vpop.f32.mrb[0].mxu0
    %v1939 = vadd.f32 0.0, %v1938
    %v1940 = vpop.f32.mrb[0].mxu0
    %1941 = vmatprep.mubr.bf16.mxu0 %v1708
    %1942 = vmatmul.mubr.bf16.gmra.mrb[0].mxu0 %v1707
    %v1943 = vpop.f32.mrb[0].mxu0
    %v1944 = vadd.f32 0.0, %v1943
    %v1945 = vpop.f32.mrb[0].mxu0
    %v1946 = vpop.f32.mrb[0].mxu0
    %v1947 = vadd.f32 0.0, %v1946
    %v1948 = vpop.f32.mrb[0].mxu0
    %1949 = vmatprep.mubr.bf16.mxu0 %v1710
    %1950 = vmatmul.mubr.bf16.gmra.mrb[0].mxu0 %v1709
    %v1951 = vpop.f32.mrb[0].mxu0
    %v1952 = vadd.f32 0.0, %v1951
    %v1953 = vpop.f32.mrb[0].mxu0
    %v1954 = vpop.f32.mrb[0].mxu0
    %v1955 = vadd.f32 0.0, %v1954
    %v1956 = vpop.f32.mrb[0].mxu0
    %1957 = vmatprep.mubr.bf16.mxu0 %v1712
    %1958 = vmatmul.mubr.bf16.gmra.mrb[0].mxu0 %v1711
    %v1959 = vpop.f32.mrb[0].mxu0
    %v1960 = vadd.f32 0.0, %v1959
    %v1961 = vpop.f32.mrb[0].mxu0
    %v1962 = vpop.f32.mrb[0].mxu0
    %v1963 = vadd.f32 0.0, %v1962
    %v1964 = vpop.f32.mrb[0].mxu0
    %1965 = vmatprep.mubr.bf16.mxu0 %v1714
    %1966 = vmatmul.mubr.bf16.gmra.mrb[0].mxu0 %v1713
    %v1967 = vpop.f32.mrb[0].mxu0
    %v1968 = vadd.f32 0.0, %v1967
    %v1969 = vpop.f32.mrb[0].mxu0
    %v1970 = vpop.f32.mrb[0].mxu0
    %v1971 = vadd.f32 0.0, %v1970
    %v1972 = vpop.f32.mrb[0].mxu0
    %1973 = vmatprep.mubr.bf16.mxu0 %v1716
    %1974 = vmatmul.mubr.bf16.gmra.mrb[0].mxu0 %v1715
    %v1975 = vpop.f32.mrb[0].mxu0
    %v1976 = vadd.f32 0.0, %v1975
    %v1977 = vpop.f32.mrb[0].mxu0
    %v1978 = vpop.f32.mrb[0].mxu0
    %v1979 = vadd.f32 0.0, %v1978
    %v1980 = vpop.f32.mrb[0].mxu0
    %1981 = vmatprep.mubr.bf16.mxu0 %v1718
    %1982 = vmatmul.mubr.bf16.gmra.mrb[0].mxu0 %v1717
    %v1983 = vpop.f32.mrb[0].mxu0
    %v1984 = vadd.f32 0.0, %v1983
    %v1985 = vpop.f32.mrb[0].mxu0
    %v1986 = vpop.f32.mrb[0].mxu0
    %v1987 = vadd.f32 0.0, %v1986
    %v1988 = vpop.f32.mrb[0].mxu0
    %1989 = vmatprep.mubr.bf16.mxu0 %v1720
    %1990 = vmatmul.mubr.bf16.gmra.mrb[0].mxu0 %v1719
    %v1991 = vpop.f32.mrb[0].mxu0
    %v1992 = vadd.f32 0.0, %v1991
    %v1993 = vpop.f32.mrb[0].mxu0
    %v1994 = vpop.f32.mrb[0].mxu0
    %v1995 = vadd.f32 0.0, %v1994
    %v1996 = vpop.f32.mrb[0].mxu0
    %1997 = vmatprep.mubr.bf16.mxu0 %v1722
    %1998 = vmatmul.mubr.bf16.gmra.mrb[0].mxu0 %v1721
    %v1999 = vpop.f32.mrb[0].mxu0
    %v2000 = vadd.f32 0.0, %v1999
    %v2001 = vpop.f32.mrb[0].mxu0
    %v2002 = vpop.f32.mrb[0].mxu0
    %v2003 = vadd.f32 0.0, %v2002
    %v2004 = vpop.f32.mrb[0].mxu0
    %2005 = vmatprep.mubr.bf16.mxu0 %v1724
    %2006 = vmatmul.mubr.bf16.gmra.mrb[0].mxu0 %v1723
    %v2007 = vpop.f32.mrb[0].mxu0
    %v2008 = vadd.f32 0.0, %v2007
    %v2009 = vpop.f32.mrb[0].mxu0
    %v2010 = vpop.f32.mrb[0].mxu0
    %v2011 = vadd.f32 0.0, %v2010
    %v2012 = vpop.f32.mrb[0].mxu0
    %2013 = vdwg.mxu0
    %2014 = vst [vmem:[#allocation11] sm:$0xff] %v1888
    %2015 = vst [vmem:[#allocation11 + $0x8] sm:$0xff] %v1891
    %2016 = vst [vmem:[#allocation11 + $0x10] sm:$0xff] %v1896
    %2017 = vst [vmem:[#allocation11 + $0x18] sm:$0xff] %v1899
    %2018 = vst [vmem:[#allocation11 + $0x20] sm:$0xff] %v1904
    %2019 = vst [vmem:[#allocation11 + $0x28] sm:$0xff] %v1907
    %2020 = vst [vmem:[#allocation11 + $0x30] sm:$0xff] %v1912
    %2021 = vst [vmem:[#allocation11 + $0x38] sm:$0xff] %v1915
    %2022 = vst [vmem:[#allocation11 + $0x40] sm:$0xff] %v1920
    %2023 = vst [vmem:[#allocation11 + $0x48] sm:$0xff] %v1923
    %2024 = vst [vmem:[#allocation11 + $0x50] sm:$0xff] %v1928
    %2025 = vst [vmem:[#allocation11 + $0x58] sm:$0xff] %v1931
    %2026 = vst [vmem:[#allocation11 + $0x60] sm:$0xff] %v1936
    %2027 = vst [vmem:[#allocation11 + $0x68] sm:$0xff] %v1939
    %2028 = vst [vmem:[#allocation11 + $0x70] sm:$0xff] %v1944
    %2029 = vst [vmem:[#allocation11 + $0x78] sm:$0xff] %v1947
    %2030 = vst [vmem:[#allocation11 + $0x80] sm:$0xff] %v1952
    %2031 = vst [vmem:[#allocation11 + $0x88] sm:$0xff] %v1955
    %2032 = vst [vmem:[#allocation11 + $0x90] sm:$0xff] %v1960
    %2033 = vst [vmem:[#allocation11 + $0x98] sm:$0xff] %v1963
    %2034 = vst [vmem:[#allocation11 + $0xa0] sm:$0xff] %v1968
    %2035 = vst [vmem:[#allocation11 + $0xa8] sm:$0xff] %v1971
    %2036 = vst [vmem:[#allocation11 + $0xb0] sm:$0xff] %v1976
    %2037 = vst [vmem:[#allocation11 + $0xb8] sm:$0xff] %v1979
    %2038 = vst [vmem:[#allocation11 + $0xc0] sm:$0xff] %v1984
    %2039 = vst [vmem:[#allocation11 + $0xc8] sm:$0xff] %v1987
    %2040 = vst [vmem:[#allocation11 + $0xd0] sm:$0xff] %v1992
    %2041 = vst [vmem:[#allocation11 + $0xd8] sm:$0xff] %v1995
    %2042 = vst [vmem:[#allocation11 + $0xe0] sm:$0xff] %v2000
    %2043 = vst [vmem:[#allocation11 + $0xe8] sm:$0xff] %v2003
    %2044 = vst [vmem:[#allocation11 + $0xf0] sm:$0xff] %v2008
    %2045 = vst [vmem:[#allocation11 + $0xf8] sm:$0xff] %v2011
    // Predicated region
    $region42: #{tpu_custom_call.1} parent=1 // pred_check
      _
    $region43: #{tpu_custom_call.1} parent=1 // pred_check_branch
      %2047 = sbr.rel (0) target = $region45
    $region44: #{tpu_custom_call.1} parent=1 // pred_region
      %s2049 = ssub.s32 4096, 4096
      %2050 = vsyncadd [#allocation4], %s2049
      %s2051 = sshll.u32 [#allocation11], 4
      %s2052 = int_to_ptr.vmem [resolvable:$true] %s2051
      %2057 = dma.vmem_to_hbm [thread:$0]  %s2052, 4096, %s5, [#allocation4], 128, 128, 8
    $region45: #{tpu_custom_call.1} parent=1 // pred_fallthru
      _
    // Predicated region
    $region46: #{tpu_custom_call.1} parent=1 // pred_check
      _
    $region47: #{tpu_custom_call.1} parent=1 // pred_check_branch
      %2059 = sbr.rel (0) target = $region49
    $region48: #{tpu_custom_call.1} parent=1 // pred_region
      %2060 = dma.done [#allocation4], 4096
    $region49: #{tpu_custom_call.1} parent=1 // pred_fallthru
      _
    %2061 = vsyncpa [#allocation3], 1
    %2062 = vsyncpa [#allocation6], 1
    %2063 = vsyncpa [#allocation9], 1
    %2064 = vsyncpa [#allocation4], 1

// kernel: tpu_custom_call.1
$region0: #{tpu_custom_call.1}
  #allocation0 [shape = 'u32[]', space=smem, size = 0x4, offset = 0x4, fixed_abs, tag = 'smem constant byte address 0x4 - core index']
  #allocation1 [shape = 'u32[144,128]{1,0:T(1,128)}', space=vmem, size = 0x12000, scoped, tag = 'internal scratch']
  %s0 = inlined_call_operand.hbm [shape: bf16[256,256], index: 0, kind: input, shape index: {}]
  %s1 = inlined_call_operand.hbm [shape: bf16[256,256], index: 1, kind: input, shape index: {}]
  %s2 = inlined_call_operand.hbm [shape: bf16[256,256], index: 2, kind: input, shape index: {}]
  %s3 = inlined_call_operand.hbm [shape: bf16[256,256], index: 3, kind: input, shape index: {}]
  %s4 = inlined_call_operand.hbm [shape: bf16[256,128], index: 4, kind: input, shape index: {}]
  %s5 = inlined_call_operand.hbm [shape: f32[256,128], index: 5, kind: output, shape index: {}]
  %s6 = sld [smem:[#allocation0]]
  $region50: #{tpu_custom_call.1} parent=0
    _
  %s8 = ssub.s32 1, %s6
  %s9 = scalar_select 0, %s8, %s6
  $region1: #{tpu_custom_call.1} parent=0
    #allocation2 [shape = 'u8[131072]{0}', space=vmem, size = 0x20000, scoped, tag = 'input window, operand 0, single buffered']
    #allocation3 [shape = 's32[1]{0}', space=sflag, size = 0x4, scoped, tag = 'scoped memory for tpu_custom_call.1']
    #allocation4 [shape = 's32[1]{0}', space=sflag, size = 0x4, scoped, tag = 'scoped memory for tpu_custom_call.1']
    #allocation5 [shape = 'u8[131072]{0}', space=vmem, size = 0x20000, scoped, tag = 'input window, operand 1, single buffered']
    #allocation6 [shape = 's32[1]{0}', space=sflag, size = 0x4, scoped, tag = 'scoped memory for tpu_custom_call.1']
    #allocation7 [shape = 'u8[131072]{0}', space=vmem, size = 0x20000, scoped, tag = 'input window, operand 2, single buffered']
    #allocation8 [shape = 'u8[131072]{0}', space=vmem, size = 0x20000, scoped, tag = 'input window, operand 3, single buffered']
    #allocation9 [shape = 's32[1]{0}', space=sflag, size = 0x4, scoped, tag = 'scoped memory for tpu_custom_call.1']
    #allocation10 [shape = 'u8[65536]{0}', space=vmem, size = 0x10000, scoped, tag = 'input window, operand 4, single buffered']
    #allocation11 [shape = 'u8[131072]{0}', space=vmem, size = 0x20000, scoped, tag = 'output window, operand 0, single buffered']
    %10 = vsyncpa [#allocation3], 0
    %11 = vsyncpa [#allocation6], 0
    %12 = vsyncpa [#allocation9], 0
    %13 = vsyncpa [#allocation4], 0
    // Predicated region
    $region2: #{tpu_custom_call.1} parent=1 // pred_check
      _
    $region3: #{tpu_custom_call.1} parent=1 // pred_check_branch
      %15 = sbr.rel (0) target = $region5
    $region4: #{tpu_custom_call.1} parent=1 // pred_region
      %s17 = ssub.s32 4096, 4096
      %18 = vsyncadd [#allocation3], %s17
      %s19 = sshll.u32 [#allocation2], 4
      %s20 = int_to_ptr.vmem [resolvable:$true] %s19
      %25 = dma.hbm_to_vmem [thread:$0]  %s0, 4096, %s20, [#allocation3], 128, 128, 8
    $region5: #{tpu_custom_call.1} parent=1 // pred_fallthru
      _
    // Predicated region
    $region6: #{tpu_custom_call.1} parent=1 // pred_check
      _
    $region7: #{tpu_custom_call.1} parent=1 // pred_check_branch
      %27 = sbr.rel (0) target = $region9
    $region8: #{tpu_custom_call.1} parent=1 // pred_region
      %s29 = ssub.s32 4096, 4096
      %30 = vsyncadd [#allocation6], %s29
      %s31 = sshll.u32 [#allocation5], 4
      %s32 = int_to_ptr.vmem [resolvable:$true] %s31
      %37 = dma.hbm_to_vmem [thread:$0]  %s1, 4096, %s32, [#allocation6], 128, 128, 8
    $region9: #{tpu_custom_call.1} parent=1 // pred_fallthru
      _
    // Predicated region
    $region10: #{tpu_custom_call.1} parent=1 // pred_check
      _
    $region11: #{tpu_custom_call.1} parent=1 // pred_check_branch
      %39 = sbr.rel (0) target = $region13
    $region12: #{tpu_custom_call.1} parent=1 // pred_region
      %s41 = ssub.s32 4096, 4096
      %42 = vsyncadd [#allocation6], %s41
      %s43 = sshll.u32 [#allocation7], 4
      %s44 = int_to_ptr.vmem [resolvable:$true] %s43
      %49 = dma.hbm_to_vmem [thread:$0]  %s2, 4096, %s44, [#allocation6], 128, 128, 8
    $region13: #{tpu_custom_call.1} parent=1 // pred_fallthru
      _
    // Predicated region
    $region14: #{tpu_custom_call.1} parent=1 // pred_check
      _
    $region15: #{tpu_custom_call.1} parent=1 // pred_check_branch
      %51 = sbr.rel (0) target = $region17
    $region16: #{tpu_custom_call.1} parent=1 // pred_region
      %s53 = ssub.s32 4096, 4096
      %54 = vsyncadd [#allocation9], %s53
      %s55 = sshll.u32 [#allocation8], 4
      %s56 = int_to_ptr.vmem [resolvable:$true] %s55
      %61 = dma.hbm_to_vmem [thread:$0]  %s3, 4096, %s56, [#allocation9], 128, 128, 8
    $region17: #{tpu_custom_call.1} parent=1 // pred_fallthru
      _
    // Predicated region
    $region18: #{tpu_custom_call.1} parent=1 // pred_check
      _
    $region19: #{tpu_custom_call.1} parent=1 // pred_check_branch
      %63 = sbr.rel (0) target = $region21
    $region20: #{tpu_custom_call.1} parent=1 // pred_region
      %s65 = ssub.s32 2048, 2048
      %66 = vsyncadd [#allocation9], %s65
      %s67 = sshll.u32 [#allocation10], 4
      %s68 = int_to_ptr.vmem [resolvable:$true] %s67
      %73 = dma.hbm_to_vmem [thread:$0]  %s4, 2048, %s68, [#allocation9], 64, 64, 4
    $region21: #{tpu_custom_call.1} parent=1 // pred_fallthru
      _
    // Predicated region
    $region22: #{tpu_custom_call.1} parent=1 // pred_check
      _
    $region23: #{tpu_custom_call.1} parent=1 // pred_check_branch
      %75 = sbr.rel (0) target = $region25
    $region24: #{tpu_custom_call.1} parent=1 // pred_region
      %76 = dma.done [#allocation3], 4096
    $region25: #{tpu_custom_call.1} parent=1 // pred_fallthru
      _
    // Predicated region
    $region26: #{tpu_custom_call.1} parent=1 // pred_check
      _
    $region27: #{tpu_custom_call.1} parent=1 // pred_check_branch
      %78 = sbr.rel (0) target = $region29
    $region28: #{tpu_custom_call.1} parent=1 // pred_region
      %79 = dma.done [#allocation6], 4096
    $region29: #{tpu_custom_call.1} parent=1 // pred_fallthru
      _
    // Predicated region
    $region30: #{tpu_custom_call.1} parent=1 // pred_check
      _
    $region31: #{tpu_custom_call.1} parent=1 // pred_check_branch
      %81 = sbr.rel (0) target = $region33
    $region32: #{tpu_custom_call.1} parent=1 // pred_region
      %82 = dma.done [#allocation6], 4096
    $region33: #{tpu_custom_call.1} parent=1 // pred_fallthru
      _
    // Predicated region
    $region34: #{tpu_custom_call.1} parent=1 // pred_check
      _
    $region35: #{tpu_custom_call.1} parent=1 // pred_check_branch
      %84 = sbr.rel (0) target = $region37
    $region36: #{tpu_custom_call.1} parent=1 // pred_region
      %85 = dma.done [#allocation9], 4096
    $region37: #{tpu_custom_call.1} parent=1 // pred_fallthru
      _
    // Predicated region
    $region38: #{tpu_custom_call.1} parent=1 // pred_check
      _
    $region39: #{tpu_custom_call.1} parent=1 // pred_check_branch
      %87 = sbr.rel (0) target = $region41
    $region40: #{tpu_custom_call.1} parent=1 // pred_region
      %88 = dma.done [#allocation9], 2048
    $region41: #{tpu_custom_call.1} parent=1 // pred_fallthru
      _
    %v90 = vld [vmem:[#allocation2] sm:$0xff]
    %v91 = vld [vmem:[#allocation2 + $0x8] sm:$0xff]
    %v92 = vld [vmem:[#allocation2 + $0x10] sm:$0xff]
    %v93 = vld [vmem:[#allocation2 + $0x18] sm:$0xff]
    %v94 = vld [vmem:[#allocation2 + $0x20] sm:$0xff]
    %v95 = vld [vmem:[#allocation2 + $0x28] sm:$0xff]
    %v96 = vld [vmem:[#allocation2 + $0x30] sm:$0xff]
    %v97 = vld [vmem:[#allocation2 + $0x38] sm:$0xff]
    %v98 = vld [vmem:[#allocation2 + $0x40] sm:$0xff]
    %v99 = vld [vmem:[#allocation2 + $0x48] sm:$0xff]
    %v100 = vld [vmem:[#allocation2 + $0x50] sm:$0xff]
    %v101 = vld [vmem:[#allocation2 + $0x58] sm:$0xff]
    %v102 = vld [vmem:[#allocation2 + $0x60] sm:$0xff]
    %v103 = vld [vmem:[#allocation2 + $0x68] sm:$0xff]
    %v104 = vld [vmem:[#allocation2 + $0x70] sm:$0xff]
    %v105 = vld [vmem:[#allocation2 + $0x78] sm:$0xff]
    %v106 = vld [vmem:[#allocation2 + $0x80] sm:$0xff]
    %v107 = vld [vmem:[#allocation2 + $0x88] sm:$0xff]
    %v108 = vld [vmem:[#allocation2 + $0x90] sm:$0xff]
    %v109 = vld [vmem:[#allocation2 + $0x98] sm:$0xff]
    %v110 = vld [vmem:[#allocation2 + $0xa0] sm:$0xff]
    %v111 = vld [vmem:[#allocation2 + $0xa8] sm:$0xff]
    %v112 = vld [vmem:[#allocation2 + $0xb0] sm:$0xff]
    %v113 = vld [vmem:[#allocation2 + $0xb8] sm:$0xff]
    %v114 = vld [vmem:[#allocation2 + $0xc0] sm:$0xff]
    %v115 = vld [vmem:[#allocation2 + $0xc8] sm:$0xff]
    %v116 = vld [vmem:[#allocation2 + $0xd0] sm:$0xff]
    %v117 = vld [vmem:[#allocation2 + $0xd8] sm:$0xff]
    %v118 = vld [vmem:[#allocation2 + $0xe0] sm:$0xff]
    %v119 = vld [vmem:[#allocation2 + $0xe8] sm:$0xff]
    %v120 = vld [vmem:[#allocation2 + $0xf0] sm:$0xff]
    %v121 = vld [vmem:[#allocation2 + $0xf8] sm:$0xff]
    %v122 = vld [vmem:[#allocation5] sm:$0xff]
    %v123 = vld [vmem:[#allocation5 + $0x8] sm:$0xff]
    %v124 = vld [vmem:[#allocation5 + $0x10] sm:$0xff]
    %v125 = vld [vmem:[#allocation5 + $0x18] sm:$0xff]
    %v126 = vld [vmem:[#allocation5 + $0x20] sm:$0xff]
    %v127 = vld [vmem:[#allocation5 + $0x28] sm:$0xff]
    %v128 = vld [vmem:[#allocation5 + $0x30] sm:$0xff]
    %v129 = vld [vmem:[#allocation5 + $0x38] sm:$0xff]
    %v130 = vld [vmem:[#allocation5 + $0x40] sm:$0xff]
    %v131 = vld [vmem:[#allocation5 + $0x48] sm:$0xff]
    %v132 = vld [vmem:[#allocation5 + $0x50] sm:$0xff]
    %v133 = vld [vmem:[#allocation5 + $0x58] sm:$0xff]
    %v134 = vld [vmem:[#allocation5 + $0x60] sm:$0xff]
    %v135 = vld [vmem:[#allocation5 + $0x68] sm:$0xff]
    %v136 = vld [vmem:[#allocation5 + $0x70] sm:$0xff]
    %v137 = vld [vmem:[#allocation5 + $0x78] sm:$0xff]
    %v138 = vld [vmem:[#allocation5 + $0x80] sm:$0xff]
    %v139 = vld [vmem:[#allocation5 + $0x88] sm:$0xff]
    %v140 = vld [vmem:[#allocation5 + $0x90] sm:$0xff]
    %v141 = vld [vmem:[#allocation5 + $0x98] sm:$0xff]
    %v142 = vld [vmem:[#allocation5 + $0xa0] sm:$0xff]
    %v143 = vld [vmem:[#allocation5 + $0xa8] sm:$0xff]
    %v144 = vld [vmem:[#allocation5 + $0xb0] sm:$0xff]
    %v145 = vld [vmem:[#allocation5 + $0xb8] sm:$0xff]
    %v146 = vld [vmem:[#allocation5 + $0xc0] sm:$0xff]
    %v147 = vld [vmem:[#allocation5 + $0xc8] sm:$0xff]
    %v148 = vld [vmem:[#allocation5 + $0xd0] sm:$0xff]
    %v149 = vld [vmem:[#allocation5 + $0xd8] sm:$0xff]
    %v150 = vld [vmem:[#allocation5 + $0xe0] sm:$0xff]
    %v151 = vld [vmem:[#allocation5 + $0xe8] sm:$0xff]
    %v152 = vld [vmem:[#allocation5 + $0xf0] sm:$0xff]
    %v153 = vld [vmem:[#allocation5 + $0xf8] sm:$0xff]
    %v186 = vunpack.c.l.b16 %v90
    %v187 = vunpack.c.h.b16 %v90
    %v188 = vunpack.c.l.b16 %v91
    %v189 = vunpack.c.h.b16 %v91
    %v190 = vunpack.c.l.b16 %v92
    %v191 = vunpack.c.h.b16 %v92
    %v192 = vunpack.c.l.b16 %v93
    %v193 = vunpack.c.h.b16 %v93
    %v194 = vunpack.c.l.b16 %v94
    %v195 = vunpack.c.h.b16 %v94
    %v196 = vunpack.c.l.b16 %v95
    %v197 = vunpack.c.h.b16 %v95
    %v198 = vunpack.c.l.b16 %v96
    %v199 = vunpack.c.h.b16 %v96
    %v200 = vunpack.c.l.b16 %v97
    %v201 = vunpack.c.h.b16 %v97
    %v202 = vunpack.c.l.b16 %v98
    %v203 = vunpack.c.h.b16 %v98
    %v204 = vunpack.c.l.b16 %v99
    %v205 = vunpack.c.h.b16 %v99
    %v206 = vunpack.c.l.b16 %v100
    %v207 = vunpack.c.h.b16 %v100
    %v208 = vunpack.c.l.b16 %v101
    %v209 = vunpack.c.h.b16 %v101
    %v210 = vunpack.c.l.b16 %v102
    %v211 = vunpack.c.h.b16 %v102
    %v212 = vunpack.c.l.b16 %v103
    %v213 = vunpack.c.h.b16 %v103
    %v214 = vunpack.c.l.b16 %v104
    %v215 = vunpack.c.h.b16 %v104
    %v216 = vunpack.c.l.b16 %v105
    %v217 = vunpack.c.h.b16 %v105
    %v218 = vunpack.c.l.b16 %v106
    %v219 = vunpack.c.h.b16 %v106
    %v220 = vunpack.c.l.b16 %v107
    %v221 = vunpack.c.h.b16 %v107
    %v222 = vunpack.c.l.b16 %v108
    %v223 = vunpack.c.h.b16 %v108
    %v224 = vunpack.c.l.b16 %v109
    %v225 = vunpack.c.h.b16 %v109
    %v226 = vunpack.c.l.b16 %v110
    %v227 = vunpack.c.h.b16 %v110
    %v228 = vunpack.c.l.b16 %v111
    %v229 = vunpack.c.h.b16 %v111
    %v230 = vunpack.c.l.b16 %v112
    %v231 = vunpack.c.h.b16 %v112
    %v232 = vunpack.c.l.b16 %v113
    %v233 = vunpack.c.h.b16 %v113
    %v234 = vunpack.c.l.b16 %v114
    %v235 = vunpack.c.h.b16 %v114
    %v236 = vunpack.c.l.b16 %v115
    %v237 = vunpack.c.h.b16 %v115
    %v238 = vunpack.c.l.b16 %v116
    %v239 = vunpack.c.h.b16 %v116
    %v240 = vunpack.c.l.b16 %v117
    %v241 = vunpack.c.h.b16 %v117
    %v242 = vunpack.c.l.b16 %v118
    %v243 = vunpack.c.h.b16 %v118
    %v244 = vunpack.c.l.b16 %v119
    %v245 = vunpack.c.h.b16 %v119
    %v246 = vunpack.c.l.b16 %v120
    %v247 = vunpack.c.h.b16 %v120
    %v248 = vunpack.c.l.b16 %v121
    %v249 = vunpack.c.h.b16 %v121
    %v250 = vpack.c.b16 %v188, %v186
    %v251 = vpack.c.b16 %v189, %v187
    %v252 = vpack.c.b16 %v192, %v190
    %v253 = vpack.c.b16 %v193, %v191
    %v254 = vpack.c.b16 %v196, %v194
    %v255 = vpack.c.b16 %v197, %v195
    %v256 = vpack.c.b16 %v200, %v198
    %v257 = vpack.c.b16 %v201, %v199
    %v258 = vpack.c.b16 %v204, %v202
    %v259 = vpack.c.b16 %v205, %v203
    %v260 = vpack.c.b16 %v208, %v206
    %v261 = vpack.c.b16 %v209, %v207
    %v262 = vpack.c.b16 %v212, %v210
    %v263 = vpack.c.b16 %v213, %v211
    %v264 = vpack.c.b16 %v216, %v214
    %v265 = vpack.c.b16 %v217, %v215
    %v266 = vpack.c.b16 %v220, %v218
    %v267 = vpack.c.b16 %v221, %v219
    %v268 = vpack.c.b16 %v224, %v222
    %v269 = vpack.c.b16 %v225, %v223
    %v270 = vpack.c.b16 %v228, %v226
    %v271 = vpack.c.b16 %v229, %v227
    %v272 = vpack.c.b16 %v232, %v230
    %v273 = vpack.c.b16 %v233, %v231
    %v274 = vpack.c.b16 %v236, %v234
    %v275 = vpack.c.b16 %v237, %v235
    %v276 = vpack.c.b16 %v240, %v238
    %v277 = vpack.c.b16 %v241, %v239
    %v278 = vpack.c.b16 %v244, %v242
    %v279 = vpack.c.b16 %v245, %v243
    %v280 = vpack.c.b16 %v248, %v246
    %v281 = vpack.c.b16 %v249, %v247
    %v346 = vunpack.c.l.b16 %v122
    %v347 = vunpack.c.h.b16 %v122
    %v348 = vunpack.c.l.b16 %v123
    %v349 = vunpack.c.h.b16 %v123
    %v350 = vunpack.c.l.b16 %v124
    %v351 = vunpack.c.h.b16 %v124
    %v352 = vunpack.c.l.b16 %v125
    %v353 = vunpack.c.h.b16 %v125
    %v354 = vunpack.c.l.b16 %v126
    %v355 = vunpack.c.h.b16 %v126
    %v356 = vunpack.c.l.b16 %v127
    %v357 = vunpack.c.h.b16 %v127
    %v358 = vunpack.c.l.b16 %v128
    %v359 = vunpack.c.h.b16 %v128
    %v360 = vunpack.c.l.b16 %v129
    %v361 = vunpack.c.h.b16 %v129
    %v362 = vunpack.c.l.b16 %v130
    %v363 = vunpack.c.h.b16 %v130
    %v364 = vunpack.c.l.b16 %v131
    %v365 = vunpack.c.h.b16 %v131
    %v366 = vunpack.c.l.b16 %v132
    %v367 = vunpack.c.h.b16 %v132
    %v368 = vunpack.c.l.b16 %v133
    %v369 = vunpack.c.h.b16 %v133
    %v370 = vunpack.c.l.b16 %v134
    %v371 = vunpack.c.h.b16 %v134
    %v372 = vunpack.c.l.b16 %v135
    %v373 = vunpack.c.h.b16 %v135
    %v374 = vunpack.c.l.b16 %v136
    %v375 = vunpack.c.h.b16 %v136
    %v376 = vunpack.c.l.b16 %v137
    %v377 = vunpack.c.h.b16 %v137
    %v378 = vunpack.c.l.b16 %v138
    %v379 = vunpack.c.h.b16 %v138
    %v380 = vunpack.c.l.b16 %v139
    %v381 = vunpack.c.h.b16 %v139
    %v382 = vunpack.c.l.b16 %v140
    %v383 = vunpack.c.h.b16 %v140
    %v384 = vunpack.c.l.b16 %v141
    %v385 = vunpack.c.h.b16 %v141
    %v386 = vunpack.c.l.b16 %v142
    %v387 = vunpack.c.h.b16 %v142
    %v388 = vunpack.c.l.b16 %v143
    %v389 = vunpack.c.h.b16 %v143
    %v390 = vunpack.c.l.b16 %v144
    %v391 = vunpack.c.h.b16 %v144
    %v392 = vunpack.c.l.b16 %v145
    %v393 = vunpack.c.h.b16 %v145
    %v394 = vunpack.c.l.b16 %v146
    %v395 = vunpack.c.h.b16 %v146
    %v396 = vunpack.c.l.b16 %v147
    %v397 = vunpack.c.h.b16 %v147
    %v398 = vunpack.c.l.b16 %v148
    %v399 = vunpack.c.h.b16 %v148
    %v400 = vunpack.c.l.b16 %v149
    %v401 = vunpack.c.h.b16 %v149
    %v402 = vunpack.c.l.b16 %v150
    %v403 = vunpack.c.h.b16 %v150
    %v404 = vunpack.c.l.b16 %v151
    %v405 = vunpack.c.h.b16 %v151
    %v406 = vunpack.c.l.b16 %v152
    %v407 = vunpack.c.h.b16 %v152
    %v408 = vunpack.c.l.b16 %v153
    %v409 = vunpack.c.h.b16 %v153
    %v410 = vpack.c.b16 %v348, %v346
    %v411 = vpack.c.b16 %v349, %v347
    %v412 = vpack.c.b16 %v352, %v350
    %v413 = vpack.c.b16 %v353, %v351
    %v414 = vpack.c.b16 %v356, %v354
    %v415 = vpack.c.b16 %v357, %v355
    %v416 = vpack.c.b16 %v360, %v358
    %v417 = vpack.c.b16 %v361, %v359
    %v418 = vpack.c.b16 %v364, %v362
    %v419 = vpack.c.b16 %v365, %v363
    %v420 = vpack.c.b16 %v368, %v366
    %v421 = vpack.c.b16 %v369, %v367
    %v422 = vpack.c.b16 %v372, %v370
    %v423 = vpack.c.b16 %v373, %v371
    %v424 = vpack.c.b16 %v376, %v374
    %v425 = vpack.c.b16 %v377, %v375
    %v426 = vpack.c.b16 %v380, %v378
    %v427 = vpack.c.b16 %v381, %v379
    %v428 = vpack.c.b16 %v384, %v382
    %v429 = vpack.c.b16 %v385, %v383
    %v430 = vpack.c.b16 %v388, %v386
    %v431 = vpack.c.b16 %v389, %v387
    %v432 = vpack.c.b16 %v392, %v390
    %v433 = vpack.c.b16 %v393, %v391
    %v434 = vpack.c.b16 %v396, %v394
    %v435 = vpack.c.b16 %v397, %v395
    %v436 = vpack.c.b16 %v400, %v398
    %v437 = vpack.c.b16 %v401, %v399
    %v438 = vpack.c.b16 %v404, %v402
    %v439 = vpack.c.b16 %v405, %v403
    %v440 = vpack.c.b16 %v408, %v406
    %v441 = vpack.c.b16 %v409, %v407
    %474 = vmatprep.subr.bf16.mxu0 %v411
    %475 = vmatpush1.bf16.msra.mxu0 %v410
    %476 = vmatprep.subr.bf16.mxu0 %v413
    %477 = vmatpush1.bf16.msra.mxu0 %v412
    %478 = vmatprep.subr.bf16.mxu0 %v415
    %479 = vmatpush1.bf16.msra.mxu0 %v414
    %480 = vmatprep.subr.bf16.mxu0 %v417
    %481 = vmatpush1.bf16.msra.mxu0 %v416
    %482 = vmatprep.subr.bf16.mxu0 %v419
    %483 = vmatpush1.bf16.msra.mxu0 %v418
    %484 = vmatprep.subr.bf16.mxu0 %v421
    %485 = vmatpush1.bf16.msra.mxu0 %v420
    %486 = vmatprep.subr.bf16.mxu0 %v423
    %487 = vmatpush1.bf16.msra.mxu0 %v422
    %488 = vmatprep.subr.bf16.mxu0 %v425
    %489 = vmatpush1.bf16.msra.mxu0 %v424
    %490 = vmatprep.subr.bf16.mxu0 %v427
    %491 = vmatpush1.bf16.msra.mxu0 %v426
    %492 = vmatprep.subr.bf16.mxu0 %v429
    %493 = vmatpush1.bf16.msra.mxu0 %v428
    %494 = vmatprep.subr.bf16.mxu0 %v431
    %495 = vmatpush1.bf16.msra.mxu0 %v430
    %496 = vmatprep.subr.bf16.mxu0 %v433
    %497 = vmatpush1.bf16.msra.mxu0 %v432
    %498 = vmatprep.subr.bf16.mxu0 %v435
    %499 = vmatpush1.bf16.msra.mxu0 %v434
    %500 = vmatprep.subr.bf16.mxu0 %v437
    %501 = vmatpush1.bf16.msra.mxu0 %v436
    %502 = vmatprep.subr.bf16.mxu0 %v439
    %503 = vmatpush1.bf16.msra.mxu0 %v438
    %504 = vmatprep.subr.bf16.mxu0 %v441
    %505 = vmatpush1.bf16.msra.mxu0 %v440
    %506 = vmatprep.mubr.bf16.mxu0 %v251
    %507 = vmatmul.mubr.bf16.gmra.mrb[0].mxu0 %v250
    %v508 = vpop.f32.mrb[0].mxu0
    %v509 = vadd.f32 0.0, %v508
    %v510 = vpop.f32.mrb[0].mxu0
    %v511 = vadd.f32 0.0, %v510
    %v512 = vpop.f32.mrb[0].mxu0
    %v513 = vadd.f32 0.0, %v512
    %v514 = vpop.f32.mrb[0].mxu0
    %v515 = vadd.f32 0.0, %v514
    %516 = vmatprep.mubr.bf16.mxu0 %v253
    %517 = vmatmul.mubr.bf16.gmra.mrb[0].mxu0 %v252
    %v518 = vpop.f32.mrb[0].mxu0
    %v519 = vadd.f32 0.0, %v518
    %v520 = vpop.f32.mrb[0].mxu0
    %v521 = vadd.f32 0.0, %v520
    %v522 = vpop.f32.mrb[0].mxu0
    %v523 = vadd.f32 0.0, %v522
    %v524 = vpop.f32.mrb[0].mxu0
    %v525 = vadd.f32 0.0, %v524
    %526 = vmatprep.mubr.bf16.mxu0 %v255
    %527 = vmatmul.mubr.bf16.gmra.mrb[0].mxu0 %v254
    %v528 = vpop.f32.mrb[0].mxu0
    %v529 = vadd.f32 0.0, %v528
    %v530 = vpop.f32.mrb[0].mxu0
    %v531 = vadd.f32 0.0, %v530
    %v532 = vpop.f32.mrb[0].mxu0
    %v533 = vadd.f32 0.0, %v532
    %v534 = vpop.f32.mrb[0].mxu0
    %v535 = vadd.f32 0.0, %v534
    %536 = vmatprep.mubr.bf16.mxu0 %v257
    %537 = vmatmul.mubr.bf16.gmra.mrb[0].mxu0 %v256
    %v538 = vpop.f32.mrb[0].mxu0
    %v539 = vadd.f32 0.0, %v538
    %v540 = vpop.f32.mrb[0].mxu0
    %v541 = vadd.f32 0.0, %v540
    %v542 = vpop.f32.mrb[0].mxu0
    %v543 = vadd.f32 0.0, %v542
    %v544 = vpop.f32.mrb[0].mxu0
    %v545 = vadd.f32 0.0, %v544
    %546 = vmatprep.mubr.bf16.mxu0 %v259
    %547 = vmatmul.mubr.bf16.gmra.mrb[0].mxu0 %v258
    %v548 = vpop.f32.mrb[0].mxu0
    %v549 = vadd.f32 0.0, %v548
    %v550 = vpop.f32.mrb[0].mxu0
    %v551 = vadd.f32 0.0, %v550
    %v552 = vpop.f32.mrb[0].mxu0
    %v553 = vadd.f32 0.0, %v552
    %v554 = vpop.f32.mrb[0].mxu0
    %v555 = vadd.f32 0.0, %v554
    %556 = vmatprep.mubr.bf16.mxu0 %v261
    %557 = vmatmul.mubr.bf16.gmra.mrb[0].mxu0 %v260
    %v558 = vpop.f32.mrb[0].mxu0
    %v559 = vadd.f32 0.0, %v558
    %v560 = vpop.f32.mrb[0].mxu0
    %v561 = vadd.f32 0.0, %v560
    %v562 = vpop.f32.mrb[0].mxu0
    %v563 = vadd.f32 0.0, %v562
    %v564 = vpop.f32.mrb[0].mxu0
    %v565 = vadd.f32 0.0, %v564
    %566 = vmatprep.mubr.bf16.mxu0 %v263
    %567 = vmatmul.mubr.bf16.gmra.mrb[0].mxu0 %v262
    %v568 = vpop.f32.mrb[0].mxu0
    %v569 = vadd.f32 0.0, %v568
    %v570 = vpop.f32.mrb[0].mxu0
    %v571 = vadd.f32 0.0, %v570
    %v572 = vpop.f32.mrb[0].mxu0
    %v573 = vadd.f32 0.0, %v572
    %v574 = vpop.f32.mrb[0].mxu0
    %v575 = vadd.f32 0.0, %v574
    %576 = vmatprep.mubr.bf16.mxu0 %v265
    %577 = vmatmul.mubr.bf16.gmra.mrb[0].mxu0 %v264
    %v578 = vpop.f32.mrb[0].mxu0
    %v579 = vadd.f32 0.0, %v578
    %v580 = vpop.f32.mrb[0].mxu0
    %v581 = vadd.f32 0.0, %v580
    %v582 = vpop.f32.mrb[0].mxu0
    %v583 = vadd.f32 0.0, %v582
    %v584 = vpop.f32.mrb[0].mxu0
    %v585 = vadd.f32 0.0, %v584
    %586 = vmatprep.mubr.bf16.mxu0 %v267
    %587 = vmatmul.mubr.bf16.gmra.mrb[0].mxu0 %v266
    %v588 = vpop.f32.mrb[0].mxu0
    %v589 = vadd.f32 0.0, %v588
    %v590 = vpop.f32.mrb[0].mxu0
    %v591 = vadd.f32 0.0, %v590
    %v592 = vpop.f32.mrb[0].mxu0
    %v593 = vadd.f32 0.0, %v592
    %v594 = vpop.f32.mrb[0].mxu0
    %v595 = vadd.f32 0.0, %v594
    %596 = vmatprep.mubr.bf16.mxu0 %v269
    %597 = vmatmul.mubr.bf16.gmra.mrb[0].mxu0 %v268
    %v598 = vpop.f32.mrb[0].mxu0
    %v599 = vadd.f32 0.0, %v598
    %v600 = vpop.f32.mrb[0].mxu0
    %v601 = vadd.f32 0.0, %v600
    %v602 = vpop.f32.mrb[0].mxu0
    %v603 = vadd.f32 0.0, %v602
    %v604 = vpop.f32.mrb[0].mxu0
    %v605 = vadd.f32 0.0, %v604
    %606 = vmatprep.mubr.bf16.mxu0 %v271
    %607 = vmatmul.mubr.bf16.gmra.mrb[0].mxu0 %v270
    %v608 = vpop.f32.mrb[0].mxu0
    %v609 = vadd.f32 0.0, %v608
    %v610 = vpop.f32.mrb[0].mxu0
    %v611 = vadd.f32 0.0, %v610
    %v612 = vpop.f32.mrb[0].mxu0
    %v613 = vadd.f32 0.0, %v612
    %v614 = vpop.f32.mrb[0].mxu0
    %v615 = vadd.f32 0.0, %v614
    %616 = vmatprep.mubr.bf16.mxu0 %v273
    %617 = vmatmul.mubr.bf16.gmra.mrb[0].mxu0 %v272
    %v618 = vpop.f32.mrb[0].mxu0
    %v619 = vadd.f32 0.0, %v618
    %v620 = vpop.f32.mrb[0].mxu0
    %v621 = vadd.f32 0.0, %v620
    %v622 = vpop.f32.mrb[0].mxu0
    %v623 = vadd.f32 0.0, %v622
    %v624 = vpop.f32.mrb[0].mxu0
    %v625 = vadd.f32 0.0, %v624
    %626 = vmatprep.mubr.bf16.mxu0 %v275
    %627 = vmatmul.mubr.bf16.gmra.mrb[0].mxu0 %v274
    %v628 = vpop.f32.mrb[0].mxu0
    %v629 = vadd.f32 0.0, %v628
    %v630 = vpop.f32.mrb[0].mxu0
    %v631 = vadd.f32 0.0, %v630
    %v632 = vpop.f32.mrb[0].mxu0
    %v633 = vadd.f32 0.0, %v632
    %v634 = vpop.f32.mrb[0].mxu0
    %v635 = vadd.f32 0.0, %v634
    %636 = vmatprep.mubr.bf16.mxu0 %v277
    %637 = vmatmul.mubr.bf16.gmra.mrb[0].mxu0 %v276
    %v638 = vpop.f32.mrb[0].mxu0
    %v639 = vadd.f32 0.0, %v638
    %v640 = vpop.f32.mrb[0].mxu0
    %v641 = vadd.f32 0.0, %v640
    %v642 = vpop.f32.mrb[0].mxu0
    %v643 = vadd.f32 0.0, %v642
    %v644 = vpop.f32.mrb[0].mxu0
    %v645 = vadd.f32 0.0, %v644
    %646 = vmatprep.mubr.bf16.mxu0 %v279
    %647 = vmatmul.mubr.bf16.gmra.mrb[0].mxu0 %v278
    %v648 = vpop.f32.mrb[0].mxu0
    %v649 = vadd.f32 0.0, %v648
    %v650 = vpop.f32.mrb[0].mxu0
    %v651 = vadd.f32 0.0, %v650
    %v652 = vpop.f32.mrb[0].mxu0
    %v653 = vadd.f32 0.0, %v652
    %v654 = vpop.f32.mrb[0].mxu0
    %v655 = vadd.f32 0.0, %v654
    %656 = vmatprep.mubr.bf16.mxu0 %v281
    %657 = vmatmul.mubr.bf16.gmra.mrb[0].mxu0 %v280
    %v658 = vpop.f32.mrb[0].mxu0
    %v659 = vadd.f32 0.0, %v658
    %v660 = vpop.f32.mrb[0].mxu0
    %v661 = vadd.f32 0.0, %v660
    %v662 = vpop.f32.mrb[0].mxu0
    %v663 = vadd.f32 0.0, %v662
    %v664 = vpop.f32.mrb[0].mxu0
    %v665 = vadd.f32 0.0, %v664
    %666 = vdwg.mxu0
    %v667 = vtanh.pop %v509
    %v668 = vtanh.pop %v511
    %v669 = vtanh.pop %v513
    %v670 = vtanh.pop %v515
    %v671 = vtanh.pop %v519
    %v672 = vtanh.pop %v521
    %v673 = vtanh.pop %v523
    %v674 = vtanh.pop %v525
    %v675 = vtanh.pop %v529
    %v676 = vtanh.pop %v531
    %v677 = vtanh.pop %v533
    %v678 = vtanh.pop %v535
    %v679 = vtanh.pop %v539
    %v680 = vtanh.pop %v541
    %v681 = vtanh.pop %v543
    %v682 = vtanh.pop %v545
    %v683 = vtanh.pop %v549
    %v684 = vtanh.pop %v551
    %v685 = vtanh.pop %v553
    %v686 = vtanh.pop %v555
    %v687 = vtanh.pop %v559
    %v688 = vtanh.pop %v561
    %v689 = vtanh.pop %v563
    %v690 = vtanh.pop %v565
    %v691 = vtanh.pop %v569
    %v692 = vtanh.pop %v571
    %v693 = vtanh.pop %v573
    %v694 = vtanh.pop %v575
    %v695 = vtanh.pop %v579
    %v696 = vtanh.pop %v581
    %v697 = vtanh.pop %v583
    %v698 = vtanh.pop %v585
    %v699 = vtanh.pop %v589
    %v700 = vtanh.pop %v591
    %v701 = vtanh.pop %v593
    %v702 = vtanh.pop %v595
    %v703 = vtanh.pop %v599
    %v704 = vtanh.pop %v601
    %v705 = vtanh.pop %v603
    %v706 = vtanh.pop %v605
    %v707 = vtanh.pop %v609
    %v708 = vtanh.pop %v611
    %v709 = vtanh.pop %v613
    %v710 = vtanh.pop %v615
    %v711 = vtanh.pop %v619
    %v712 = vtanh.pop %v621
    %v713 = vtanh.pop %v623
    %v714 = vtanh.pop %v625
    %v715 = vtanh.pop %v629
    %v716 = vtanh.pop %v631
    %v717 = vtanh.pop %v633
    %v718 = vtanh.pop %v635
    %v719 = vtanh.pop %v639
    %v720 = vtanh.pop %v641
    %v721 = vtanh.pop %v643
    %v722 = vtanh.pop %v645
    %v723 = vtanh.pop %v649
    %v724 = vtanh.pop %v651
    %v725 = vtanh.pop %v653
    %v726 = vtanh.pop %v655
    %v727 = vtanh.pop %v659
    %v728 = vtanh.pop %v661
    %v729 = vtanh.pop %v663
    %v730 = vtanh.pop %v665
    %v731 = vpack.c.bf16 %v669, %v667
    %v732 = vpack.c.bf16 %v670, %v668
    %v733 = vpack.c.bf16 %v673, %v671
    %v734 = vpack.c.bf16 %v674, %v672
    %v735 = vpack.c.bf16 %v677, %v675
    %v736 = vpack.c.bf16 %v678, %v676
    %v737 = vpack.c.bf16 %v681, %v679
    %v738 = vpack.c.bf16 %v682, %v680
    %v739 = vpack.c.bf16 %v685, %v683
    %v740 = vpack.c.bf16 %v686, %v684
    %v741 = vpack.c.bf16 %v689, %v687
    %v742 = vpack.c.bf16 %v690, %v688
    %v743 = vpack.c.bf16 %v693, %v691
    %v744 = vpack.c.bf16 %v694, %v692
    %v745 = vpack.c.bf16 %v697, %v695
    %v746 = vpack.c.bf16 %v698, %v696
    %v747 = vpack.c.bf16 %v701, %v699
    %v748 = vpack.c.bf16 %v702, %v700
    %v749 = vpack.c.bf16 %v705, %v703
    %v750 = vpack.c.bf16 %v706, %v704
    %v751 = vpack.c.bf16 %v709, %v707
    %v752 = vpack.c.bf16 %v710, %v708
    %v753 = vpack.c.bf16 %v713, %v711
    %v754 = vpack.c.bf16 %v714, %v712
    %v755 = vpack.c.bf16 %v717, %v715
    %v756 = vpack.c.bf16 %v718, %v716
    %v757 = vpack.c.bf16 %v721, %v719
    %v758 = vpack.c.bf16 %v722, %v720
    %v759 = vpack.c.bf16 %v725, %v723
    %v760 = vpack.c.bf16 %v726, %v724
    %v761 = vpack.c.bf16 %v729, %v727
    %v762 = vpack.c.bf16 %v730, %v728
    %v763 = vld [vmem:[#allocation7] sm:$0xff]
    %v764 = vld [vmem:[#allocation7 + $0x8] sm:$0xff]
    %v765 = vld [vmem:[#allocation7 + $0x10] sm:$0xff]
    %v766 = vld [vmem:[#allocation7 + $0x18] sm:$0xff]
    %v767 = vld [vmem:[#allocation7 + $0x20] sm:$0xff]
    %v768 = vld [vmem:[#allocation7 + $0x28] sm:$0xff]
    %v769 = vld [vmem:[#allocation7 + $0x30] sm:$0xff]
    %v770 = vld [vmem:[#allocation7 + $0x38] sm:$0xff]
    %v771 = vld [vmem:[#allocation7 + $0x40] sm:$0xff]
    %v772 = vld [vmem:[#allocation7 + $0x48] sm:$0xff]
    %v773 = vld [vmem:[#allocation7 + $0x50] sm:$0xff]
    %v774 = vld [vmem:[#allocation7 + $0x58] sm:$0xff]
    %v775 = vld [vmem:[#allocation7 + $0x60] sm:$0xff]
    %v776 = vld [vmem:[#allocation7 + $0x68] sm:$0xff]
    %v777 = vld [vmem:[#allocation7 + $0x70] sm:$0xff]
    %v778 = vld [vmem:[#allocation7 + $0x78] sm:$0xff]
    %v779 = vld [vmem:[#allocation7 + $0x80] sm:$0xff]
    %v780 = vld [vmem:[#allocation7 + $0x88] sm:$0xff]
    %v781 = vld [vmem:[#allocation7 + $0x90] sm:$0xff]
    %v782 = vld [vmem:[#allocation7 + $0x98] sm:$0xff]
    %v783 = vld [vmem:[#allocation7 + $0xa0] sm:$0xff]
    %v784 = vld [vmem:[#allocation7 + $0xa8] sm:$0xff]
    %v785 = vld [vmem:[#allocation7 + $0xb0] sm:$0xff]
    %v786 = vld [vmem:[#allocation7 + $0xb8] sm:$0xff]
    %v787 = vld [vmem:[#allocation7 + $0xc0] sm:$0xff]
    %v788 = vld [vmem:[#allocation7 + $0xc8] sm:$0xff]
    %v789 = vld [vmem:[#allocation7 + $0xd0] sm:$0xff]
    %v790 = vld [vmem:[#allocation7 + $0xd8] sm:$0xff]
    %v791 = vld [vmem:[#allocation7 + $0xe0] sm:$0xff]
    %v792 = vld [vmem:[#allocation7 + $0xe8] sm:$0xff]
    %v793 = vld [vmem:[#allocation7 + $0xf0] sm:$0xff]
    %v794 = vld [vmem:[#allocation7 + $0xf8] sm:$0xff]
    %v827 = vunpack.c.l.b16 %v763
    %v828 = vunpack.c.h.b16 %v763
    %v829 = vunpack.c.l.b16 %v764
    %v830 = vunpack.c.h.b16 %v764
    %v831 = vunpack.c.l.b16 %v765
    %v832 = vunpack.c.h.b16 %v765
    %v833 = vunpack.c.l.b16 %v766
    %v834 = vunpack.c.h.b16 %v766
    %v835 = vunpack.c.l.b16 %v767
    %v836 = vunpack.c.h.b16 %v767
    %v837 = vunpack.c.l.b16 %v768
    %v838 = vunpack.c.h.b16 %v768
    %v839 = vunpack.c.l.b16 %v769
    %v840 = vunpack.c.h.b16 %v769
    %v841 = vunpack.c.l.b16 %v770
    %v842 = vunpack.c.h.b16 %v770
    %v843 = vunpack.c.l.b16 %v771
    %v844 = vunpack.c.h.b16 %v771
    %v845 = vunpack.c.l.b16 %v772
    %v846 = vunpack.c.h.b16 %v772
    %v847 = vunpack.c.l.b16 %v773
    %v848 = vunpack.c.h.b16 %v773
    %v849 = vunpack.c.l.b16 %v774
    %v850 = vunpack.c.h.b16 %v774
    %v851 = vunpack.c.l.b16 %v775
    %v852 = vunpack.c.h.b16 %v775
    %v853 = vunpack.c.l.b16 %v776
    %v854 = vunpack.c.h.b16 %v776
    %v855 = vunpack.c.l.b16 %v777
    %v856 = vunpack.c.h.b16 %v777
    %v857 = vunpack.c.l.b16 %v778
    %v858 = vunpack.c.h.b16 %v778
    %v859 = vunpack.c.l.b16 %v779
    %v860 = vunpack.c.h.b16 %v779
    %v861 = vunpack.c.l.b16 %v780
    %v862 = vunpack.c.h.b16 %v780
    %v863 = vunpack.c.l.b16 %v781
    %v864 = vunpack.c.h.b16 %v781
    %v865 = vunpack.c.l.b16 %v782
    %v866 = vunpack.c.h.b16 %v782
    %v867 = vunpack.c.l.b16 %v783
    %v868 = vunpack.c.h.b16 %v783
    %v869 = vunpack.c.l.b16 %v784
    %v870 = vunpack.c.h.b16 %v784
    %v871 = vunpack.c.l.b16 %v785
    %v872 = vunpack.c.h.b16 %v785
    %v873 = vunpack.c.l.b16 %v786
    %v874 = vunpack.c.h.b16 %v786
    %v875 = vunpack.c.l.b16 %v787
    %v876 = vunpack.c.h.b16 %v787
    %v877 = vunpack.c.l.b16 %v788
    %v878 = vunpack.c.h.b16 %v788
    %v879 = vunpack.c.l.b16 %v789
    %v880 = vunpack.c.h.b16 %v789
    %v881 = vunpack.c.l.b16 %v790
    %v882 = vunpack.c.h.b16 %v790
    %v883 = vunpack.c.l.b16 %v791
    %v884 = vunpack.c.h.b16 %v791
    %v885 = vunpack.c.l.b16 %v792
    %v886 = vunpack.c.h.b16 %v792
    %v887 = vunpack.c.l.b16 %v793
    %v888 = vunpack.c.h.b16 %v793
    %v889 = vunpack.c.l.b16 %v794
    %v890 = vunpack.c.h.b16 %v794
    %v891 = vpack.c.b16 %v829, %v827
    %v892 = vpack.c.b16 %v830, %v828
    %v893 = vpack.c.b16 %v833, %v831
    %v894 = vpack.c.b16 %v834, %v832
    %v895 = vpack.c.b16 %v837, %v835
    %v896 = vpack.c.b16 %v838, %v836
    %v897 = vpack.c.b16 %v841, %v839
    %v898 = vpack.c.b16 %v842, %v840
    %v899 = vpack.c.b16 %v845, %v843
    %v900 = vpack.c.b16 %v846, %v844
    %v901 = vpack.c.b16 %v849, %v847
    %v902 = vpack.c.b16 %v850, %v848
    %v903 = vpack.c.b16 %v853, %v851
    %v904 = vpack.c.b16 %v854, %v852
    %v905 = vpack.c.b16 %v857, %v855
    %v906 = vpack.c.b16 %v858, %v856
    %v907 = vpack.c.b16 %v861, %v859
    %v908 = vpack.c.b16 %v862, %v860
    %v909 = vpack.c.b16 %v865, %v863
    %v910 = vpack.c.b16 %v866, %v864
    %v911 = vpack.c.b16 %v869, %v867
    %v912 = vpack.c.b16 %v870, %v868
    %v913 = vpack.c.b16 %v873, %v871
    %v914 = vpack.c.b16 %v874, %v872
    %v915 = vpack.c.b16 %v877, %v875
    %v916 = vpack.c.b16 %v878, %v876
    %v917 = vpack.c.b16 %v881, %v879
    %v918 = vpack.c.b16 %v882, %v880
    %v919 = vpack.c.b16 %v885, %v883
    %v920 = vpack.c.b16 %v886, %v884
    %v921 = vpack.c.b16 %v889, %v887
    %v922 = vpack.c.b16 %v890, %v888
    %955 = vmatprep.subr.bf16.mxu0 %v892
    %956 = vmatpush1.bf16.msra.mxu0 %v891
    %957 = vmatprep.subr.bf16.mxu0 %v894
    %958 = vmatpush1.bf16.msra.mxu0 %v893
    %959 = vmatprep.subr.bf16.mxu0 %v896
    %960 = vmatpush1.bf16.msra.mxu0 %v895
    %961 = vmatprep.subr.bf16.mxu0 %v898
    %962 = vmatpush1.bf16.msra.mxu0 %v897
    %963 = vmatprep.subr.bf16.mxu0 %v900
    %964 = vmatpush1.bf16.msra.mxu0 %v899
    %965 = vmatprep.subr.bf16.mxu0 %v902
    %966 = vmatpush1.bf16.msra.mxu0 %v901
    %967 = vmatprep.subr.bf16.mxu0 %v904
    %968 = vmatpush1.bf16.msra.mxu0 %v903
    %969 = vmatprep.subr.bf16.mxu0 %v906
    %970 = vmatpush1.bf16.msra.mxu0 %v905
    %971 = vmatprep.subr.bf16.mxu0 %v908
    %972 = vmatpush1.bf16.msra.mxu0 %v907
    %973 = vmatprep.subr.bf16.mxu0 %v910
    %974 = vmatpush1.bf16.msra.mxu0 %v909
    %975 = vmatprep.subr.bf16.mxu0 %v912
    %976 = vmatpush1.bf16.msra.mxu0 %v911
    %977 = vmatprep.subr.bf16.mxu0 %v914
    %978 = vmatpush1.bf16.msra.mxu0 %v913
    %979 = vmatprep.subr.bf16.mxu0 %v916
    %980 = vmatpush1.bf16.msra.mxu0 %v915
    %981 = vmatprep.subr.bf16.mxu0 %v918
    %982 = vmatpush1.bf16.msra.mxu0 %v917
    %983 = vmatprep.subr.bf16.mxu0 %v920
    %984 = vmatpush1.bf16.msra.mxu0 %v919
    %985 = vmatprep.subr.bf16.mxu0 %v922
    %986 = vmatpush1.bf16.msra.mxu0 %v921
    %987 = vmatprep.mubr.bf16.mxu0 %v732
    %988 = vmatmul.mubr.bf16.gmra.mrb[0].mxu0 %v731
    %v989 = vpop.f32.mrb[0].mxu0
    %v990 = vadd.f32 0.0, %v989
    %v991 = vpop.f32.mrb[0].mxu0
    %v992 = vadd.f32 0.0, %v991
    %v993 = vpop.f32.mrb[0].mxu0
    %v994 = vadd.f32 0.0, %v993
    %v995 = vpop.f32.mrb[0].mxu0
    %v996 = vadd.f32 0.0, %v995
    %997 = vmatprep.mubr.bf16.mxu0 %v734
    %998 = vmatmul.mubr.bf16.gmra.mrb[0].mxu0 %v733
    %v999 = vpop.f32.mrb[0].mxu0
    %v1000 = vadd.f32 0.0, %v999
    %v1001 = vpop.f32.mrb[0].mxu0
    %v1002 = vadd.f32 0.0, %v1001
    %v1003 = vpop.f32.mrb[0].mxu0
    %v1004 = vadd.f32 0.0, %v1003
    %v1005 = vpop.f32.mrb[0].mxu0
    %v1006 = vadd.f32 0.0, %v1005
    %1007 = vmatprep.mubr.bf16.mxu0 %v736
    %1008 = vmatmul.mubr.bf16.gmra.mrb[0].mxu0 %v735
    %v1009 = vpop.f32.mrb[0].mxu0
    %v1010 = vadd.f32 0.0, %v1009
    %v1011 = vpop.f32.mrb[0].mxu0
    %v1012 = vadd.f32 0.0, %v1011
    %v1013 = vpop.f32.mrb[0].mxu0
    %v1014 = vadd.f32 0.0, %v1013
    %v1015 = vpop.f32.mrb[0].mxu0
    %v1016 = vadd.f32 0.0, %v1015
    %1017 = vmatprep.mubr.bf16.mxu0 %v738
    %1018 = vmatmul.mubr.bf16.gmra.mrb[0].mxu0 %v737
    %v1019 = vpop.f32.mrb[0].mxu0
    %v1020 = vadd.f32 0.0, %v1019
    %v1021 = vpop.f32.mrb[0].mxu0
    %v1022 = vadd.f32 0.0, %v1021
    %v1023 = vpop.f32.mrb[0].mxu0
    %v1024 = vadd.f32 0.0, %v1023
    %v1025 = vpop.f32.mrb[0].mxu0
    %v1026 = vadd.f32 0.0, %v1025
    %1027 = vmatprep.mubr.bf16.mxu0 %v740
    %1028 = vmatmul.mubr.bf16.gmra.mrb[0].mxu0 %v739
    %v1029 = vpop.f32.mrb[0].mxu0
    %v1030 = vadd.f32 0.0, %v1029
    %v1031 = vpop.f32.mrb[0].mxu0
    %v1032 = vadd.f32 0.0, %v1031
    %v1033 = vpop.f32.mrb[0].mxu0
    %v1034 = vadd.f32 0.0, %v1033
    %v1035 = vpop.f32.mrb[0].mxu0
    %v1036 = vadd.f32 0.0, %v1035
    %1037 = vmatprep.mubr.bf16.mxu0 %v742
    %1038 = vmatmul.mubr.bf16.gmra.mrb[0].mxu0 %v741
    %v1039 = vpop.f32.mrb[0].mxu0
    %v1040 = vadd.f32 0.0, %v1039
    %v1041 = vpop.f32.mrb[0].mxu0
    %v1042 = vadd.f32 0.0, %v1041
    %v1043 = vpop.f32.mrb[0].mxu0
    %v1044 = vadd.f32 0.0, %v1043
    %v1045 = vpop.f32.mrb[0].mxu0
    %v1046 = vadd.f32 0.0, %v1045
    %1047 = vmatprep.mubr.bf16.mxu0 %v744
    %1048 = vmatmul.mubr.bf16.gmra.mrb[0].mxu0 %v743
    %v1049 = vpop.f32.mrb[0].mxu0
    %v1050 = vadd.f32 0.0, %v1049
    %v1051 = vpop.f32.mrb[0].mxu0
    %v1052 = vadd.f32 0.0, %v1051
    %v1053 = vpop.f32.mrb[0].mxu0
    %v1054 = vadd.f32 0.0, %v1053
    %v1055 = vpop.f32.mrb[0].mxu0
    %v1056 = vadd.f32 0.0, %v1055
    %1057 = vmatprep.mubr.bf16.mxu0 %v746
    %1058 = vmatmul.mubr.bf16.gmra.mrb[0].mxu0 %v745
    %v1059 = vpop.f32.mrb[0].mxu0
    %v1060 = vadd.f32 0.0, %v1059
    %v1061 = vpop.f32.mrb[0].mxu0
    %v1062 = vadd.f32 0.0, %v1061
    %v1063 = vpop.f32.mrb[0].mxu0
    %v1064 = vadd.f32 0.0, %v1063
    %v1065 = vpop.f32.mrb[0].mxu0
    %v1066 = vadd.f32 0.0, %v1065
    %1067 = vmatprep.mubr.bf16.mxu0 %v748
    %1068 = vmatmul.mubr.bf16.gmra.mrb[0].mxu0 %v747
    %v1069 = vpop.f32.mrb[0].mxu0
    %v1070 = vadd.f32 0.0, %v1069
    %v1071 = vpop.f32.mrb[0].mxu0
    %v1072 = vadd.f32 0.0, %v1071
    %v1073 = vpop.f32.mrb[0].mxu0
    %v1074 = vadd.f32 0.0, %v1073
    %v1075 = vpop.f32.mrb[0].mxu0
    %v1076 = vadd.f32 0.0, %v1075
    %1077 = vmatprep.mubr.bf16.mxu0 %v750
    %1078 = vmatmul.mubr.bf16.gmra.mrb[0].mxu0 %v749
    %v1079 = vpop.f32.mrb[0].mxu0
    %v1080 = vadd.f32 0.0, %v1079
    %v1081 = vpop.f32.mrb[0].mxu0
    %v1082 = vadd.f32 0.0, %v1081
    %v1083 = vpop.f32.mrb[0].mxu0
    %v1084 = vadd.f32 0.0, %v1083
    %v1085 = vpop.f32.mrb[0].mxu0
    %v1086 = vadd.f32 0.0, %v1085
    %1087 = vmatprep.mubr.bf16.mxu0 %v752
    %1088 = vmatmul.mubr.bf16.gmra.mrb[0].mxu0 %v751
    %v1089 = vpop.f32.mrb[0].mxu0
    %v1090 = vadd.f32 0.0, %v1089
    %v1091 = vpop.f32.mrb[0].mxu0
    %v1092 = vadd.f32 0.0, %v1091
    %v1093 = vpop.f32.mrb[0].mxu0
    %v1094 = vadd.f32 0.0, %v1093
    %v1095 = vpop.f32.mrb[0].mxu0
    %v1096 = vadd.f32 0.0, %v1095
    %1097 = vmatprep.mubr.bf16.mxu0 %v754
    %1098 = vmatmul.mubr.bf16.gmra.mrb[0].mxu0 %v753
    %v1099 = vpop.f32.mrb[0].mxu0
    %v1100 = vadd.f32 0.0, %v1099
    %v1101 = vpop.f32.mrb[0].mxu0
    %v1102 = vadd.f32 0.0, %v1101
    %v1103 = vpop.f32.mrb[0].mxu0
    %v1104 = vadd.f32 0.0, %v1103
    %v1105 = vpop.f32.mrb[0].mxu0
    %v1106 = vadd.f32 0.0, %v1105
    %1107 = vmatprep.mubr.bf16.mxu0 %v756
    %1108 = vmatmul.mubr.bf16.gmra.mrb[0].mxu0 %v755
    %v1109 = vpop.f32.mrb[0].mxu0
    %v1110 = vadd.f32 0.0, %v1109
    %v1111 = vpop.f32.mrb[0].mxu0
    %v1112 = vadd.f32 0.0, %v1111
    %v1113 = vpop.f32.mrb[0].mxu0
    %v1114 = vadd.f32 0.0, %v1113
    %v1115 = vpop.f32.mrb[0].mxu0
    %v1116 = vadd.f32 0.0, %v1115
    %1117 = vmatprep.mubr.bf16.mxu0 %v758
    %1118 = vmatmul.mubr.bf16.gmra.mrb[0].mxu0 %v757
    %v1119 = vpop.f32.mrb[0].mxu0
    %v1120 = vadd.f32 0.0, %v1119
    %v1121 = vpop.f32.mrb[0].mxu0
    %v1122 = vadd.f32 0.0, %v1121
    %v1123 = vpop.f32.mrb[0].mxu0
    %v1124 = vadd.f32 0.0, %v1123
    %v1125 = vpop.f32.mrb[0].mxu0
    %v1126 = vadd.f32 0.0, %v1125
    %1127 = vmatprep.mubr.bf16.mxu0 %v760
    %1128 = vmatmul.mubr.bf16.gmra.mrb[0].mxu0 %v759
    %v1129 = vpop.f32.mrb[0].mxu0
    %v1130 = vadd.f32 0.0, %v1129
    %v1131 = vpop.f32.mrb[0].mxu0
    %v1132 = vadd.f32 0.0, %v1131
    %v1133 = vpop.f32.mrb[0].mxu0
    %v1134 = vadd.f32 0.0, %v1133
    %v1135 = vpop.f32.mrb[0].mxu0
    %v1136 = vadd.f32 0.0, %v1135
    %1137 = vmatprep.mubr.bf16.mxu0 %v762
    %1138 = vmatmul.mubr.bf16.gmra.mrb[0].mxu0 %v761
    %v1139 = vpop.f32.mrb[0].mxu0
    %v1140 = vadd.f32 0.0, %v1139
    %v1141 = vpop.f32.mrb[0].mxu0
    %v1142 = vadd.f32 0.0, %v1141
    %v1143 = vpop.f32.mrb[0].mxu0
    %v1144 = vadd.f32 0.0, %v1143
    %v1145 = vpop.f32.mrb[0].mxu0
    %v1146 = vadd.f32 0.0, %v1145
    %1147 = vdwg.mxu0
    %v1148 = vtanh.pop %v990
    %v1149 = vtanh.pop %v992
    %v1150 = vtanh.pop %v994
    %v1151 = vtanh.pop %v996
    %v1152 = vtanh.pop %v1000
    %v1153 = vtanh.pop %v1002
    %v1154 = vtanh.pop %v1004
    %v1155 = vtanh.pop %v1006
    %v1156 = vtanh.pop %v1010
    %v1157 = vtanh.pop %v1012
    %v1158 = vtanh.pop %v1014
    %v1159 = vtanh.pop %v1016
    %v1160 = vtanh.pop %v1020
    %v1161 = vtanh.pop %v1022
    %v1162 = vtanh.pop %v1024
    %v1163 = vtanh.pop %v1026
    %v1164 = vtanh.pop %v1030
    %v1165 = vtanh.pop %v1032
    %v1166 = vtanh.pop %v1034
    %v1167 = vtanh.pop %v1036
    %v1168 = vtanh.pop %v1040
    %v1169 = vtanh.pop %v1042
    %v1170 = vtanh.pop %v1044
    %v1171 = vtanh.pop %v1046
    %v1172 = vtanh.pop %v1050
    %v1173 = vtanh.pop %v1052
    %v1174 = vtanh.pop %v1054
    %v1175 = vtanh.pop %v1056
    %v1176 = vtanh.pop %v1060
    %v1177 = vtanh.pop %v1062
    %v1178 = vtanh.pop %v1064
    %v1179 = vtanh.pop %v1066
    %v1180 = vtanh.pop %v1070
    %v1181 = vtanh.pop %v1072
    %v1182 = vtanh.pop %v1074
    %v1183 = vtanh.pop %v1076
    %v1184 = vtanh.pop %v1080
    %v1185 = vtanh.pop %v1082
    %v1186 = vtanh.pop %v1084
    %v1187 = vtanh.pop %v1086
    %v1188 = vtanh.pop %v1090
    %v1189 = vtanh.pop %v1092
    %v1190 = vtanh.pop %v1094
    %v1191 = vtanh.pop %v1096
    %v1192 = vtanh.pop %v1100
    %v1193 = vtanh.pop %v1102
    %v1194 = vtanh.pop %v1104
    %v1195 = vtanh.pop %v1106
    %v1196 = vtanh.pop %v1110
    %v1197 = vtanh.pop %v1112
    %v1198 = vtanh.pop %v1114
    %v1199 = vtanh.pop %v1116
    %v1200 = vtanh.pop %v1120
    %v1201 = vtanh.pop %v1122
    %v1202 = vtanh.pop %v1124
    %v1203 = vtanh.pop %v1126
    %v1204 = vtanh.pop %v1130
    %v1205 = vtanh.pop %v1132
    %v1206 = vtanh.pop %v1134
    %v1207 = vtanh.pop %v1136
    %v1208 = vtanh.pop %v1140
    %v1209 = vtanh.pop %v1142
    %v1210 = vtanh.pop %v1144
    %v1211 = vtanh.pop %v1146
    %v1212 = vpack.c.bf16 %v1150, %v1148
    %v1213 = vpack.c.bf16 %v1151, %v1149
    %v1214 = vpack.c.bf16 %v1154, %v1152
    %v1215 = vpack.c.bf16 %v1155, %v1153
    %v1216 = vpack.c.bf16 %v1158, %v1156
    %v1217 = vpack.c.bf16 %v1159, %v1157
    %v1218 = vpack.c.bf16 %v1162, %v1160
    %v1219 = vpack.c.bf16 %v1163, %v1161
    %v1220 = vpack.c.bf16 %v1166, %v1164
    %v1221 = vpack.c.bf16 %v1167, %v1165
    %v1222 = vpack.c.bf16 %v1170, %v1168
    %v1223 = vpack.c.bf16 %v1171, %v1169
    %v1224 = vpack.c.bf16 %v1174, %v1172
    %v1225 = vpack.c.bf16 %v1175, %v1173
    %v1226 = vpack.c.bf16 %v1178, %v1176
    %v1227 = vpack.c.bf16 %v1179, %v1177
    %v1228 = vpack.c.bf16 %v1182, %v1180
    %v1229 = vpack.c.bf16 %v1183, %v1181
    %v1230 = vpack.c.bf16 %v1186, %v1184
    %v1231 = vpack.c.bf16 %v1187, %v1185
    %v1232 = vpack.c.bf16 %v1190, %v1188
    %v1233 = vpack.c.bf16 %v1191, %v1189
    %v1234 = vpack.c.bf16 %v1194, %v1192
    %v1235 = vpack.c.bf16 %v1195, %v1193
    %v1236 = vpack.c.bf16 %v1198, %v1196
    %v1237 = vpack.c.bf16 %v1199, %v1197
    %v1238 = vpack.c.bf16 %v1202, %v1200
    %v1239 = vpack.c.bf16 %v1203, %v1201
    %v1240 = vpack.c.bf16 %v1206, %v1204
    %v1241 = vpack.c.bf16 %v1207, %v1205
    %v1242 = vpack.c.bf16 %v1210, %v1208
    %v1243 = vpack.c.bf16 %v1211, %v1209
    %v1244 = vld [vmem:[#allocation8] sm:$0xff]
    %v1245 = vld [vmem:[#allocation8 + $0x8] sm:$0xff]
    %v1246 = vld [vmem:[#allocation8 + $0x10] sm:$0xff]
    %v1247 = vld [vmem:[#allocation8 + $0x18] sm:$0xff]
    %v1248 = vld [vmem:[#allocation8 + $0x20] sm:$0xff]
    %v1249 = vld [vmem:[#allocation8 + $0x28] sm:$0xff]
    %v1250 = vld [vmem:[#allocation8 + $0x30] sm:$0xff]
    %v1251 = vld [vmem:[#allocation8 + $0x38] sm:$0xff]
    %v1252 = vld [vmem:[#allocation8 + $0x40] sm:$0xff]
    %v1253 = vld [vmem:[#allocation8 + $0x48] sm:$0xff]
    %v1254 = vld [vmem:[#allocation8 + $0x50] sm:$0xff]
    %v1255 = vld [vmem:[#allocation8 + $0x58] sm:$0xff]
    %v1256 = vld [vmem:[#allocation8 + $0x60] sm:$0xff]
    %v1257 = vld [vmem:[#allocation8 + $0x68] sm:$0xff]
    %v1258 = vld [vmem:[#allocation8 + $0x70] sm:$0xff]
    %v1259 = vld [vmem:[#allocation8 + $0x78] sm:$0xff]
    %v1260 = vld [vmem:[#allocation8 + $0x80] sm:$0xff]
    %v1261 = vld [vmem:[#allocation8 + $0x88] sm:$0xff]
    %v1262 = vld [vmem:[#allocation8 + $0x90] sm:$0xff]
    %v1263 = vld [vmem:[#allocation8 + $0x98] sm:$0xff]
    %v1264 = vld [vmem:[#allocation8 + $0xa0] sm:$0xff]
    %v1265 = vld [vmem:[#allocation8 + $0xa8] sm:$0xff]
    %v1266 = vld [vmem:[#allocation8 + $0xb0] sm:$0xff]
    %v1267 = vld [vmem:[#allocation8 + $0xb8] sm:$0xff]
    %v1268 = vld [vmem:[#allocation8 + $0xc0] sm:$0xff]
    %v1269 = vld [vmem:[#allocation8 + $0xc8] sm:$0xff]
    %v1270 = vld [vmem:[#allocation8 + $0xd0] sm:$0xff]
    %v1271 = vld [vmem:[#allocation8 + $0xd8] sm:$0xff]
    %v1272 = vld [vmem:[#allocation8 + $0xe0] sm:$0xff]
    %v1273 = vld [vmem:[#allocation8 + $0xe8] sm:$0xff]
    %v1274 = vld [vmem:[#allocation8 + $0xf0] sm:$0xff]
    %v1275 = vld [vmem:[#allocation8 + $0xf8] sm:$0xff]
    %v1308 = vunpack.c.l.b16 %v1244
    %v1309 = vunpack.c.h.b16 %v1244
    %v1310 = vunpack.c.l.b16 %v1245
    %v1311 = vunpack.c.h.b16 %v1245
    %v1312 = vunpack.c.l.b16 %v1246
    %v1313 = vunpack.c.h.b16 %v1246
    %v1314 = vunpack.c.l.b16 %v1247
    %v1315 = vunpack.c.h.b16 %v1247
    %v1316 = vunpack.c.l.b16 %v1248
    %v1317 = vunpack.c.h.b16 %v1248
    %v1318 = vunpack.c.l.b16 %v1249
    %v1319 = vunpack.c.h.b16 %v1249
    %v1320 = vunpack.c.l.b16 %v1250
    %v1321 = vunpack.c.h.b16 %v1250
    %v1322 = vunpack.c.l.b16 %v1251
    %v1323 = vunpack.c.h.b16 %v1251
    %v1324 = vunpack.c.l.b16 %v1252
    %v1325 = vunpack.c.h.b16 %v1252
    %v1326 = vunpack.c.l.b16 %v1253
    %v1327 = vunpack.c.h.b16 %v1253
    %v1328 = vunpack.c.l.b16 %v1254
    %v1329 = vunpack.c.h.b16 %v1254
    %v1330 = vunpack.c.l.b16 %v1255
    %v1331 = vunpack.c.h.b16 %v1255
    %v1332 = vunpack.c.l.b16 %v1256
    %v1333 = vunpack.c.h.b16 %v1256
    %v1334 = vunpack.c.l.b16 %v1257
    %v1335 = vunpack.c.h.b16 %v1257
    %v1336 = vunpack.c.l.b16 %v1258
    %v1337 = vunpack.c.h.b16 %v1258
    %v1338 = vunpack.c.l.b16 %v1259
    %v1339 = vunpack.c.h.b16 %v1259
    %v1340 = vunpack.c.l.b16 %v1260
    %v1341 = vunpack.c.h.b16 %v1260
    %v1342 = vunpack.c.l.b16 %v1261
    %v1343 = vunpack.c.h.b16 %v1261
    %v1344 = vunpack.c.l.b16 %v1262
    %v1345 = vunpack.c.h.b16 %v1262
    %v1346 = vunpack.c.l.b16 %v1263
    %v1347 = vunpack.c.h.b16 %v1263
    %v1348 = vunpack.c.l.b16 %v1264
    %v1349 = vunpack.c.h.b16 %v1264
    %v1350 = vunpack.c.l.b16 %v1265
    %v1351 = vunpack.c.h.b16 %v1265
    %v1352 = vunpack.c.l.b16 %v1266
    %v1353 = vunpack.c.h.b16 %v1266
    %v1354 = vunpack.c.l.b16 %v1267
    %v1355 = vunpack.c.h.b16 %v1267
    %v1356 = vunpack.c.l.b16 %v1268
    %v1357 = vunpack.c.h.b16 %v1268
    %v1358 = vunpack.c.l.b16 %v1269
    %v1359 = vunpack.c.h.b16 %v1269
    %v1360 = vunpack.c.l.b16 %v1270
    %v1361 = vunpack.c.h.b16 %v1270
    %v1362 = vunpack.c.l.b16 %v1271
    %v1363 = vunpack.c.h.b16 %v1271
    %v1364 = vunpack.c.l.b16 %v1272
    %v1365 = vunpack.c.h.b16 %v1272
    %v1366 = vunpack.c.l.b16 %v1273
    %v1367 = vunpack.c.h.b16 %v1273
    %v1368 = vunpack.c.l.b16 %v1274
    %v1369 = vunpack.c.h.b16 %v1274
    %v1370 = vunpack.c.l.b16 %v1275
    %v1371 = vunpack.c.h.b16 %v1275
    %v1372 = vpack.c.b16 %v1310, %v1308
    %v1373 = vpack.c.b16 %v1311, %v1309
    %v1374 = vpack.c.b16 %v1314, %v1312
    %v1375 = vpack.c.b16 %v1315, %v1313
    %v1376 = vpack.c.b16 %v1318, %v1316
    %v1377 = vpack.c.b16 %v1319, %v1317
    %v1378 = vpack.c.b16 %v1322, %v1320
    %v1379 = vpack.c.b16 %v1323, %v1321
    %v1380 = vpack.c.b16 %v1326, %v1324
    %v1381 = vpack.c.b16 %v1327, %v1325
    %v1382 = vpack.c.b16 %v1330, %v1328
    %v1383 = vpack.c.b16 %v1331, %v1329
    %v1384 = vpack.c.b16 %v1334, %v1332
    %v1385 = vpack.c.b16 %v1335, %v1333
    %v1386 = vpack.c.b16 %v1338, %v1336
    %v1387 = vpack.c.b16 %v1339, %v1337
    %v1388 = vpack.c.b16 %v1342, %v1340
    %v1389 = vpack.c.b16 %v1343, %v1341
    %v1390 = vpack.c.b16 %v1346, %v1344
    %v1391 = vpack.c.b16 %v1347, %v1345
    %v1392 = vpack.c.b16 %v1350, %v1348
    %v1393 = vpack.c.b16 %v1351, %v1349
    %v1394 = vpack.c.b16 %v1354, %v1352
    %v1395 = vpack.c.b16 %v1355, %v1353
    %v1396 = vpack.c.b16 %v1358, %v1356
    %v1397 = vpack.c.b16 %v1359, %v1357
    %v1398 = vpack.c.b16 %v1362, %v1360
    %v1399 = vpack.c.b16 %v1363, %v1361
    %v1400 = vpack.c.b16 %v1366, %v1364
    %v1401 = vpack.c.b16 %v1367, %v1365
    %v1402 = vpack.c.b16 %v1370, %v1368
    %v1403 = vpack.c.b16 %v1371, %v1369
    %1436 = vmatprep.subr.bf16.mxu0 %v1373
    %1437 = vmatpush1.bf16.msra.mxu0 %v1372
    %1438 = vmatprep.subr.bf16.mxu0 %v1375
    %1439 = vmatpush1.bf16.msra.mxu0 %v1374
    %1440 = vmatprep.subr.bf16.mxu0 %v1377
    %1441 = vmatpush1.bf16.msra.mxu0 %v1376
    %1442 = vmatprep.subr.bf16.mxu0 %v1379
    %1443 = vmatpush1.bf16.msra.mxu0 %v1378
    %1444 = vmatprep.subr.bf16.mxu0 %v1381
    %1445 = vmatpush1.bf16.msra.mxu0 %v1380
    %1446 = vmatprep.subr.bf16.mxu0 %v1383
    %1447 = vmatpush1.bf16.msra.mxu0 %v1382
    %1448 = vmatprep.subr.bf16.mxu0 %v1385
    %1449 = vmatpush1.bf16.msra.mxu0 %v1384
    %1450 = vmatprep.subr.bf16.mxu0 %v1387
    %1451 = vmatpush1.bf16.msra.mxu0 %v1386
    %1452 = vmatprep.subr.bf16.mxu0 %v1389
    %1453 = vmatpush1.bf16.msra.mxu0 %v1388
    %1454 = vmatprep.subr.bf16.mxu0 %v1391
    %1455 = vmatpush1.bf16.msra.mxu0 %v1390
    %1456 = vmatprep.subr.bf16.mxu0 %v1393
    %1457 = vmatpush1.bf16.msra.mxu0 %v1392
    %1458 = vmatprep.subr.bf16.mxu0 %v1395
    %1459 = vmatpush1.bf16.msra.mxu0 %v1394
    %1460 = vmatprep.subr.bf16.mxu0 %v1397
    %1461 = vmatpush1.bf16.msra.mxu0 %v1396
    %1462 = vmatprep.subr.bf16.mxu0 %v1399
    %1463 = vmatpush1.bf16.msra.mxu0 %v1398
    %1464 = vmatprep.subr.bf16.mxu0 %v1401
    %1465 = vmatpush1.bf16.msra.mxu0 %v1400
    %1466 = vmatprep.subr.bf16.mxu0 %v1403
    %1467 = vmatpush1.bf16.msra.mxu0 %v1402
    %1468 = vmatprep.mubr.bf16.mxu0 %v1213
    %1469 = vmatmul.mubr.bf16.gmra.mrb[0].mxu0 %v1212
    %v1470 = vpop.f32.mrb[0].mxu0
    %v1471 = vadd.f32 0.0, %v1470
    %v1472 = vpop.f32.mrb[0].mxu0
    %v1473 = vadd.f32 0.0, %v1472
    %v1474 = vpop.f32.mrb[0].mxu0
    %v1475 = vadd.f32 0.0, %v1474
    %v1476 = vpop.f32.mrb[0].mxu0
    %v1477 = vadd.f32 0.0, %v1476
    %1478 = vmatprep.mubr.bf16.mxu0 %v1215
    %1479 = vmatmul.mubr.bf16.gmra.mrb[0].mxu0 %v1214
    %v1480 = vpop.f32.mrb[0].mxu0
    %v1481 = vadd.f32 0.0, %v1480
    %v1482 = vpop.f32.mrb[0].mxu0
    %v1483 = vadd.f32 0.0, %v1482
    %v1484 = vpop.f32.mrb[0].mxu0
    %v1485 = vadd.f32 0.0, %v1484
    %v1486 = vpop.f32.mrb[0].mxu0
    %v1487 = vadd.f32 0.0, %v1486
    %1488 = vmatprep.mubr.bf16.mxu0 %v1217
    %1489 = vmatmul.mubr.bf16.gmra.mrb[0].mxu0 %v1216
    %v1490 = vpop.f32.mrb[0].mxu0
    %v1491 = vadd.f32 0.0, %v1490
    %v1492 = vpop.f32.mrb[0].mxu0
    %v1493 = vadd.f32 0.0, %v1492
    %v1494 = vpop.f32.mrb[0].mxu0
    %v1495 = vadd.f32 0.0, %v1494
    %v1496 = vpop.f32.mrb[0].mxu0
    %v1497 = vadd.f32 0.0, %v1496
    %1498 = vmatprep.mubr.bf16.mxu0 %v1219
    %1499 = vmatmul.mubr.bf16.gmra.mrb[0].mxu0 %v1218
    %v1500 = vpop.f32.mrb[0].mxu0
    %v1501 = vadd.f32 0.0, %v1500
    %v1502 = vpop.f32.mrb[0].mxu0
    %v1503 = vadd.f32 0.0, %v1502
    %v1504 = vpop.f32.mrb[0].mxu0
    %v1505 = vadd.f32 0.0, %v1504
    %v1506 = vpop.f32.mrb[0].mxu0
    %v1507 = vadd.f32 0.0, %v1506
    %1508 = vmatprep.mubr.bf16.mxu0 %v1221
    %1509 = vmatmul.mubr.bf16.gmra.mrb[0].mxu0 %v1220
    %v1510 = vpop.f32.mrb[0].mxu0
    %v1511 = vadd.f32 0.0, %v1510
    %v1512 = vpop.f32.mrb[0].mxu0
    %v1513 = vadd.f32 0.0, %v1512
    %v1514 = vpop.f32.mrb[0].mxu0
    %v1515 = vadd.f32 0.0, %v1514
    %v1516 = vpop.f32.mrb[0].mxu0
    %v1517 = vadd.f32 0.0, %v1516
    %1518 = vmatprep.mubr.bf16.mxu0 %v1223
    %1519 = vmatmul.mubr.bf16.gmra.mrb[0].mxu0 %v1222
    %v1520 = vpop.f32.mrb[0].mxu0
    %v1521 = vadd.f32 0.0, %v1520
    %v1522 = vpop.f32.mrb[0].mxu0
    %v1523 = vadd.f32 0.0, %v1522
    %v1524 = vpop.f32.mrb[0].mxu0
    %v1525 = vadd.f32 0.0, %v1524
    %v1526 = vpop.f32.mrb[0].mxu0
    %v1527 = vadd.f32 0.0, %v1526
    %1528 = vmatprep.mubr.bf16.mxu0 %v1225
    %1529 = vmatmul.mubr.bf16.gmra.mrb[0].mxu0 %v1224
    %v1530 = vpop.f32.mrb[0].mxu0
    %v1531 = vadd.f32 0.0, %v1530
    %v1532 = vpop.f32.mrb[0].mxu0
    %v1533 = vadd.f32 0.0, %v1532
    %v1534 = vpop.f32.mrb[0].mxu0
    %v1535 = vadd.f32 0.0, %v1534
    %v1536 = vpop.f32.mrb[0].mxu0
    %v1537 = vadd.f32 0.0, %v1536
    %1538 = vmatprep.mubr.bf16.mxu0 %v1227
    %1539 = vmatmul.mubr.bf16.gmra.mrb[0].mxu0 %v1226
    %v1540 = vpop.f32.mrb[0].mxu0
    %v1541 = vadd.f32 0.0, %v1540
    %v1542 = vpop.f32.mrb[0].mxu0
    %v1543 = vadd.f32 0.0, %v1542
    %v1544 = vpop.f32.mrb[0].mxu0
    %v1545 = vadd.f32 0.0, %v1544
    %v1546 = vpop.f32.mrb[0].mxu0
    %v1547 = vadd.f32 0.0, %v1546
    %1548 = vmatprep.mubr.bf16.mxu0 %v1229
    %1549 = vmatmul.mubr.bf16.gmra.mrb[0].mxu0 %v1228
    %v1550 = vpop.f32.mrb[0].mxu0
    %v1551 = vadd.f32 0.0, %v1550
    %v1552 = vpop.f32.mrb[0].mxu0
    %v1553 = vadd.f32 0.0, %v1552
    %v1554 = vpop.f32.mrb[0].mxu0
    %v1555 = vadd.f32 0.0, %v1554
    %v1556 = vpop.f32.mrb[0].mxu0
    %v1557 = vadd.f32 0.0, %v1556
    %1558 = vmatprep.mubr.bf16.mxu0 %v1231
    %1559 = vmatmul.mubr.bf16.gmra.mrb[0].mxu0 %v1230
    %v1560 = vpop.f32.mrb[0].mxu0
    %v1561 = vadd.f32 0.0, %v1560
    %v1562 = vpop.f32.mrb[0].mxu0
    %v1563 = vadd.f32 0.0, %v1562
    %v1564 = vpop.f32.mrb[0].mxu0
    %v1565 = vadd.f32 0.0, %v1564
    %v1566 = vpop.f32.mrb[0].mxu0
    %v1567 = vadd.f32 0.0, %v1566
    %1568 = vmatprep.mubr.bf16.mxu0 %v1233
    %1569 = vmatmul.mubr.bf16.gmra.mrb[0].mxu0 %v1232
    %v1570 = vpop.f32.mrb[0].mxu0
    %v1571 = vadd.f32 0.0, %v1570
    %v1572 = vpop.f32.mrb[0].mxu0
    %v1573 = vadd.f32 0.0, %v1572
    %v1574 = vpop.f32.mrb[0].mxu0
    %v1575 = vadd.f32 0.0, %v1574
    %v1576 = vpop.f32.mrb[0].mxu0
    %v1577 = vadd.f32 0.0, %v1576
    %1578 = vmatprep.mubr.bf16.mxu0 %v1235
    %1579 = vmatmul.mubr.bf16.gmra.mrb[0].mxu0 %v1234
    %v1580 = vpop.f32.mrb[0].mxu0
    %v1581 = vadd.f32 0.0, %v1580
    %v1582 = vpop.f32.mrb[0].mxu0
    %v1583 = vadd.f32 0.0, %v1582
    %v1584 = vpop.f32.mrb[0].mxu0
    %v1585 = vadd.f32 0.0, %v1584
    %v1586 = vpop.f32.mrb[0].mxu0
    %v1587 = vadd.f32 0.0, %v1586
    %1588 = vmatprep.mubr.bf16.mxu0 %v1237
    %1589 = vmatmul.mubr.bf16.gmra.mrb[0].mxu0 %v1236
    %v1590 = vpop.f32.mrb[0].mxu0
    %v1591 = vadd.f32 0.0, %v1590
    %v1592 = vpop.f32.mrb[0].mxu0
    %v1593 = vadd.f32 0.0, %v1592
    %v1594 = vpop.f32.mrb[0].mxu0
    %v1595 = vadd.f32 0.0, %v1594
    %v1596 = vpop.f32.mrb[0].mxu0
    %v1597 = vadd.f32 0.0, %v1596
    %1598 = vmatprep.mubr.bf16.mxu0 %v1239
    %1599 = vmatmul.mubr.bf16.gmra.mrb[0].mxu0 %v1238
    %v1600 = vpop.f32.mrb[0].mxu0
    %v1601 = vadd.f32 0.0, %v1600
    %v1602 = vpop.f32.mrb[0].mxu0
    %v1603 = vadd.f32 0.0, %v1602
    %v1604 = vpop.f32.mrb[0].mxu0
    %v1605 = vadd.f32 0.0, %v1604
    %v1606 = vpop.f32.mrb[0].mxu0
    %v1607 = vadd.f32 0.0, %v1606
    %1608 = vmatprep.mubr.bf16.mxu0 %v1241
    %1609 = vmatmul.mubr.bf16.gmra.mrb[0].mxu0 %v1240
    %v1610 = vpop.f32.mrb[0].mxu0
    %v1611 = vadd.f32 0.0, %v1610
    %v1612 = vpop.f32.mrb[0].mxu0
    %v1613 = vadd.f32 0.0, %v1612
    %v1614 = vpop.f32.mrb[0].mxu0
    %v1615 = vadd.f32 0.0, %v1614
    %v1616 = vpop.f32.mrb[0].mxu0
    %v1617 = vadd.f32 0.0, %v1616
    %1618 = vmatprep.mubr.bf16.mxu0 %v1243
    %1619 = vmatmul.mubr.bf16.gmra.mrb[0].mxu0 %v1242
    %v1620 = vpop.f32.mrb[0].mxu0
    %v1621 = vadd.f32 0.0, %v1620
    %v1622 = vpop.f32.mrb[0].mxu0
    %v1623 = vadd.f32 0.0, %v1622
    %v1624 = vpop.f32.mrb[0].mxu0
    %v1625 = vadd.f32 0.0, %v1624
    %v1626 = vpop.f32.mrb[0].mxu0
    %v1627 = vadd.f32 0.0, %v1626
    %1628 = vdwg.mxu0
    %v1629 = vtanh.pop %v1471
    %v1630 = vtanh.pop %v1473
    %v1631 = vtanh.pop %v1475
    %v1632 = vtanh.pop %v1477
    %v1633 = vtanh.pop %v1481
    %v1634 = vtanh.pop %v1483
    %v1635 = vtanh.pop %v1485
    %v1636 = vtanh.pop %v1487
    %v1637 = vtanh.pop %v1491
    %v1638 = vtanh.pop %v1493
    %v1639 = vtanh.pop %v1495
    %v1640 = vtanh.pop %v1497
    %v1641 = vtanh.pop %v1501
    %v1642 = vtanh.pop %v1503
    %v1643 = vtanh.pop %v1505
    %v1644 = vtanh.pop %v1507
    %v1645 = vtanh.pop %v1511
    %v1646 = vtanh.pop %v1513
    %v1647 = vtanh.pop %v1515
    %v1648 = vtanh.pop %v1517
    %v1649 = vtanh.pop %v1521
    %v1650 = vtanh.pop %v1523
    %v1651 = vtanh.pop %v1525
    %v1652 = vtanh.pop %v1527
    %v1653 = vtanh.pop %v1531
    %v1654 = vtanh.pop %v1533
    %v1655 = vtanh.pop %v1535
    %v1656 = vtanh.pop %v1537
    %v1657 = vtanh.pop %v1541
    %v1658 = vtanh.pop %v1543
    %v1659 = vtanh.pop %v1545
    %v1660 = vtanh.pop %v1547
    %v1661 = vtanh.pop %v1551
    %v1662 = vtanh.pop %v1553
    %v1663 = vtanh.pop %v1555
    %v1664 = vtanh.pop %v1557
    %v1665 = vtanh.pop %v1561
    %v1666 = vtanh.pop %v1563
    %v1667 = vtanh.pop %v1565
    %v1668 = vtanh.pop %v1567
    %v1669 = vtanh.pop %v1571
    %v1670 = vtanh.pop %v1573
    %v1671 = vtanh.pop %v1575
    %v1672 = vtanh.pop %v1577
    %v1673 = vtanh.pop %v1581
    %v1674 = vtanh.pop %v1583
    %v1675 = vtanh.pop %v1585
    %v1676 = vtanh.pop %v1587
    %v1677 = vtanh.pop %v1591
    %v1678 = vtanh.pop %v1593
    %v1679 = vtanh.pop %v1595
    %v1680 = vtanh.pop %v1597
    %v1681 = vtanh.pop %v1601
    %v1682 = vtanh.pop %v1603
    %v1683 = vtanh.pop %v1605
    %v1684 = vtanh.pop %v1607
    %v1685 = vtanh.pop %v1611
    %v1686 = vtanh.pop %v1613
    %v1687 = vtanh.pop %v1615
    %v1688 = vtanh.pop %v1617
    %v1689 = vtanh.pop %v1621
    %v1690 = vtanh.pop %v1623
    %v1691 = vtanh.pop %v1625
    %v1692 = vtanh.pop %v1627
    %v1693 = vpack.c.bf16 %v1631, %v1629
    %v1694 = vpack.c.bf16 %v1632, %v1630
    %v1695 = vpack.c.bf16 %v1635, %v1633
    %v1696 = vpack.c.bf16 %v1636, %v1634
    %v1697 = vpack.c.bf16 %v1639, %v1637
    %v1698 = vpack.c.bf16 %v1640, %v1638
    %v1699 = vpack.c.bf16 %v1643, %v1641
    %v1700 = vpack.c.bf16 %v1644, %v1642
    %v1701 = vpack.c.bf16 %v1647, %v1645
    %v1702 = vpack.c.bf16 %v1648, %v1646
    %v1703 = vpack.c.bf16 %v1651, %v1649
    %v1704 = vpack.c.bf16 %v1652, %v1650
    %v1705 = vpack.c.bf16 %v1655, %v1653
    %v1706 = vpack.c.bf16 %v1656, %v1654
    %v1707 = vpack.c.bf16 %v1659, %v1657
    %v1708 = vpack.c.bf16 %v1660, %v1658
    %v1709 = vpack.c.bf16 %v1663, %v1661
    %v1710 = vpack.c.bf16 %v1664, %v1662
    %v1711 = vpack.c.bf16 %v1667, %v1665
    %v1712 = vpack.c.bf16 %v1668, %v1666
    %v1713 = vpack.c.bf16 %v1671, %v1669
    %v1714 = vpack.c.bf16 %v1672, %v1670
    %v1715 = vpack.c.bf16 %v1675, %v1673
    %v1716 = vpack.c.bf16 %v1676, %v1674
    %v1717 = vpack.c.bf16 %v1679, %v1677
    %v1718 = vpack.c.bf16 %v1680, %v1678
    %v1719 = vpack.c.bf16 %v1683, %v1681
    %v1720 = vpack.c.bf16 %v1684, %v1682
    %v1721 = vpack.c.bf16 %v1687, %v1685
    %v1722 = vpack.c.bf16 %v1688, %v1686
    %v1723 = vpack.c.bf16 %v1691, %v1689
    %v1724 = vpack.c.bf16 %v1692, %v1690
    %v1725 = vld [vmem:[#allocation10] sm:$0xf]
    %v1726 = vld [vmem:[#allocation10 + $0x4] sm:$0xf]
    %v1727 = vld [vmem:[#allocation10 + $0x8] sm:$0xf]
    %v1728 = vld [vmem:[#allocation10 + $0xc] sm:$0xf]
    %v1729 = vld [vmem:[#allocation10 + $0x10] sm:$0xf]
    %v1730 = vld [vmem:[#allocation10 + $0x14] sm:$0xf]
    %v1731 = vld [vmem:[#allocation10 + $0x18] sm:$0xf]
    %v1732 = vld [vmem:[#allocation10 + $0x1c] sm:$0xf]
    %v1733 = vld [vmem:[#allocation10 + $0x20] sm:$0xf]
    %v1734 = vld [vmem:[#allocation10 + $0x24] sm:$0xf]
    %v1735 = vld [vmem:[#allocation10 + $0x28] sm:$0xf]
    %v1736 = vld [vmem:[#allocation10 + $0x2c] sm:$0xf]
    %v1737 = vld [vmem:[#allocation10 + $0x30] sm:$0xf]
    %v1738 = vld [vmem:[#allocation10 + $0x34] sm:$0xf]
    %v1739 = vld [vmem:[#allocation10 + $0x38] sm:$0xf]
    %v1740 = vld [vmem:[#allocation10 + $0x3c] sm:$0xf]
    %v1741 = vld [vmem:[#allocation10 + $0x40] sm:$0xf]
    %v1742 = vld [vmem:[#allocation10 + $0x44] sm:$0xf]
    %v1743 = vld [vmem:[#allocation10 + $0x48] sm:$0xf]
    %v1744 = vld [vmem:[#allocation10 + $0x4c] sm:$0xf]
    %v1745 = vld [vmem:[#allocation10 + $0x50] sm:$0xf]
    %v1746 = vld [vmem:[#allocation10 + $0x54] sm:$0xf]
    %v1747 = vld [vmem:[#allocation10 + $0x58] sm:$0xf]
    %v1748 = vld [vmem:[#allocation10 + $0x5c] sm:$0xf]
    %v1749 = vld [vmem:[#allocation10 + $0x60] sm:$0xf]
    %v1750 = vld [vmem:[#allocation10 + $0x64] sm:$0xf]
    %v1751 = vld [vmem:[#allocation10 + $0x68] sm:$0xf]
    %v1752 = vld [vmem:[#allocation10 + $0x6c] sm:$0xf]
    %v1753 = vld [vmem:[#allocation10 + $0x70] sm:$0xf]
    %v1754 = vld [vmem:[#allocation10 + $0x74] sm:$0xf]
    %v1755 = vld [vmem:[#allocation10 + $0x78] sm:$0xf]
    %v1756 = vld [vmem:[#allocation10 + $0x7c] sm:$0xf]
    %v1789 = vunpack.c.l.b16 %v1725
    %v1790 = vunpack.c.l.b16 %v1726
    %v1791 = vunpack.c.l.b16 %v1727
    %v1792 = vunpack.c.l.b16 %v1728
    %v1793 = vunpack.c.l.b16 %v1729
    %v1794 = vunpack.c.l.b16 %v1730
    %v1795 = vunpack.c.l.b16 %v1731
    %v1796 = vunpack.c.l.b16 %v1732
    %v1797 = vunpack.c.l.b16 %v1733
    %v1798 = vunpack.c.l.b16 %v1734
    %v1799 = vunpack.c.l.b16 %v1735
    %v1800 = vunpack.c.l.b16 %v1736
    %v1801 = vunpack.c.l.b16 %v1737
    %v1802 = vunpack.c.l.b16 %v1738
    %v1803 = vunpack.c.l.b16 %v1739
    %v1804 = vunpack.c.l.b16 %v1740
    %v1805 = vunpack.c.l.b16 %v1741
    %v1806 = vunpack.c.l.b16 %v1742
    %v1807 = vunpack.c.l.b16 %v1743
    %v1808 = vunpack.c.l.b16 %v1744
    %v1809 = vunpack.c.l.b16 %v1745
    %v1810 = vunpack.c.l.b16 %v1746
    %v1811 = vunpack.c.l.b16 %v1747
    %v1812 = vunpack.c.l.b16 %v1748
    %v1813 = vunpack.c.l.b16 %v1749
    %v1814 = vunpack.c.l.b16 %v1750
    %v1815 = vunpack.c.l.b16 %v1751
    %v1816 = vunpack.c.l.b16 %v1752
    %v1817 = vunpack.c.l.b16 %v1753
    %v1818 = vunpack.c.l.b16 %v1754
    %v1819 = vunpack.c.l.b16 %v1755
    %v1820 = vunpack.c.l.b16 %v1756
    %v1821 = vpack.c.b16 %v1790, %v1789
    %v1822 = vpack.c.b16 %v1792, %v1791
    %v1823 = vpack.c.b16 %v1794, %v1793
    %v1824 = vpack.c.b16 %v1796, %v1795
    %v1825 = vpack.c.b16 %v1798, %v1797
    %v1826 = vpack.c.b16 %v1800, %v1799
    %v1827 = vpack.c.b16 %v1802, %v1801
    %v1828 = vpack.c.b16 %v1804, %v1803
    %v1829 = vpack.c.b16 %v1806, %v1805
    %v1830 = vpack.c.b16 %v1808, %v1807
    %v1831 = vpack.c.b16 %v1810, %v1809
    %v1832 = vpack.c.b16 %v1812, %v1811
    %v1833 = vpack.c.b16 %v1814, %v1813
    %v1834 = vpack.c.b16 %v1816, %v1815
    %v1835 = vpack.c.b16 %v1818, %v1817
    %v1836 = vpack.c.b16 %v1820, %v1819
    %1853 = vmatprep.subr.bf16.mxu0 0
    %1854 = vmatpush1.bf16.msra.mxu0 %v1821
    %1855 = vmatprep.subr.bf16.mxu0 0
    %1856 = vmatpush1.bf16.msra.mxu0 %v1822
    %1857 = vmatprep.subr.bf16.mxu0 0
    %1858 = vmatpush1.bf16.msra.mxu0 %v1823
    %1859 = vmatprep.subr.bf16.mxu0 0
    %1860 = vmatpush1.bf16.msra.mxu0 %v1824
    %1861 = vmatprep.subr.bf16.mxu0 0
    %1862 = vmatpush1.bf16.msra.mxu0 %v1825
    %1863 = vmatprep.subr.bf16.mxu0 0
    %1864 = vmatpush1.bf16.msra.mxu0 %v1826
    %1865 = vmatprep.subr.bf16.mxu0 0
    %1866 = vmatpush1.bf16.msra.mxu0 %v1827
    %1867 = vmatprep.subr.bf16.mxu0 0
    %1868 = vmatpush1.bf16.msra.mxu0 %v1828
    %1869 = vmatprep.subr.bf16.mxu0 0
    %1870 = vmatpush1.bf16.msra.mxu0 %v1829
    %1871 = vmatprep.subr.bf16.mxu0 0
    %1872 = vmatpush1.bf16.msra.mxu0 %v1830
    %1873 = vmatprep.subr.bf16.mxu0 0
    %1874 = vmatpush1.bf16.msra.mxu0 %v1831
    %1875 = vmatprep.subr.bf16.mxu0 0
    %1876 = vmatpush1.bf16.msra.mxu0 %v1832
    %1877 = vmatprep.subr.bf16.mxu0 0
    %1878 = vmatpush1.bf16.msra.mxu0 %v1833
    %1879 = vmatprep.subr.bf16.mxu0 0
    %1880 = vmatpush1.bf16.msra.mxu0 %v1834
    %1881 = vmatprep.subr.bf16.mxu0 0
    %1882 = vmatpush1.bf16.msra.mxu0 %v1835
    %1883 = vmatprep.subr.bf16.mxu0 0
    %1884 = vmatpush1.bf16.msra.mxu0 %v1836
    %1885 = vmatprep.mubr.bf16.mxu0 %v1694
    %1886 = vmatmul.mubr.bf16.gmra.mrb[0].mxu0 %v1693
    %v1887 = vpop.f32.mrb[0].mxu0
    %v1888 = vadd.f32 0.0, %v1887
    %v1889 = vpop.f32.mrb[0].mxu0
    %v1890 = vpop.f32.mrb[0].mxu0
    %v1891 = vadd.f32 0.0, %v1890
    %v1892 = vpop.f32.mrb[0].mxu0
    %1893 = vmatprep.mubr.bf16.mxu0 %v1696
    %1894 = vmatmul.mubr.bf16.gmra.mrb[0].mxu0 %v1695
    %v1895 = vpop.f32.mrb[0].mxu0
    %v1896 = vadd.f32 0.0, %v1895
    %v1897 = vpop.f32.mrb[0].mxu0
    %v1898 = vpop.f32.mrb[0].mxu0
    %v1899 = vadd.f32 0.0, %v1898
    %v1900 = vpop.f32.mrb[0].mxu0
    %1901 = vmatprep.mubr.bf16.mxu0 %v1698
    %1902 = vmatmul.mubr.bf16.gmra.mrb[0].mxu0 %v1697
    %v1903 = vpop.f32.mrb[0].mxu0
    %v1904 = vadd.f32 0.0, %v1903
    %v1905 = vpop.f32.mrb[0].mxu0
    %v1906 = vpop.f32.mrb[0].mxu0
    %v1907 = vadd.f32 0.0, %v1906
    %v1908 = vpop.f32.mrb[0].mxu0
    %1909 = vmatprep.mubr.bf16.mxu0 %v1700
    %1910 = vmatmul.mubr.bf16.gmra.mrb[0].mxu0 %v1699
    %v1911 = vpop.f32.mrb[0].mxu0
    %v1912 = vadd.f32 0.0, %v1911
    %v1913 = vpop.f32.mrb[0].mxu0
    %v1914 = vpop.f32.mrb[0].mxu0
    %v1915 = vadd.f32 0.0, %v1914
    %v1916 = vpop.f32.mrb[0].mxu0
    %1917 = vmatprep.mubr.bf16.mxu0 %v1702
    %1918 = vmatmul.mubr.bf16.gmra.mrb[0].mxu0 %v1701
    %v1919 = vpop.f32.mrb[0].mxu0
    %v1920 = vadd.f32 0.0, %v1919
    %v1921 = vpop.f32.mrb[0].mxu0
    %v1922 = vpop.f32.mrb[0].mxu0
    %v1923 = vadd.f32 0.0, %v1922
    %v1924 = vpop.f32.mrb[0].mxu0
    %1925 = vmatprep.mubr.bf16.mxu0 %v1704
    %1926 = vmatmul.mubr.bf16.gmra.mrb[0].mxu0 %v1703
    %v1927 = vpop.f32.mrb[0].mxu0
    %v1928 = vadd.f32 0.0, %v1927
    %v1929 = vpop.f32.mrb[0].mxu0
    %v1930 = vpop.f32.mrb[0].mxu0
    %v1931 = vadd.f32 0.0, %v1930
    %v1932 = vpop.f32.mrb[0].mxu0
    %1933 = vmatprep.mubr.bf16.mxu0 %v1706
    %1934 = vmatmul.mubr.bf16.gmra.mrb[0].mxu0 %v1705
    %v1935 = vpop.f32.mrb[0].mxu0
    %v1936 = vadd.f32 0.0, %v1935
    %v1937 = vpop.f32.mrb[0].mxu0
    %v1938 = vpop.f32.mrb[0].mxu0
    %v1939 = vadd.f32 0.0, %v1938
    %v1940 = vpop.f32.mrb[0].mxu0
    %1941 = vmatprep.mubr.bf16.mxu0 %v1708
    %1942 = vmatmul.mubr.bf16.gmra.mrb[0].mxu0 %v1707
    %v1943 = vpop.f32.mrb[0].mxu0
    %v1944 = vadd.f32 0.0, %v1943
    %v1945 = vpop.f32.mrb[0].mxu0
    %v1946 = vpop.f32.mrb[0].mxu0
    %v1947 = vadd.f32 0.0, %v1946
    %v1948 = vpop.f32.mrb[0].mxu0
    %1949 = vmatprep.mubr.bf16.mxu0 %v1710
    %1950 = vmatmul.mubr.bf16.gmra.mrb[0].mxu0 %v1709
    %v1951 = vpop.f32.mrb[0].mxu0
    %v1952 = vadd.f32 0.0, %v1951
    %v1953 = vpop.f32.mrb[0].mxu0
    %v1954 = vpop.f32.mrb[0].mxu0
    %v1955 = vadd.f32 0.0, %v1954
    %v1956 = vpop.f32.mrb[0].mxu0
    %1957 = vmatprep.mubr.bf16.mxu0 %v1712
    %1958 = vmatmul.mubr.bf16.gmra.mrb[0].mxu0 %v1711
    %v1959 = vpop.f32.mrb[0].mxu0
    %v1960 = vadd.f32 0.0, %v1959
    %v1961 = vpop.f32.mrb[0].mxu0
    %v1962 = vpop.f32.mrb[0].mxu0
    %v1963 = vadd.f32 0.0, %v1962
    %v1964 = vpop.f32.mrb[0].mxu0
    %1965 = vmatprep.mubr.bf16.mxu0 %v1714
    %1966 = vmatmul.mubr.bf16.gmra.mrb[0].mxu0 %v1713
    %v1967 = vpop.f32.mrb[0].mxu0
    %v1968 = vadd.f32 0.0, %v1967
    %v1969 = vpop.f32.mrb[0].mxu0
    %v1970 = vpop.f32.mrb[0].mxu0
    %v1971 = vadd.f32 0.0, %v1970
    %v1972 = vpop.f32.mrb[0].mxu0
    %1973 = vmatprep.mubr.bf16.mxu0 %v1716
    %1974 = vmatmul.mubr.bf16.gmra.mrb[0].mxu0 %v1715
    %v1975 = vpop.f32.mrb[0].mxu0
    %v1976 = vadd.f32 0.0, %v1975
    %v1977 = vpop.f32.mrb[0].mxu0
    %v1978 = vpop.f32.mrb[0].mxu0
    %v1979 = vadd.f32 0.0, %v1978
    %v1980 = vpop.f32.mrb[0].mxu0
    %1981 = vmatprep.mubr.bf16.mxu0 %v1718
    %1982 = vmatmul.mubr.bf16.gmra.mrb[0].mxu0 %v1717
    %v1983 = vpop.f32.mrb[0].mxu0
    %v1984 = vadd.f32 0.0, %v1983
    %v1985 = vpop.f32.mrb[0].mxu0
    %v1986 = vpop.f32.mrb[0].mxu0
    %v1987 = vadd.f32 0.0, %v1986
    %v1988 = vpop.f32.mrb[0].mxu0
    %1989 = vmatprep.mubr.bf16.mxu0 %v1720
    %1990 = vmatmul.mubr.bf16.gmra.mrb[0].mxu0 %v1719
    %v1991 = vpop.f32.mrb[0].mxu0
    %v1992 = vadd.f32 0.0, %v1991
    %v1993 = vpop.f32.mrb[0].mxu0
    %v1994 = vpop.f32.mrb[0].mxu0
    %v1995 = vadd.f32 0.0, %v1994
    %v1996 = vpop.f32.mrb[0].mxu0
    %1997 = vmatprep.mubr.bf16.mxu0 %v1722
    %1998 = vmatmul.mubr.bf16.gmra.mrb[0].mxu0 %v1721
    %v1999 = vpop.f32.mrb[0].mxu0
    %v2000 = vadd.f32 0.0, %v1999
    %v2001 = vpop.f32.mrb[0].mxu0
    %v2002 = vpop.f32.mrb[0].mxu0
    %v2003 = vadd.f32 0.0, %v2002
    %v2004 = vpop.f32.mrb[0].mxu0
    %2005 = vmatprep.mubr.bf16.mxu0 %v1724
    %2006 = vmatmul.mubr.bf16.gmra.mrb[0].mxu0 %v1723
    %v2007 = vpop.f32.mrb[0].mxu0
    %v2008 = vadd.f32 0.0, %v2007
    %v2009 = vpop.f32.mrb[0].mxu0
    %v2010 = vpop.f32.mrb[0].mxu0
    %v2011 = vadd.f32 0.0, %v2010
    %v2012 = vpop.f32.mrb[0].mxu0
    %2013 = vdwg.mxu0
    %2014 = vst [vmem:[#allocation11] sm:$0xff] %v1888
    %2015 = vst [vmem:[#allocation11 + $0x8] sm:$0xff] %v1891
    %2016 = vst [vmem:[#allocation11 + $0x10] sm:$0xff] %v1896
    %2017 = vst [vmem:[#allocation11 + $0x18] sm:$0xff] %v1899
    %2018 = vst [vmem:[#allocation11 + $0x20] sm:$0xff] %v1904
    %2019 = vst [vmem:[#allocation11 + $0x28] sm:$0xff] %v1907
    %2020 = vst [vmem:[#allocation11 + $0x30] sm:$0xff] %v1912
    %2021 = vst [vmem:[#allocation11 + $0x38] sm:$0xff] %v1915
    %2022 = vst [vmem:[#allocation11 + $0x40] sm:$0xff] %v1920
    %2023 = vst [vmem:[#allocation11 + $0x48] sm:$0xff] %v1923
    %2024 = vst [vmem:[#allocation11 + $0x50] sm:$0xff] %v1928
    %2025 = vst [vmem:[#allocation11 + $0x58] sm:$0xff] %v1931
    %2026 = vst [vmem:[#allocation11 + $0x60] sm:$0xff] %v1936
    %2027 = vst [vmem:[#allocation11 + $0x68] sm:$0xff] %v1939
    %2028 = vst [vmem:[#allocation11 + $0x70] sm:$0xff] %v1944
    %2029 = vst [vmem:[#allocation11 + $0x78] sm:$0xff] %v1947
    %2030 = vst [vmem:[#allocation11 + $0x80] sm:$0xff] %v1952
    %2031 = vst [vmem:[#allocation11 + $0x88] sm:$0xff] %v1955
    %2032 = vst [vmem:[#allocation11 + $0x90] sm:$0xff] %v1960
    %2033 = vst [vmem:[#allocation11 + $0x98] sm:$0xff] %v1963
    %2034 = vst [vmem:[#allocation11 + $0xa0] sm:$0xff] %v1968
    %2035 = vst [vmem:[#allocation11 + $0xa8] sm:$0xff] %v1971
    %2036 = vst [vmem:[#allocation11 + $0xb0] sm:$0xff] %v1976
    %2037 = vst [vmem:[#allocation11 + $0xb8] sm:$0xff] %v1979
    %2038 = vst [vmem:[#allocation11 + $0xc0] sm:$0xff] %v1984
    %2039 = vst [vmem:[#allocation11 + $0xc8] sm:$0xff] %v1987
    %2040 = vst [vmem:[#allocation11 + $0xd0] sm:$0xff] %v1992
    %2041 = vst [vmem:[#allocation11 + $0xd8] sm:$0xff] %v1995
    %2042 = vst [vmem:[#allocation11 + $0xe0] sm:$0xff] %v2000
    %2043 = vst [vmem:[#allocation11 + $0xe8] sm:$0xff] %v2003
    %2044 = vst [vmem:[#allocation11 + $0xf0] sm:$0xff] %v2008
    %2045 = vst [vmem:[#allocation11 + $0xf8] sm:$0xff] %v2011
    // Predicated region
    $region42: #{tpu_custom_call.1} parent=1 // pred_check
      _
    $region43: #{tpu_custom_call.1} parent=1 // pred_check_branch
      %2047 = sbr.rel (0) target = $region45
    $region44: #{tpu_custom_call.1} parent=1 // pred_region
      %s2049 = ssub.s32 4096, 4096
      %2050 = vsyncadd [#allocation4], %s2049
      %s2051 = sshll.u32 [#allocation11], 4
      %s2052 = int_to_ptr.vmem [resolvable:$true] %s2051
      %2057 = dma.vmem_to_hbm [thread:$0]  %s2052, 4096, %s5, [#allocation4], 128, 128, 8
    $region45: #{tpu_custom_call.1} parent=1 // pred_fallthru
      _
    // Predicated region
    $region46: #{tpu_custom_call.1} parent=1 // pred_check
      _
    $region47: #{tpu_custom_call.1} parent=1 // pred_check_branch
      %2059 = sbr.rel (0) target = $region49
    $region48: #{tpu_custom_call.1} parent=1 // pred_region
      %2060 = dma.done [#allocation4], 4096
    $region49: #{tpu_custom_call.1} parent=1 // pred_fallthru
      _
    %2061 = vsyncpa [#allocation3], 1
    %2062 = vsyncpa [#allocation6], 1
    %2063 = vsyncpa [#allocation9], 1
    %2064 = vsyncpa [#allocation4], 1

</llo_original>
